<compile_context>
chip_gen: v7x
topology: tpu7x:2x2x1
jax: 0.10.0
libtpu: 0.0.40
codegen_flags: <defaults>
</compile_context>

<pallas_src>
import functools
import math

import jax
import jax.numpy as jnp
from jax.experimental import pallas as pl
from jax.experimental.pallas import tpu as pltpu   # noqa: F401  (kept for TPU-specific tuning)


# ------------------------------- Pallas kernel -------------------------------

def stack_kernel(h_ref, bias_ref, ln1_ref, wqkv_ref, wo_ref, ln2_ref, wi_ref,
                 wout_ref, lnf_ref, o_ref, *,
                 num_layers, batch, seq, num_heads, d_kv, d_ff, eps, scale):
    """Whole FlashT5Stack forward (all blocks + final RMSNorm) on the flattened
    (B*S, D) activation slab, entirely in VMEM, single launch."""
    f32 = jnp.float32
    bf16 = jnp.bfloat16
    inner = num_heads * d_kv

    def rms(x, w):
        # T5-style layernorm: f32 variance, no mean subtraction, no bias.
        var = jnp.mean(x * x, axis=-1, keepdims=True)
        return w * (x * jax.lax.rsqrt(var + eps))

    x = h_ref[...].astype(f32)                                 # (B*S, D)
    pos_bias = bias_ref[...].astype(f32)                       # (H, S, S), loaded once

    for l in range(num_layers):                                # static unroll
        # ---------------- self-attention sub-layer ----------------
        n1 = rms(x, ln1_ref[l].astype(f32))                    # (B*S, D) f32
        qkv = jnp.dot(n1.astype(bf16), wqkv_ref[l],
                      preferred_element_type=f32)              # (B*S, 3*inner)
        q = qkv[:, :inner] * scale        # fold softmax scale into q
        k = qkv[:, inner:2 * inner]
        v = qkv[:, 2 * inner:]

        batch_out = []
        for b in range(batch):                                  # static unroll
            r0 = b * seq
            heads_out = []
            for h in range(num_heads):                          # static unroll
                c0 = h * d_kv
                qh = q[r0:r0 + seq, c0:c0 + d_kv].astype(bf16)
                kh = k[r0:r0 + seq, c0:c0 + d_kv].astype(bf16)
                vh = v[r0:r0 + seq, c0:c0 + d_kv].astype(bf16)
                s = jax.lax.dot_general(qh, kh, (((1,), (1,)), ((), ())),
                                        preferred_element_type=f32)   # (S, S)
                s = s + pos_bias[h]
                s = s - jnp.max(s, axis=-1, keepdims=True)              # f32 softmax
                p = jnp.exp(s)
                p = p * pl.reciprocal(jnp.sum(p, axis=-1, keepdims=True),
                                      approx=True)
                heads_out.append(jnp.dot(p.astype(bf16), vh,
                                         preferred_element_type=f32))  # (S, Dk)
            batch_out.append(jnp.concatenate(heads_out, axis=-1))       # (S, inner)
        o_slab = jnp.concatenate(batch_out, axis=0)                     # (B*S, inner)

        # single assembled output projection + fused residual add
        x = x + jnp.dot(o_slab.astype(bf16), wo_ref[l],
                        preferred_element_type=f32)

        # ---------------- gated-GELU feed-forward sub-layer ----------------
        n2 = rms(x, ln2_ref[l].astype(f32))
        ff = jnp.dot(n2.astype(bf16), wi_ref[l],
                     preferred_element_type=f32)                # (B*S, 2*d_ff)
        g = jax.nn.gelu(ff[:, :d_ff], approximate=True) * ff[:, d_ff:]
        x = x + jnp.dot(g.astype(bf16), wout_ref[l],
                        preferred_element_type=f32)

    # ---------------- final RMSNorm fused into the same launch ----------------
    o_ref[...] = rms(x, lnf_ref[...].astype(f32)).astype(o_ref.dtype)


# ------------------------------ kernel wrapper -------------------------------

def flash_t5_stack_pallas(params, input_ids, cfg):
    B, S = input_ids.shape
    D, H, Dk, Dff, L = cfg.d_model, cfg.num_heads, cfg.d_kv, cfg.d_ff, cfg.num_layers
    scale = 1.0 / math.sqrt(cfg.num_heads)   # as in the PyTorch module (attention_scale=None)

    # Embedding gather + (identity) dropout stay as XLA glue; activations are
    # flattened to a (B*S, D) slab so every in-kernel matmul is a single 2-D dot.
    hidden = params["embed"][input_ids].reshape(B * S, D)

    # T5 relative position bias: computed once (block 0) and reused by all blocks,
    # exactly as in the module. Stored bf16 to halve its DMA bytes.
    position_bias = compute_position_bias(
        params["rel_bias"], S, S,
        cfg.relative_attention_num_buckets,
        cfg.relative_attention_max_distance).astype(jnp.bfloat16)

    kern = functools.partial(
        stack_kernel, num_layers=L, batch=B, seq=S, num_heads=H, d_kv=Dk,
        d_ff=Dff, eps=cfg.layer_norm_epsilon, scale=scale)

    out = pl.pallas_call(
        kern,
        out_shape=jax.ShapeDtypeStruct((B * S, D), hidden.dtype),
        # No grid / no BlockSpecs: every operand is a whole-array VMEM block
        # (a few hundred KB total — far below VMEM limits on v5e/v6e/v7x), and the
        # whole forward is a single grid step, so there is no per-step pipeline
        # overhead and nothing to double-buffer.
    )(hidden, position_bias, params["ln1"], params["Wqkv"], params["Wo"],
      params["ln2"], params["Wi"], params["Wout"], params["final_ln"])
    return out.reshape(B, S, D)


# --------------------- T5 relative position bias (glue) ----------------------

def _relative_position_bucket(relative_position, num_buckets, max_distance):
    # bidirectional (encoder) bucketing, identical to HF T5 for all surviving values.
    num_buckets = num_buckets // 2
    relative_buckets = (relative_position > 0).astype(jnp.int32) * num_buckets
    relative_position = jnp.abs(relative_position)
    max_exact = num_buckets // 2
    is_small = relative_position < max_exact
    # Guard the log argument so the (select-masked) not-small branch stays finite
    # and the int32 cast is well-defined.
    rp = jnp.maximum(relative_position, 1).astype(jnp.float32)
    rel_if_large = max_exact + (
        jnp.log(rp / max_exact) / math.log(max_distance / max_exact)
        * (num_buckets - max_exact)).astype(jnp.int32)
    rel_if_large = jnp.minimum(rel_if_large, num_buckets - 1)
    return relative_buckets + jnp.where(is_small, relative_position, rel_if_large)


def compute_position_bias(rel_bias_table, q_len, k_len, num_buckets, max_distance):
    ctx = jnp.arange(q_len)[:, None]
    mem = jnp.arange(k_len)[None, :]
    buckets = _relative_position_bucket(mem - ctx, num_buckets, max_distance)
    values = rel_bias_table[buckets]                 # (Sq, Sk, H)
    return jnp.transpose(values, (2, 0, 1))          # (H, Sq, Sk) f32


# -------------------------------- config/params ------------------------------

class Cfg:
    vocab_size = 64
    d_model = 32
    d_kv = 8
    num_heads = 4
    d_ff = 64
    num_layers = 2
    relative_attention_num_buckets = 8
    relative_attention_max_distance = 16
    layer_norm_epsilon = 1e-6


def init_params(key, cfg):
    def nrm(k, shape, scale=0.02, dtype=jnp.float32):
        return (scale * jax.random.normal(k, shape)).astype(dtype)

    L = cfg.num_layers
    inner = cfg.num_heads * cfg.d_kv
    keys = jax.random.split(key, 6)
    return {
        "embed": nrm(keys[0], (cfg.vocab_size, cfg.d_model), 1.0),
        "rel_bias": nrm(keys[1], (cfg.relative_attention_num_buckets, cfg.num_heads), 0.1),
        # Layer-stacked fused weights; MXU operands stored in bf16 (f32 accumulation
        # inside the kernel via preferred_element_type).
        "ln1": jnp.ones((L, 1, cfg.d_model), jnp.float32),
        "Wqkv": nrm(keys[2], (L, cfg.d_model, 3 * inner), dtype=jnp.bfloat16),   # Wq|Wk|Wv
        "Wo": nrm(keys[3], (L, inner, cfg.d_model), dtype=jnp.bfloat16),
        "ln2": jnp.ones((L, 1, cfg.d_model), jnp.float32),
        "Wi": nrm(keys[4], (L, cfg.d_model, 2 * cfg.d_ff), dtype=jnp.bfloat16),  # wi_0|wi_1
        "Wout": nrm(keys[5], (L, cfg.d_ff, cfg.d_model), dtype=jnp.bfloat16),
        "final_ln": jnp.ones((1, cfg.d_model), jnp.float32),
    }


# ----------------------------- pure-JAX reference ----------------------------

def reference_forward(params, input_ids, cfg):
    B, S = input_ids.shape
    H, Dk, Dff = cfg.num_heads, cfg.d_kv, cfg.d_ff
    inner = H * Dk
    scale = 1.0 / math.sqrt(cfg.num_heads)
    eps = cfg.layer_norm_epsilon
    f32 = jnp.float32

    def rms(x, w):
        var = jnp.mean(x.astype(f32) ** 2, -1, keepdims=True)
        return w * (x * jax.lax.rsqrt(var + eps))

    hidden = params["embed"][input_ids]
    pos_bias = compute_position_bias(
        params["rel_bias"], S, S,
        cfg.relative_attention_num_buckets,
        cfg.relative_attention_max_distance)[None]          # (1, H, S, S)

    for l in range(cfg.num_layers):
        wqkv = params["Wqkv"][l].astype(f32)
        wo = params["Wo"][l].astype(f32)
        wi = params["Wi"][l].astype(f32)
        wout = params["Wout"][l].astype(f32)
        n = rms(hidden, params["ln1"][l, 0])
        qkv = n @ wqkv
        q, k, v = jnp.split(qkv, 3, axis=-1)
        q = q.reshape(B, S, H, Dk).transpose(0, 2, 1, 3)
        k = k.reshape(B, S, H, Dk).transpose(0, 2, 1, 3)
        v = v.reshape(B, S, H, Dk).transpose(0, 2, 1, 3)
        s = jnp.einsum("bhqd,bhkd->bhqk", q, k) * scale + pos_bias
        p = jax.nn.softmax(s, axis=-1)
        a = jnp.einsum("bhqk,bhkd->bhqd", p, v).transpose(0, 2, 1, 3).reshape(B, S, inner)
        hidden = hidden + a @ wo
        n = rms(hidden, params["ln2"][l, 0])
        ff = n @ wi
        g = jax.nn.gelu(ff[..., :Dff], approximate=True) * ff[..., Dff:]
        hidden = hidden + g @ wout
    return rms(hidden, params["final_ln"][0])


# ------------------------------------ main -----------------------------------

if __name__ == "__main__":
    cfg = Cfg()
    key = jax.random.PRNGKey(0)
    k_param, k_ids = jax.random.split(key)
    params = init_params(k_param, cfg)

    B, S = 2, 16
    input_ids = jax.random.randint(k_ids, (B, S), 0, cfg.vocab_size, dtype=jnp.int32)

    fwd = jax.jit(lambda p, ids: flash_t5_stack_pallas(p, ids, cfg))
    out = jax.block_until_ready(fwd(params, input_ids))

    ref = reference_forward(params, input_ids, cfg)
    assert out.shape == (B, S, cfg.d_model)
    # bf16 MXU operands + approx-reciprocal softmax vs. a pure-f32 reference: errors
    # stay ~1e-3 absolute at these magnitudes, well inside the tolerance below.
    assert jnp.allclose(out, ref, rtol=2e-2, atol=2e-2), "mismatch vs reference"

    print("KERNEL_OK")
</pallas_src>

<mosaic_0001>
module attributes {stable_mosaic.version = 11 : i64} {
  func.func @stack_kernel(%arg0: memref<32x32xf32, #tpu.memory_space<vmem>>, %arg1: memref<4x16x16xbf16, #tpu.memory_space<vmem>>, %arg2: memref<2x1x32xf32, #tpu.memory_space<vmem>>, %arg3: memref<2x32x96xbf16, #tpu.memory_space<vmem>>, %arg4: memref<2x32x32xbf16, #tpu.memory_space<vmem>>, %arg5: memref<2x1x32xf32, #tpu.memory_space<vmem>>, %arg6: memref<2x32x128xbf16, #tpu.memory_space<vmem>>, %arg7: memref<2x64x32xbf16, #tpu.memory_space<vmem>>, %arg8: memref<1x32xf32, #tpu.memory_space<vmem>>, %arg9: memref<32x32xf32, #tpu.memory_space<vmem>>) attributes {dimension_semantics = [], scalar_prefetch = 0 : i64, scratch_operands = 0 : i64, tpu.core_type = #tpu.core_type<tc>} {
    %c0 = arith.constant 0 : index
    %c0_0 = arith.constant 0 : index
    %0 = vector.load %arg0[%c0, %c0_0] : memref<32x32xf32, #tpu.memory_space<vmem>>, vector<32x32xf32>
    %c0_1 = arith.constant 0 : index
    %c0_2 = arith.constant 0 : index
    %c0_3 = arith.constant 0 : index
    %1 = vector.load %arg1[%c0_1, %c0_2, %c0_3] : memref<4x16x16xbf16, #tpu.memory_space<vmem>>, vector<4x16x16xbf16>
    %2 = arith.extf %1 : vector<4x16x16xbf16> to vector<4x16x16xf32>
    %c0_4 = arith.constant 0 : index
    %c0_5 = arith.constant 0 : index
    %c0_6 = arith.constant 0 : index
    %3 = vector.load %arg2[%c0_4, %c0_5, %c0_6] : memref<2x1x32xf32, #tpu.memory_space<vmem>>, vector<1x1x32xf32>
    %4 = vector.shape_cast %3 : vector<1x1x32xf32> to vector<1x32xf32>
    %5 = arith.mulf %0, %0 : vector<32x32xf32>
    %cst = arith.constant dense<0.000000e+00> : vector<32xf32>
    %6 = vector.multi_reduction <add>, %5, %cst [1] : vector<32x32xf32> to vector<32xf32>
    %7 = vector.shape_cast %6 : vector<32xf32> to vector<32x1xf32>
    %cst_7 = arith.constant 3.200000e+01 : f32
    %8 = vector.broadcast %cst_7 : f32 to vector<32x1xf32>
    %9 = arith.divf %7, %8 : vector<32x1xf32>
    %cst_8 = arith.constant 9.99999997E-7 : f32
    %10 = vector.broadcast %cst_8 : f32 to vector<32x1xf32>
    %11 = arith.addf %9, %10 : vector<32x1xf32>
    %12 = math.rsqrt %11 : vector<32x1xf32>
    %13 = vector.broadcast %12 : vector<32x1xf32> to vector<32x32xf32>
    %14 = arith.mulf %0, %13 : vector<32x32xf32>
    %15 = vector.broadcast %4 : vector<1x32xf32> to vector<32x32xf32>
    %16 = arith.mulf %15, %14 : vector<32x32xf32>
    %17 = arith.truncf %16 : vector<32x32xf32> to vector<32x32xbf16>
    %c0_9 = arith.constant 0 : index
    %c0_10 = arith.constant 0 : index
    %c0_11 = arith.constant 0 : index
    %18 = vector.load %arg3[%c0_9, %c0_10, %c0_11] : memref<2x32x96xbf16, #tpu.memory_space<vmem>>, vector<1x32x96xbf16>
    %19 = vector.shape_cast %18 : vector<1x32x96xbf16> to vector<32x96xbf16>
    %cst_12 = arith.constant dense<0.000000e+00> : vector<32x96xf32>
    %20 = tpu.matmul %17, %19, %cst_12 {dimension_numbers = #tpu.dot_dimension_numbers<[1], [0], [0], [1], [0, 0, 1, 1], [], []>} : vector<32x32xbf16>, vector<32x96xbf16>, vector<32x96xf32> -> vector<32x96xf32>
    %21 = vector.extract_strided_slice %20 {offsets = [0, 0], sizes = [32, 32], strides = [1, 1]} : vector<32x96xf32> to vector<32x32xf32>
    %cst_13 = arith.constant 5.000000e-01 : f32
    %22 = vector.broadcast %cst_13 : f32 to vector<32x32xf32>
    %23 = arith.mulf %21, %22 : vector<32x32xf32>
    %24 = vector.extract_strided_slice %20 {offsets = [0, 32], sizes = [32, 32], strides = [1, 1]} : vector<32x96xf32> to vector<32x32xf32>
    %25 = vector.extract_strided_slice %20 {offsets = [0, 64], sizes = [32, 32], strides = [1, 1]} : vector<32x96xf32> to vector<32x32xf32>
    %26 = vector.extract_strided_slice %23 {offsets = [0, 0], sizes = [16, 8], strides = [1, 1]} : vector<32x32xf32> to vector<16x8xf32>
    %27 = arith.truncf %26 : vector<16x8xf32> to vector<16x8xbf16>
    %28 = vector.extract_strided_slice %24 {offsets = [0, 0], sizes = [16, 8], strides = [1, 1]} : vector<32x32xf32> to vector<16x8xf32>
    %29 = arith.truncf %28 : vector<16x8xf32> to vector<16x8xbf16>
    %30 = vector.extract_strided_slice %25 {offsets = [0, 0], sizes = [16, 8], strides = [1, 1]} : vector<32x32xf32> to vector<16x8xf32>
    %31 = arith.truncf %30 : vector<16x8xf32> to vector<16x8xbf16>
    %cst_14 = arith.constant dense<0.000000e+00> : vector<16x16xf32>
    %32 = tpu.matmul %27, %29, %cst_14 {dimension_numbers = #tpu.dot_dimension_numbers<[1], [1], [0], [0], [0, 0, 1, 0], [], []>} : vector<16x8xbf16>, vector<16x8xbf16>, vector<16x16xf32> -> vector<16x16xf32>
    %33 = vector.extract_strided_slice %2 {offsets = [0, 0, 0], sizes = [1, 16, 16], strides = [1, 1, 1]} : vector<4x16x16xf32> to vector<1x16x16xf32>
    %34 = vector.shape_cast %33 : vector<1x16x16xf32> to vector<16x16xf32>
    %35 = arith.addf %32, %34 : vector<16x16xf32>
    %cst_15 = arith.constant dense<0xFF800000> : vector<16xf32>
    %36 = vector.multi_reduction <maximumf>, %35, %cst_15 [1] : vector<16x16xf32> to vector<16xf32>
    %37 = vector.shape_cast %36 : vector<16xf32> to vector<16x1xf32>
    %38 = vector.broadcast %37 : vector<16x1xf32> to vector<16x16xf32>
    %39 = arith.subf %35, %38 : vector<16x16xf32>
    %40 = math.exp %39 : vector<16x16xf32>
    %cst_16 = arith.constant dense<0.000000e+00> : vector<16xf32>
    %41 = vector.multi_reduction <add>, %40, %cst_16 [1] : vector<16x16xf32> to vector<16xf32>
    %42 = vector.shape_cast %41 : vector<16xf32> to vector<16x1xf32>
    %43 = tpu.reciprocal %42 {approx = true} : vector<16x1xf32> -> vector<16x1xf32>
    %44 = vector.broadcast %43 : vector<16x1xf32> to vector<16x16xf32>
    %45 = arith.mulf %40, %44 : vector<16x16xf32>
    %46 = arith.truncf %45 : vector<16x16xf32> to vector<16x16xbf16>
    %cst_17 = arith.constant dense<0.000000e+00> : vector<16x8xf32>
    %47 = tpu.matmul %46, %31, %cst_17 {dimension_numbers = #tpu.dot_dimension_numbers<[1], [0], [0], [1], [0, 0, 1, 1], [], []>} : vector<16x16xbf16>, vector<16x8xbf16>, vector<16x8xf32> -> vector<16x8xf32>
    %48 = vector.extract_strided_slice %23 {offsets = [0, 8], sizes = [16, 8], strides = [1, 1]} : vector<32x32xf32> to vector<16x8xf32>
    %49 = arith.truncf %48 : vector<16x8xf32> to vector<16x8xbf16>
    %50 = vector.extract_strided_slice %24 {offsets = [0, 8], sizes = [16, 8], strides = [1, 1]} : vector<32x32xf32> to vector<16x8xf32>
    %51 = arith.truncf %50 : vector<16x8xf32> to vector<16x8xbf16>
    %52 = vector.extract_strided_slice %25 {offsets = [0, 8], sizes = [16, 8], strides = [1, 1]} : vector<32x32xf32> to vector<16x8xf32>
    %53 = arith.truncf %52 : vector<16x8xf32> to vector<16x8xbf16>
    %cst_18 = arith.constant dense<0.000000e+00> : vector<16x16xf32>
    %54 = tpu.matmul %49, %51, %cst_18 {dimension_numbers = #tpu.dot_dimension_numbers<[1], [1], [0], [0], [0, 0, 1, 0], [], []>} : vector<16x8xbf16>, vector<16x8xbf16>, vector<16x16xf32> -> vector<16x16xf32>
    %55 = vector.extract_strided_slice %2 {offsets = [1, 0, 0], sizes = [1, 16, 16], strides = [1, 1, 1]} : vector<4x16x16xf32> to vector<1x16x16xf32>
    %56 = vector.shape_cast %55 : vector<1x16x16xf32> to vector<16x16xf32>
    %57 = arith.addf %54, %56 : vector<16x16xf32>
    %cst_19 = arith.constant dense<0xFF800000> : vector<16xf32>
    %58 = vector.multi_reduction <maximumf>, %57, %cst_19 [1] : vector<16x16xf32> to vector<16xf32>
    %59 = vector.shape_cast %58 : vector<16xf32> to vector<16x1xf32>
    %60 = vector.broadcast %59 : vector<16x1xf32> to vector<16x16xf32>
    %61 = arith.subf %57, %60 : vector<16x16xf32>
    %62 = math.exp %61 : vector<16x16xf32>
    %cst_20 = arith.constant dense<0.000000e+00> : vector<16xf32>
    %63 = vector.multi_reduction <add>, %62, %cst_20 [1] : vector<16x16xf32> to vector<16xf32>
    %64 = vector.shape_cast %63 : vector<16xf32> to vector<16x1xf32>
    %65 = tpu.reciprocal %64 {approx = true} : vector<16x1xf32> -> vector<16x1xf32>
    %66 = vector.broadcast %65 : vector<16x1xf32> to vector<16x16xf32>
    %67 = arith.mulf %62, %66 : vector<16x16xf32>
    %68 = arith.truncf %67 : vector<16x16xf32> to vector<16x16xbf16>
    %cst_21 = arith.constant dense<0.000000e+00> : vector<16x8xf32>
    %69 = tpu.matmul %68, %53, %cst_21 {dimension_numbers = #tpu.dot_dimension_numbers<[1], [0], [0], [1], [0, 0, 1, 1], [], []>} : vector<16x16xbf16>, vector<16x8xbf16>, vector<16x8xf32> -> vector<16x8xf32>
    %70 = vector.extract_strided_slice %23 {offsets = [0, 16], sizes = [16, 8], strides = [1, 1]} : vector<32x32xf32> to vector<16x8xf32>
    %71 = arith.truncf %70 : vector<16x8xf32> to vector<16x8xbf16>
    %72 = vector.extract_strided_slice %24 {offsets = [0, 16], sizes = [16, 8], strides = [1, 1]} : vector<32x32xf32> to vector<16x8xf32>
    %73 = arith.truncf %72 : vector<16x8xf32> to vector<16x8xbf16>
    %74 = vector.extract_strided_slice %25 {offsets = [0, 16], sizes = [16, 8], strides = [1, 1]} : vector<32x32xf32> to vector<16x8xf32>
    %75 = arith.truncf %74 : vector<16x8xf32> to vector<16x8xbf16>
    %cst_22 = arith.constant dense<0.000000e+00> : vector<16x16xf32>
    %76 = tpu.matmul %71, %73, %cst_22 {dimension_numbers = #tpu.dot_dimension_numbers<[1], [1], [0], [0], [0, 0, 1, 0], [], []>} : vector<16x8xbf16>, vector<16x8xbf16>, vector<16x16xf32> -> vector<16x16xf32>
    %77 = vector.extract_strided_slice %2 {offsets = [2, 0, 0], sizes = [1, 16, 16], strides = [1, 1, 1]} : vector<4x16x16xf32> to vector<1x16x16xf32>
    %78 = vector.shape_cast %77 : vector<1x16x16xf32> to vector<16x16xf32>
    %79 = arith.addf %76, %78 : vector<16x16xf32>
    %cst_23 = arith.constant dense<0xFF800000> : vector<16xf32>
    %80 = vector.multi_reduction <maximumf>, %79, %cst_23 [1] : vector<16x16xf32> to vector<16xf32>
    %81 = vector.shape_cast %80 : vector<16xf32> to vector<16x1xf32>
    %82 = vector.broadcast %81 : vector<16x1xf32> to vector<16x16xf32>
    %83 = arith.subf %79, %82 : vector<16x16xf32>
    %84 = math.exp %83 : vector<16x16xf32>
    %cst_24 = arith.constant dense<0.000000e+00> : vector<16xf32>
    %85 = vector.multi_reduction <add>, %84, %cst_24 [1] : vector<16x16xf32> to vector<16xf32>
    %86 = vector.shape_cast %85 : vector<16xf32> to vector<16x1xf32>
    %87 = tpu.reciprocal %86 {approx = true} : vector<16x1xf32> -> vector<16x1xf32>
    %88 = vector.broadcast %87 : vector<16x1xf32> to vector<16x16xf32>
    %89 = arith.mulf %84, %88 : vector<16x16xf32>
    %90 = arith.truncf %89 : vector<16x16xf32> to vector<16x16xbf16>
    %cst_25 = arith.constant dense<0.000000e+00> : vector<16x8xf32>
    %91 = tpu.matmul %90, %75, %cst_25 {dimension_numbers = #tpu.dot_dimension_numbers<[1], [0], [0], [1], [0, 0, 1, 1], [], []>} : vector<16x16xbf16>, vector<16x8xbf16>, vector<16x8xf32> -> vector<16x8xf32>
    %92 = vector.extract_strided_slice %23 {offsets = [0, 24], sizes = [16, 8], strides = [1, 1]} : vector<32x32xf32> to vector<16x8xf32>
    %93 = arith.truncf %92 : vector<16x8xf32> to vector<16x8xbf16>
    %94 = vector.extract_strided_slice %24 {offsets = [0, 24], sizes = [16, 8], strides = [1, 1]} : vector<32x32xf32> to vector<16x8xf32>
    %95 = arith.truncf %94 : vector<16x8xf32> to vector<16x8xbf16>
    %96 = vector.extract_strided_slice %25 {offsets = [0, 24], sizes = [16, 8], strides = [1, 1]} : vector<32x32xf32> to vector<16x8xf32>
    %97 = arith.truncf %96 : vector<16x8xf32> to vector<16x8xbf16>
    %cst_26 = arith.constant dense<0.000000e+00> : vector<16x16xf32>
    %98 = tpu.matmul %93, %95, %cst_26 {dimension_numbers = #tpu.dot_dimension_numbers<[1], [1], [0], [0], [0, 0, 1, 0], [], []>} : vector<16x8xbf16>, vector<16x8xbf16>, vector<16x16xf32> -> vector<16x16xf32>
    %99 = vector.extract_strided_slice %2 {offsets = [3, 0, 0], sizes = [1, 16, 16], strides = [1, 1, 1]} : vector<4x16x16xf32> to vector<1x16x16xf32>
    %100 = vector.shape_cast %99 : vector<1x16x16xf32> to vector<16x16xf32>
    %101 = arith.addf %98, %100 : vector<16x16xf32>
    %cst_27 = arith.constant dense<0xFF800000> : vector<16xf32>
    %102 = vector.multi_reduction <maximumf>, %101, %cst_27 [1] : vector<16x16xf32> to vector<16xf32>
    %103 = vector.shape_cast %102 : vector<16xf32> to vector<16x1xf32>
    %104 = vector.broadcast %103 : vector<16x1xf32> to vector<16x16xf32>
    %105 = arith.subf %101, %104 : vector<16x16xf32>
    %106 = math.exp %105 : vector<16x16xf32>
    %cst_28 = arith.constant dense<0.000000e+00> : vector<16xf32>
    %107 = vector.multi_reduction <add>, %106, %cst_28 [1] : vector<16x16xf32> to vector<16xf32>
    %108 = vector.shape_cast %107 : vector<16xf32> to vector<16x1xf32>
    %109 = tpu.reciprocal %108 {approx = true} : vector<16x1xf32> -> vector<16x1xf32>
    %110 = vector.broadcast %109 : vector<16x1xf32> to vector<16x16xf32>
    %111 = arith.mulf %106, %110 : vector<16x16xf32>
    %112 = arith.truncf %111 : vector<16x16xf32> to vector<16x16xbf16>
    %cst_29 = arith.constant dense<0.000000e+00> : vector<16x8xf32>
    %113 = tpu.matmul %112, %97, %cst_29 {dimension_numbers = #tpu.dot_dimension_numbers<[1], [0], [0], [1], [0, 0, 1, 1], [], []>} : vector<16x16xbf16>, vector<16x8xbf16>, vector<16x8xf32> -> vector<16x8xf32>
    %114 = tpu.concatenate %47, %69, %91, %113 in 1 : vector<16x8xf32>, vector<16x8xf32>, vector<16x8xf32>, vector<16x8xf32> -> vector<16x32xf32>
    %115 = vector.extract_strided_slice %23 {offsets = [16, 0], sizes = [16, 8], strides = [1, 1]} : vector<32x32xf32> to vector<16x8xf32>
    %116 = arith.truncf %115 : vector<16x8xf32> to vector<16x8xbf16>
    %117 = vector.extract_strided_slice %24 {offsets = [16, 0], sizes = [16, 8], strides = [1, 1]} : vector<32x32xf32> to vector<16x8xf32>
    %118 = arith.truncf %117 : vector<16x8xf32> to vector<16x8xbf16>
    %119 = vector.extract_strided_slice %25 {offsets = [16, 0], sizes = [16, 8], strides = [1, 1]} : vector<32x32xf32> to vector<16x8xf32>
    %120 = arith.truncf %119 : vector<16x8xf32> to vector<16x8xbf16>
    %cst_30 = arith.constant dense<0.000000e+00> : vector<16x16xf32>
    %121 = tpu.matmul %116, %118, %cst_30 {dimension_numbers = #tpu.dot_dimension_numbers<[1], [1], [0], [0], [0, 0, 1, 0], [], []>} : vector<16x8xbf16>, vector<16x8xbf16>, vector<16x16xf32> -> vector<16x16xf32>
    %122 = vector.extract_strided_slice %2 {offsets = [0, 0, 0], sizes = [1, 16, 16], strides = [1, 1, 1]} : vector<4x16x16xf32> to vector<1x16x16xf32>
    %123 = vector.shape_cast %122 : vector<1x16x16xf32> to vector<16x16xf32>
    %124 = arith.addf %121, %123 : vector<16x16xf32>
    %cst_31 = arith.constant dense<0xFF800000> : vector<16xf32>
    %125 = vector.multi_reduction <maximumf>, %124, %cst_31 [1] : vector<16x16xf32> to vector<16xf32>
    %126 = vector.shape_cast %125 : vector<16xf32> to vector<16x1xf32>
    %127 = vector.broadcast %126 : vector<16x1xf32> to vector<16x16xf32>
    %128 = arith.subf %124, %127 : vector<16x16xf32>
    %129 = math.exp %128 : vector<16x16xf32>
    %cst_32 = arith.constant dense<0.000000e+00> : vector<16xf32>
    %130 = vector.multi_reduction <add>, %129, %cst_32 [1] : vector<16x16xf32> to vector<16xf32>
    %131 = vector.shape_cast %130 : vector<16xf32> to vector<16x1xf32>
    %132 = tpu.reciprocal %131 {approx = true} : vector<16x1xf32> -> vector<16x1xf32>
    %133 = vector.broadcast %132 : vector<16x1xf32> to vector<16x16xf32>
    %134 = arith.mulf %129, %133 : vector<16x16xf32>
    %135 = arith.truncf %134 : vector<16x16xf32> to vector<16x16xbf16>
    %cst_33 = arith.constant dense<0.000000e+00> : vector<16x8xf32>
    %136 = tpu.matmul %135, %120, %cst_33 {dimension_numbers = #tpu.dot_dimension_numbers<[1], [0], [0], [1], [0, 0, 1, 1], [], []>} : vector<16x16xbf16>, vector<16x8xbf16>, vector<16x8xf32> -> vector<16x8xf32>
    %137 = vector.extract_strided_slice %23 {offsets = [16, 8], sizes = [16, 8], strides = [1, 1]} : vector<32x32xf32> to vector<16x8xf32>
    %138 = arith.truncf %137 : vector<16x8xf32> to vector<16x8xbf16>
    %139 = vector.extract_strided_slice %24 {offsets = [16, 8], sizes = [16, 8], strides = [1, 1]} : vector<32x32xf32> to vector<16x8xf32>
    %140 = arith.truncf %139 : vector<16x8xf32> to vector<16x8xbf16>
    %141 = vector.extract_strided_slice %25 {offsets = [16, 8], sizes = [16, 8], strides = [1, 1]} : vector<32x32xf32> to vector<16x8xf32>
    %142 = arith.truncf %141 : vector<16x8xf32> to vector<16x8xbf16>
    %cst_34 = arith.constant dense<0.000000e+00> : vector<16x16xf32>
    %143 = tpu.matmul %138, %140, %cst_34 {dimension_numbers = #tpu.dot_dimension_numbers<[1], [1], [0], [0], [0, 0, 1, 0], [], []>} : vector<16x8xbf16>, vector<16x8xbf16>, vector<16x16xf32> -> vector<16x16xf32>
    %144 = vector.extract_strided_slice %2 {offsets = [1, 0, 0], sizes = [1, 16, 16], strides = [1, 1, 1]} : vector<4x16x16xf32> to vector<1x16x16xf32>
    %145 = vector.shape_cast %144 : vector<1x16x16xf32> to vector<16x16xf32>
    %146 = arith.addf %143, %145 : vector<16x16xf32>
    %cst_35 = arith.constant dense<0xFF800000> : vector<16xf32>
    %147 = vector.multi_reduction <maximumf>, %146, %cst_35 [1] : vector<16x16xf32> to vector<16xf32>
    %148 = vector.shape_cast %147 : vector<16xf32> to vector<16x1xf32>
    %149 = vector.broadcast %148 : vector<16x1xf32> to vector<16x16xf32>
    %150 = arith.subf %146, %149 : vector<16x16xf32>
    %151 = math.exp %150 : vector<16x16xf32>
    %cst_36 = arith.constant dense<0.000000e+00> : vector<16xf32>
    %152 = vector.multi_reduction <add>, %151, %cst_36 [1] : vector<16x16xf32> to vector<16xf32>
    %153 = vector.shape_cast %152 : vector<16xf32> to vector<16x1xf32>
    %154 = tpu.reciprocal %153 {approx = true} : vector<16x1xf32> -> vector<16x1xf32>
    %155 = vector.broadcast %154 : vector<16x1xf32> to vector<16x16xf32>
    %156 = arith.mulf %151, %155 : vector<16x16xf32>
    %157 = arith.truncf %156 : vector<16x16xf32> to vector<16x16xbf16>
    %cst_37 = arith.constant dense<0.000000e+00> : vector<16x8xf32>
    %158 = tpu.matmul %157, %142, %cst_37 {dimension_numbers = #tpu.dot_dimension_numbers<[1], [0], [0], [1], [0, 0, 1, 1], [], []>} : vector<16x16xbf16>, vector<16x8xbf16>, vector<16x8xf32> -> vector<16x8xf32>
    %159 = vector.extract_strided_slice %23 {offsets = [16, 16], sizes = [16, 8], strides = [1, 1]} : vector<32x32xf32> to vector<16x8xf32>
    %160 = arith.truncf %159 : vector<16x8xf32> to vector<16x8xbf16>
    %161 = vector.extract_strided_slice %24 {offsets = [16, 16], sizes = [16, 8], strides = [1, 1]} : vector<32x32xf32> to vector<16x8xf32>
    %162 = arith.truncf %161 : vector<16x8xf32> to vector<16x8xbf16>
    %163 = vector.extract_strided_slice %25 {offsets = [16, 16], sizes = [16, 8], strides = [1, 1]} : vector<32x32xf32> to vector<16x8xf32>
    %164 = arith.truncf %163 : vector<16x8xf32> to vector<16x8xbf16>
    %cst_38 = arith.constant dense<0.000000e+00> : vector<16x16xf32>
    %165 = tpu.matmul %160, %162, %cst_38 {dimension_numbers = #tpu.dot_dimension_numbers<[1], [1], [0], [0], [0, 0, 1, 0], [], []>} : vector<16x8xbf16>, vector<16x8xbf16>, vector<16x16xf32> -> vector<16x16xf32>
    %166 = vector.extract_strided_slice %2 {offsets = [2, 0, 0], sizes = [1, 16, 16], strides = [1, 1, 1]} : vector<4x16x16xf32> to vector<1x16x16xf32>
    %167 = vector.shape_cast %166 : vector<1x16x16xf32> to vector<16x16xf32>
    %168 = arith.addf %165, %167 : vector<16x16xf32>
    %cst_39 = arith.constant dense<0xFF800000> : vector<16xf32>
    %169 = vector.multi_reduction <maximumf>, %168, %cst_39 [1] : vector<16x16xf32> to vector<16xf32>
    %170 = vector.shape_cast %169 : vector<16xf32> to vector<16x1xf32>
    %171 = vector.broadcast %170 : vector<16x1xf32> to vector<16x16xf32>
    %172 = arith.subf %168, %171 : vector<16x16xf32>
    %173 = math.exp %172 : vector<16x16xf32>
    %cst_40 = arith.constant dense<0.000000e+00> : vector<16xf32>
    %174 = vector.multi_reduction <add>, %173, %cst_40 [1] : vector<16x16xf32> to vector<16xf32>
    %175 = vector.shape_cast %174 : vector<16xf32> to vector<16x1xf32>
    %176 = tpu.reciprocal %175 {approx = true} : vector<16x1xf32> -> vector<16x1xf32>
    %177 = vector.broadcast %176 : vector<16x1xf32> to vector<16x16xf32>
    %178 = arith.mulf %173, %177 : vector<16x16xf32>
    %179 = arith.truncf %178 : vector<16x16xf32> to vector<16x16xbf16>
    %cst_41 = arith.constant dense<0.000000e+00> : vector<16x8xf32>
    %180 = tpu.matmul %179, %164, %cst_41 {dimension_numbers = #tpu.dot_dimension_numbers<[1], [0], [0], [1], [0, 0, 1, 1], [], []>} : vector<16x16xbf16>, vector<16x8xbf16>, vector<16x8xf32> -> vector<16x8xf32>
    %181 = vector.extract_strided_slice %23 {offsets = [16, 24], sizes = [16, 8], strides = [1, 1]} : vector<32x32xf32> to vector<16x8xf32>
    %182 = arith.truncf %181 : vector<16x8xf32> to vector<16x8xbf16>
    %183 = vector.extract_strided_slice %24 {offsets = [16, 24], sizes = [16, 8], strides = [1, 1]} : vector<32x32xf32> to vector<16x8xf32>
    %184 = arith.truncf %183 : vector<16x8xf32> to vector<16x8xbf16>
    %185 = vector.extract_strided_slice %25 {offsets = [16, 24], sizes = [16, 8], strides = [1, 1]} : vector<32x32xf32> to vector<16x8xf32>
    %186 = arith.truncf %185 : vector<16x8xf32> to vector<16x8xbf16>
    %cst_42 = arith.constant dense<0.000000e+00> : vector<16x16xf32>
    %187 = tpu.matmul %182, %184, %cst_42 {dimension_numbers = #tpu.dot_dimension_numbers<[1], [1], [0], [0], [0, 0, 1, 0], [], []>} : vector<16x8xbf16>, vector<16x8xbf16>, vector<16x16xf32> -> vector<16x16xf32>
    %188 = vector.extract_strided_slice %2 {offsets = [3, 0, 0], sizes = [1, 16, 16], strides = [1, 1, 1]} : vector<4x16x16xf32> to vector<1x16x16xf32>
    %189 = vector.shape_cast %188 : vector<1x16x16xf32> to vector<16x16xf32>
    %190 = arith.addf %187, %189 : vector<16x16xf32>
    %cst_43 = arith.constant dense<0xFF800000> : vector<16xf32>
    %191 = vector.multi_reduction <maximumf>, %190, %cst_43 [1] : vector<16x16xf32> to vector<16xf32>
    %192 = vector.shape_cast %191 : vector<16xf32> to vector<16x1xf32>
    %193 = vector.broadcast %192 : vector<16x1xf32> to vector<16x16xf32>
    %194 = arith.subf %190, %193 : vector<16x16xf32>
    %195 = math.exp %194 : vector<16x16xf32>
    %cst_44 = arith.constant dense<0.000000e+00> : vector<16xf32>
    %196 = vector.multi_reduction <add>, %195, %cst_44 [1] : vector<16x16xf32> to vector<16xf32>
    %197 = vector.shape_cast %196 : vector<16xf32> to vector<16x1xf32>
    %198 = tpu.reciprocal %197 {approx = true} : vector<16x1xf32> -> vector<16x1xf32>
    %199 = vector.broadcast %198 : vector<16x1xf32> to vector<16x16xf32>
    %200 = arith.mulf %195, %199 : vector<16x16xf32>
    %201 = arith.truncf %200 : vector<16x16xf32> to vector<16x16xbf16>
    %cst_45 = arith.constant dense<0.000000e+00> : vector<16x8xf32>
    %202 = tpu.matmul %201, %186, %cst_45 {dimension_numbers = #tpu.dot_dimension_numbers<[1], [0], [0], [1], [0, 0, 1, 1], [], []>} : vector<16x16xbf16>, vector<16x8xbf16>, vector<16x8xf32> -> vector<16x8xf32>
    %203 = tpu.concatenate %136, %158, %180, %202 in 1 : vector<16x8xf32>, vector<16x8xf32>, vector<16x8xf32>, vector<16x8xf32> -> vector<16x32xf32>
    %204 = tpu.concatenate %114, %203 in 0 : vector<16x32xf32>, vector<16x32xf32> -> vector<32x32xf32>
    %205 = arith.truncf %204 : vector<32x32xf32> to vector<32x32xbf16>
    %c0_46 = arith.constant 0 : index
    %c0_47 = arith.constant 0 : index
    %c0_48 = arith.constant 0 : index
    %206 = vector.load %arg4[%c0_46, %c0_47, %c0_48] : memref<2x32x32xbf16, #tpu.memory_space<vmem>>, vector<1x32x32xbf16>
    %207 = vector.shape_cast %206 : vector<1x32x32xbf16> to vector<32x32xbf16>
    %cst_49 = arith.constant dense<0.000000e+00> : vector<32x32xf32>
    %208 = tpu.matmul %205, %207, %cst_49 {dimension_numbers = #tpu.dot_dimension_numbers<[1], [0], [0], [1], [0, 0, 1, 1], [], []>} : vector<32x32xbf16>, vector<32x32xbf16>, vector<32x32xf32> -> vector<32x32xf32>
    %209 = arith.addf %0, %208 : vector<32x32xf32>
    %c0_50 = arith.constant 0 : index
    %c0_51 = arith.constant 0 : index
    %c0_52 = arith.constant 0 : index
    %210 = vector.load %arg5[%c0_50, %c0_51, %c0_52] : memref<2x1x32xf32, #tpu.memory_space<vmem>>, vector<1x1x32xf32>
    %211 = vector.shape_cast %210 : vector<1x1x32xf32> to vector<1x32xf32>
    %212 = arith.mulf %209, %209 : vector<32x32xf32>
    %cst_53 = arith.constant dense<0.000000e+00> : vector<32xf32>
    %213 = vector.multi_reduction <add>, %212, %cst_53 [1] : vector<32x32xf32> to vector<32xf32>
    %214 = vector.shape_cast %213 : vector<32xf32> to vector<32x1xf32>
    %cst_54 = arith.constant 3.200000e+01 : f32
    %215 = vector.broadcast %cst_54 : f32 to vector<32x1xf32>
    %216 = arith.divf %214, %215 : vector<32x1xf32>
    %cst_55 = arith.constant 9.99999997E-7 : f32
    %217 = vector.broadcast %cst_55 : f32 to vector<32x1xf32>
    %218 = arith.addf %216, %217 : vector<32x1xf32>
    %219 = math.rsqrt %218 : vector<32x1xf32>
    %220 = vector.broadcast %219 : vector<32x1xf32> to vector<32x32xf32>
    %221 = arith.mulf %209, %220 : vector<32x32xf32>
    %222 = vector.broadcast %211 : vector<1x32xf32> to vector<32x32xf32>
    %223 = arith.mulf %222, %221 : vector<32x32xf32>
    %224 = arith.truncf %223 : vector<32x32xf32> to vector<32x32xbf16>
    %c0_56 = arith.constant 0 : index
    %c0_57 = arith.constant 0 : index
    %c0_58 = arith.constant 0 : index
    %225 = vector.load %arg6[%c0_56, %c0_57, %c0_58] : memref<2x32x128xbf16, #tpu.memory_space<vmem>>, vector<1x32x128xbf16>
    %226 = vector.shape_cast %225 : vector<1x32x128xbf16> to vector<32x128xbf16>
    %cst_59 = arith.constant dense<0.000000e+00> : vector<32x128xf32>
    %227 = tpu.matmul %224, %226, %cst_59 {dimension_numbers = #tpu.dot_dimension_numbers<[1], [0], [0], [1], [0, 0, 1, 1], [], []>} : vector<32x32xbf16>, vector<32x128xbf16>, vector<32x128xf32> -> vector<32x128xf32>
    %228 = vector.extract_strided_slice %227 {offsets = [0, 0], sizes = [32, 64], strides = [1, 1]} : vector<32x128xf32> to vector<32x64xf32>
    %229 = arith.mulf %228, %228 : vector<32x64xf32>
    %230 = arith.mulf %228, %229 : vector<32x64xf32>
    %cst_60 = arith.constant 4.471500e-02 : f32
    %231 = vector.broadcast %cst_60 : f32 to vector<32x64xf32>
    %232 = arith.mulf %231, %230 : vector<32x64xf32>
    %233 = arith.addf %228, %232 : vector<32x64xf32>
    %cst_61 = arith.constant 0.797884583 : f32
    %234 = vector.broadcast %cst_61 : f32 to vector<32x64xf32>
    %235 = arith.mulf %234, %233 : vector<32x64xf32>
    %236 = math.tanh %235 : vector<32x64xf32>
    %cst_62 = arith.constant 1.000000e+00 : f32
    %237 = vector.broadcast %cst_62 : f32 to vector<32x64xf32>
    %238 = arith.addf %237, %236 : vector<32x64xf32>
    %cst_63 = arith.constant 5.000000e-01 : f32
    %239 = vector.broadcast %cst_63 : f32 to vector<32x64xf32>
    %240 = arith.mulf %239, %238 : vector<32x64xf32>
    %241 = arith.mulf %228, %240 : vector<32x64xf32>
    %242 = vector.extract_strided_slice %227 {offsets = [0, 64], sizes = [32, 64], strides = [1, 1]} : vector<32x128xf32> to vector<32x64xf32>
    %243 = arith.mulf %241, %242 : vector<32x64xf32>
    %244 = arith.truncf %243 : vector<32x64xf32> to vector<32x64xbf16>
    %c0_64 = arith.constant 0 : index
    %c0_65 = arith.constant 0 : index
    %c0_66 = arith.constant 0 : index
    %245 = vector.load %arg7[%c0_64, %c0_65, %c0_66] : memref<2x64x32xbf16, #tpu.memory_space<vmem>>, vector<1x64x32xbf16>
    %246 = vector.shape_cast %245 : vector<1x64x32xbf16> to vector<64x32xbf16>
    %cst_67 = arith.constant dense<0.000000e+00> : vector<32x32xf32>
    %247 = tpu.matmul %244, %246, %cst_67 {dimension_numbers = #tpu.dot_dimension_numbers<[1], [0], [0], [1], [0, 0, 1, 1], [], []>} : vector<32x64xbf16>, vector<64x32xbf16>, vector<32x32xf32> -> vector<32x32xf32>
    %248 = arith.addf %209, %247 : vector<32x32xf32>
    %c1 = arith.constant 1 : index
    %c0_68 = arith.constant 0 : index
    %c0_69 = arith.constant 0 : index
    %249 = vector.load %arg2[%c1, %c0_68, %c0_69] : memref<2x1x32xf32, #tpu.memory_space<vmem>>, vector<1x1x32xf32>
    %250 = vector.shape_cast %249 : vector<1x1x32xf32> to vector<1x32xf32>
    %251 = arith.mulf %248, %248 : vector<32x32xf32>
    %cst_70 = arith.constant dense<0.000000e+00> : vector<32xf32>
    %252 = vector.multi_reduction <add>, %251, %cst_70 [1] : vector<32x32xf32> to vector<32xf32>
    %253 = vector.shape_cast %252 : vector<32xf32> to vector<32x1xf32>
    %cst_71 = arith.constant 3.200000e+01 : f32
    %254 = vector.broadcast %cst_71 : f32 to vector<32x1xf32>
    %255 = arith.divf %253, %254 : vector<32x1xf32>
    %cst_72 = arith.constant 9.99999997E-7 : f32
    %256 = vector.broadcast %cst_72 : f32 to vector<32x1xf32>
    %257 = arith.addf %255, %256 : vector<32x1xf32>
    %258 = math.rsqrt %257 : vector<32x1xf32>
    %259 = vector.broadcast %258 : vector<32x1xf32> to vector<32x32xf32>
    %260 = arith.mulf %248, %259 : vector<32x32xf32>
    %261 = vector.broadcast %250 : vector<1x32xf32> to vector<32x32xf32>
    %262 = arith.mulf %261, %260 : vector<32x32xf32>
    %263 = arith.truncf %262 : vector<32x32xf32> to vector<32x32xbf16>
    %c1_73 = arith.constant 1 : index
    %c0_74 = arith.constant 0 : index
    %c0_75 = arith.constant 0 : index
    %264 = vector.load %arg3[%c1_73, %c0_74, %c0_75] : memref<2x32x96xbf16, #tpu.memory_space<vmem>>, vector<1x32x96xbf16>
    %265 = vector.shape_cast %264 : vector<1x32x96xbf16> to vector<32x96xbf16>
    %cst_76 = arith.constant dense<0.000000e+00> : vector<32x96xf32>
    %266 = tpu.matmul %263, %265, %cst_76 {dimension_numbers = #tpu.dot_dimension_numbers<[1], [0], [0], [1], [0, 0, 1, 1], [], []>} : vector<32x32xbf16>, vector<32x96xbf16>, vector<32x96xf32> -> vector<32x96xf32>
    %267 = vector.extract_strided_slice %266 {offsets = [0, 0], sizes = [32, 32], strides = [1, 1]} : vector<32x96xf32> to vector<32x32xf32>
    %cst_77 = arith.constant 5.000000e-01 : f32
    %268 = vector.broadcast %cst_77 : f32 to vector<32x32xf32>
    %269 = arith.mulf %267, %268 : vector<32x32xf32>
    %270 = vector.extract_strided_slice %266 {offsets = [0, 32], sizes = [32, 32], strides = [1, 1]} : vector<32x96xf32> to vector<32x32xf32>
    %271 = vector.extract_strided_slice %266 {offsets = [0, 64], sizes = [32, 32], strides = [1, 1]} : vector<32x96xf32> to vector<32x32xf32>
    %272 = vector.extract_strided_slice %269 {offsets = [0, 0], sizes = [16, 8], strides = [1, 1]} : vector<32x32xf32> to vector<16x8xf32>
    %273 = arith.truncf %272 : vector<16x8xf32> to vector<16x8xbf16>
    %274 = vector.extract_strided_slice %270 {offsets = [0, 0], sizes = [16, 8], strides = [1, 1]} : vector<32x32xf32> to vector<16x8xf32>
    %275 = arith.truncf %274 : vector<16x8xf32> to vector<16x8xbf16>
    %276 = vector.extract_strided_slice %271 {offsets = [0, 0], sizes = [16, 8], strides = [1, 1]} : vector<32x32xf32> to vector<16x8xf32>
    %277 = arith.truncf %276 : vector<16x8xf32> to vector<16x8xbf16>
    %cst_78 = arith.constant dense<0.000000e+00> : vector<16x16xf32>
    %278 = tpu.matmul %273, %275, %cst_78 {dimension_numbers = #tpu.dot_dimension_numbers<[1], [1], [0], [0], [0, 0, 1, 0], [], []>} : vector<16x8xbf16>, vector<16x8xbf16>, vector<16x16xf32> -> vector<16x16xf32>
    %279 = vector.extract_strided_slice %2 {offsets = [0, 0, 0], sizes = [1, 16, 16], strides = [1, 1, 1]} : vector<4x16x16xf32> to vector<1x16x16xf32>
    %280 = vector.shape_cast %279 : vector<1x16x16xf32> to vector<16x16xf32>
    %281 = arith.addf %278, %280 : vector<16x16xf32>
    %cst_79 = arith.constant dense<0xFF800000> : vector<16xf32>
    %282 = vector.multi_reduction <maximumf>, %281, %cst_79 [1] : vector<16x16xf32> to vector<16xf32>
    %283 = vector.shape_cast %282 : vector<16xf32> to vector<16x1xf32>
    %284 = vector.broadcast %283 : vector<16x1xf32> to vector<16x16xf32>
    %285 = arith.subf %281, %284 : vector<16x16xf32>
    %286 = math.exp %285 : vector<16x16xf32>
    %cst_80 = arith.constant dense<0.000000e+00> : vector<16xf32>
    %287 = vector.multi_reduction <add>, %286, %cst_80 [1] : vector<16x16xf32> to vector<16xf32>
    %288 = vector.shape_cast %287 : vector<16xf32> to vector<16x1xf32>
    %289 = tpu.reciprocal %288 {approx = true} : vector<16x1xf32> -> vector<16x1xf32>
    %290 = vector.broadcast %289 : vector<16x1xf32> to vector<16x16xf32>
    %291 = arith.mulf %286, %290 : vector<16x16xf32>
    %292 = arith.truncf %291 : vector<16x16xf32> to vector<16x16xbf16>
    %cst_81 = arith.constant dense<0.000000e+00> : vector<16x8xf32>
    %293 = tpu.matmul %292, %277, %cst_81 {dimension_numbers = #tpu.dot_dimension_numbers<[1], [0], [0], [1], [0, 0, 1, 1], [], []>} : vector<16x16xbf16>, vector<16x8xbf16>, vector<16x8xf32> -> vector<16x8xf32>
    %294 = vector.extract_strided_slice %269 {offsets = [0, 8], sizes = [16, 8], strides = [1, 1]} : vector<32x32xf32> to vector<16x8xf32>
    %295 = arith.truncf %294 : vector<16x8xf32> to vector<16x8xbf16>
    %296 = vector.extract_strided_slice %270 {offsets = [0, 8], sizes = [16, 8], strides = [1, 1]} : vector<32x32xf32> to vector<16x8xf32>
    %297 = arith.truncf %296 : vector<16x8xf32> to vector<16x8xbf16>
    %298 = vector.extract_strided_slice %271 {offsets = [0, 8], sizes = [16, 8], strides = [1, 1]} : vector<32x32xf32> to vector<16x8xf32>
    %299 = arith.truncf %298 : vector<16x8xf32> to vector<16x8xbf16>
    %cst_82 = arith.constant dense<0.000000e+00> : vector<16x16xf32>
    %300 = tpu.matmul %295, %297, %cst_82 {dimension_numbers = #tpu.dot_dimension_numbers<[1], [1], [0], [0], [0, 0, 1, 0], [], []>} : vector<16x8xbf16>, vector<16x8xbf16>, vector<16x16xf32> -> vector<16x16xf32>
    %301 = vector.extract_strided_slice %2 {offsets = [1, 0, 0], sizes = [1, 16, 16], strides = [1, 1, 1]} : vector<4x16x16xf32> to vector<1x16x16xf32>
    %302 = vector.shape_cast %301 : vector<1x16x16xf32> to vector<16x16xf32>
    %303 = arith.addf %300, %302 : vector<16x16xf32>
    %cst_83 = arith.constant dense<0xFF800000> : vector<16xf32>
    %304 = vector.multi_reduction <maximumf>, %303, %cst_83 [1] : vector<16x16xf32> to vector<16xf32>
    %305 = vector.shape_cast %304 : vector<16xf32> to vector<16x1xf32>
    %306 = vector.broadcast %305 : vector<16x1xf32> to vector<16x16xf32>
    %307 = arith.subf %303, %306 : vector<16x16xf32>
    %308 = math.exp %307 : vector<16x16xf32>
    %cst_84 = arith.constant dense<0.000000e+00> : vector<16xf32>
    %309 = vector.multi_reduction <add>, %308, %cst_84 [1] : vector<16x16xf32> to vector<16xf32>
    %310 = vector.shape_cast %309 : vector<16xf32> to vector<16x1xf32>
    %311 = tpu.reciprocal %310 {approx = true} : vector<16x1xf32> -> vector<16x1xf32>
    %312 = vector.broadcast %311 : vector<16x1xf32> to vector<16x16xf32>
    %313 = arith.mulf %308, %312 : vector<16x16xf32>
    %314 = arith.truncf %313 : vector<16x16xf32> to vector<16x16xbf16>
    %cst_85 = arith.constant dense<0.000000e+00> : vector<16x8xf32>
    %315 = tpu.matmul %314, %299, %cst_85 {dimension_numbers = #tpu.dot_dimension_numbers<[1], [0], [0], [1], [0, 0, 1, 1], [], []>} : vector<16x16xbf16>, vector<16x8xbf16>, vector<16x8xf32> -> vector<16x8xf32>
    %316 = vector.extract_strided_slice %269 {offsets = [0, 16], sizes = [16, 8], strides = [1, 1]} : vector<32x32xf32> to vector<16x8xf32>
    %317 = arith.truncf %316 : vector<16x8xf32> to vector<16x8xbf16>
    %318 = vector.extract_strided_slice %270 {offsets = [0, 16], sizes = [16, 8], strides = [1, 1]} : vector<32x32xf32> to vector<16x8xf32>
    %319 = arith.truncf %318 : vector<16x8xf32> to vector<16x8xbf16>
    %320 = vector.extract_strided_slice %271 {offsets = [0, 16], sizes = [16, 8], strides = [1, 1]} : vector<32x32xf32> to vector<16x8xf32>
    %321 = arith.truncf %320 : vector<16x8xf32> to vector<16x8xbf16>
    %cst_86 = arith.constant dense<0.000000e+00> : vector<16x16xf32>
    %322 = tpu.matmul %317, %319, %cst_86 {dimension_numbers = #tpu.dot_dimension_numbers<[1], [1], [0], [0], [0, 0, 1, 0], [], []>} : vector<16x8xbf16>, vector<16x8xbf16>, vector<16x16xf32> -> vector<16x16xf32>
    %323 = vector.extract_strided_slice %2 {offsets = [2, 0, 0], sizes = [1, 16, 16], strides = [1, 1, 1]} : vector<4x16x16xf32> to vector<1x16x16xf32>
    %324 = vector.shape_cast %323 : vector<1x16x16xf32> to vector<16x16xf32>
    %325 = arith.addf %322, %324 : vector<16x16xf32>
    %cst_87 = arith.constant dense<0xFF800000> : vector<16xf32>
    %326 = vector.multi_reduction <maximumf>, %325, %cst_87 [1] : vector<16x16xf32> to vector<16xf32>
    %327 = vector.shape_cast %326 : vector<16xf32> to vector<16x1xf32>
    %328 = vector.broadcast %327 : vector<16x1xf32> to vector<16x16xf32>
    %329 = arith.subf %325, %328 : vector<16x16xf32>
    %330 = math.exp %329 : vector<16x16xf32>
    %cst_88 = arith.constant dense<0.000000e+00> : vector<16xf32>
    %331 = vector.multi_reduction <add>, %330, %cst_88 [1] : vector<16x16xf32> to vector<16xf32>
    %332 = vector.shape_cast %331 : vector<16xf32> to vector<16x1xf32>
    %333 = tpu.reciprocal %332 {approx = true} : vector<16x1xf32> -> vector<16x1xf32>
    %334 = vector.broadcast %333 : vector<16x1xf32> to vector<16x16xf32>
    %335 = arith.mulf %330, %334 : vector<16x16xf32>
    %336 = arith.truncf %335 : vector<16x16xf32> to vector<16x16xbf16>
    %cst_89 = arith.constant dense<0.000000e+00> : vector<16x8xf32>
    %337 = tpu.matmul %336, %321, %cst_89 {dimension_numbers = #tpu.dot_dimension_numbers<[1], [0], [0], [1], [0, 0, 1, 1], [], []>} : vector<16x16xbf16>, vector<16x8xbf16>, vector<16x8xf32> -> vector<16x8xf32>
    %338 = vector.extract_strided_slice %269 {offsets = [0, 24], sizes = [16, 8], strides = [1, 1]} : vector<32x32xf32> to vector<16x8xf32>
    %339 = arith.truncf %338 : vector<16x8xf32> to vector<16x8xbf16>
    %340 = vector.extract_strided_slice %270 {offsets = [0, 24], sizes = [16, 8], strides = [1, 1]} : vector<32x32xf32> to vector<16x8xf32>
    %341 = arith.truncf %340 : vector<16x8xf32> to vector<16x8xbf16>
    %342 = vector.extract_strided_slice %271 {offsets = [0, 24], sizes = [16, 8], strides = [1, 1]} : vector<32x32xf32> to vector<16x8xf32>
    %343 = arith.truncf %342 : vector<16x8xf32> to vector<16x8xbf16>
    %cst_90 = arith.constant dense<0.000000e+00> : vector<16x16xf32>
    %344 = tpu.matmul %339, %341, %cst_90 {dimension_numbers = #tpu.dot_dimension_numbers<[1], [1], [0], [0], [0, 0, 1, 0], [], []>} : vector<16x8xbf16>, vector<16x8xbf16>, vector<16x16xf32> -> vector<16x16xf32>
    %345 = vector.extract_strided_slice %2 {offsets = [3, 0, 0], sizes = [1, 16, 16], strides = [1, 1, 1]} : vector<4x16x16xf32> to vector<1x16x16xf32>
    %346 = vector.shape_cast %345 : vector<1x16x16xf32> to vector<16x16xf32>
    %347 = arith.addf %344, %346 : vector<16x16xf32>
    %cst_91 = arith.constant dense<0xFF800000> : vector<16xf32>
    %348 = vector.multi_reduction <maximumf>, %347, %cst_91 [1] : vector<16x16xf32> to vector<16xf32>
    %349 = vector.shape_cast %348 : vector<16xf32> to vector<16x1xf32>
    %350 = vector.broadcast %349 : vector<16x1xf32> to vector<16x16xf32>
    %351 = arith.subf %347, %350 : vector<16x16xf32>
    %352 = math.exp %351 : vector<16x16xf32>
    %cst_92 = arith.constant dense<0.000000e+00> : vector<16xf32>
    %353 = vector.multi_reduction <add>, %352, %cst_92 [1] : vector<16x16xf32> to vector<16xf32>
    %354 = vector.shape_cast %353 : vector<16xf32> to vector<16x1xf32>
    %355 = tpu.reciprocal %354 {approx = true} : vector<16x1xf32> -> vector<16x1xf32>
    %356 = vector.broadcast %355 : vector<16x1xf32> to vector<16x16xf32>
    %357 = arith.mulf %352, %356 : vector<16x16xf32>
    %358 = arith.truncf %357 : vector<16x16xf32> to vector<16x16xbf16>
    %cst_93 = arith.constant dense<0.000000e+00> : vector<16x8xf32>
    %359 = tpu.matmul %358, %343, %cst_93 {dimension_numbers = #tpu.dot_dimension_numbers<[1], [0], [0], [1], [0, 0, 1, 1], [], []>} : vector<16x16xbf16>, vector<16x8xbf16>, vector<16x8xf32> -> vector<16x8xf32>
    %360 = tpu.concatenate %293, %315, %337, %359 in 1 : vector<16x8xf32>, vector<16x8xf32>, vector<16x8xf32>, vector<16x8xf32> -> vector<16x32xf32>
    %361 = vector.extract_strided_slice %269 {offsets = [16, 0], sizes = [16, 8], strides = [1, 1]} : vector<32x32xf32> to vector<16x8xf32>
    %362 = arith.truncf %361 : vector<16x8xf32> to vector<16x8xbf16>
    %363 = vector.extract_strided_slice %270 {offsets = [16, 0], sizes = [16, 8], strides = [1, 1]} : vector<32x32xf32> to vector<16x8xf32>
    %364 = arith.truncf %363 : vector<16x8xf32> to vector<16x8xbf16>
    %365 = vector.extract_strided_slice %271 {offsets = [16, 0], sizes = [16, 8], strides = [1, 1]} : vector<32x32xf32> to vector<16x8xf32>
    %366 = arith.truncf %365 : vector<16x8xf32> to vector<16x8xbf16>
    %cst_94 = arith.constant dense<0.000000e+00> : vector<16x16xf32>
    %367 = tpu.matmul %362, %364, %cst_94 {dimension_numbers = #tpu.dot_dimension_numbers<[1], [1], [0], [0], [0, 0, 1, 0], [], []>} : vector<16x8xbf16>, vector<16x8xbf16>, vector<16x16xf32> -> vector<16x16xf32>
    %368 = vector.extract_strided_slice %2 {offsets = [0, 0, 0], sizes = [1, 16, 16], strides = [1, 1, 1]} : vector<4x16x16xf32> to vector<1x16x16xf32>
    %369 = vector.shape_cast %368 : vector<1x16x16xf32> to vector<16x16xf32>
    %370 = arith.addf %367, %369 : vector<16x16xf32>
    %cst_95 = arith.constant dense<0xFF800000> : vector<16xf32>
    %371 = vector.multi_reduction <maximumf>, %370, %cst_95 [1] : vector<16x16xf32> to vector<16xf32>
    %372 = vector.shape_cast %371 : vector<16xf32> to vector<16x1xf32>
    %373 = vector.broadcast %372 : vector<16x1xf32> to vector<16x16xf32>
    %374 = arith.subf %370, %373 : vector<16x16xf32>
    %375 = math.exp %374 : vector<16x16xf32>
    %cst_96 = arith.constant dense<0.000000e+00> : vector<16xf32>
    %376 = vector.multi_reduction <add>, %375, %cst_96 [1] : vector<16x16xf32> to vector<16xf32>
    %377 = vector.shape_cast %376 : vector<16xf32> to vector<16x1xf32>
    %378 = tpu.reciprocal %377 {approx = true} : vector<16x1xf32> -> vector<16x1xf32>
    %379 = vector.broadcast %378 : vector<16x1xf32> to vector<16x16xf32>
    %380 = arith.mulf %375, %379 : vector<16x16xf32>
    %381 = arith.truncf %380 : vector<16x16xf32> to vector<16x16xbf16>
    %cst_97 = arith.constant dense<0.000000e+00> : vector<16x8xf32>
    %382 = tpu.matmul %381, %366, %cst_97 {dimension_numbers = #tpu.dot_dimension_numbers<[1], [0], [0], [1], [0, 0, 1, 1], [], []>} : vector<16x16xbf16>, vector<16x8xbf16>, vector<16x8xf32> -> vector<16x8xf32>
    %383 = vector.extract_strided_slice %269 {offsets = [16, 8], sizes = [16, 8], strides = [1, 1]} : vector<32x32xf32> to vector<16x8xf32>
    %384 = arith.truncf %383 : vector<16x8xf32> to vector<16x8xbf16>
    %385 = vector.extract_strided_slice %270 {offsets = [16, 8], sizes = [16, 8], strides = [1, 1]} : vector<32x32xf32> to vector<16x8xf32>
    %386 = arith.truncf %385 : vector<16x8xf32> to vector<16x8xbf16>
    %387 = vector.extract_strided_slice %271 {offsets = [16, 8], sizes = [16, 8], strides = [1, 1]} : vector<32x32xf32> to vector<16x8xf32>
    %388 = arith.truncf %387 : vector<16x8xf32> to vector<16x8xbf16>
    %cst_98 = arith.constant dense<0.000000e+00> : vector<16x16xf32>
    %389 = tpu.matmul %384, %386, %cst_98 {dimension_numbers = #tpu.dot_dimension_numbers<[1], [1], [0], [0], [0, 0, 1, 0], [], []>} : vector<16x8xbf16>, vector<16x8xbf16>, vector<16x16xf32> -> vector<16x16xf32>
    %390 = vector.extract_strided_slice %2 {offsets = [1, 0, 0], sizes = [1, 16, 16], strides = [1, 1, 1]} : vector<4x16x16xf32> to vector<1x16x16xf32>
    %391 = vector.shape_cast %390 : vector<1x16x16xf32> to vector<16x16xf32>
    %392 = arith.addf %389, %391 : vector<16x16xf32>
    %cst_99 = arith.constant dense<0xFF800000> : vector<16xf32>
    %393 = vector.multi_reduction <maximumf>, %392, %cst_99 [1] : vector<16x16xf32> to vector<16xf32>
    %394 = vector.shape_cast %393 : vector<16xf32> to vector<16x1xf32>
    %395 = vector.broadcast %394 : vector<16x1xf32> to vector<16x16xf32>
    %396 = arith.subf %392, %395 : vector<16x16xf32>
    %397 = math.exp %396 : vector<16x16xf32>
    %cst_100 = arith.constant dense<0.000000e+00> : vector<16xf32>
    %398 = vector.multi_reduction <add>, %397, %cst_100 [1] : vector<16x16xf32> to vector<16xf32>
    %399 = vector.shape_cast %398 : vector<16xf32> to vector<16x1xf32>
    %400 = tpu.reciprocal %399 {approx = true} : vector<16x1xf32> -> vector<16x1xf32>
    %401 = vector.broadcast %400 : vector<16x1xf32> to vector<16x16xf32>
    %402 = arith.mulf %397, %401 : vector<16x16xf32>
    %403 = arith.truncf %402 : vector<16x16xf32> to vector<16x16xbf16>
    %cst_101 = arith.constant dense<0.000000e+00> : vector<16x8xf32>
    %404 = tpu.matmul %403, %388, %cst_101 {dimension_numbers = #tpu.dot_dimension_numbers<[1], [0], [0], [1], [0, 0, 1, 1], [], []>} : vector<16x16xbf16>, vector<16x8xbf16>, vector<16x8xf32> -> vector<16x8xf32>
    %405 = vector.extract_strided_slice %269 {offsets = [16, 16], sizes = [16, 8], strides = [1, 1]} : vector<32x32xf32> to vector<16x8xf32>
    %406 = arith.truncf %405 : vector<16x8xf32> to vector<16x8xbf16>
    %407 = vector.extract_strided_slice %270 {offsets = [16, 16], sizes = [16, 8], strides = [1, 1]} : vector<32x32xf32> to vector<16x8xf32>
    %408 = arith.truncf %407 : vector<16x8xf32> to vector<16x8xbf16>
    %409 = vector.extract_strided_slice %271 {offsets = [16, 16], sizes = [16, 8], strides = [1, 1]} : vector<32x32xf32> to vector<16x8xf32>
    %410 = arith.truncf %409 : vector<16x8xf32> to vector<16x8xbf16>
    %cst_102 = arith.constant dense<0.000000e+00> : vector<16x16xf32>
    %411 = tpu.matmul %406, %408, %cst_102 {dimension_numbers = #tpu.dot_dimension_numbers<[1], [1], [0], [0], [0, 0, 1, 0], [], []>} : vector<16x8xbf16>, vector<16x8xbf16>, vector<16x16xf32> -> vector<16x16xf32>
    %412 = vector.extract_strided_slice %2 {offsets = [2, 0, 0], sizes = [1, 16, 16], strides = [1, 1, 1]} : vector<4x16x16xf32> to vector<1x16x16xf32>
    %413 = vector.shape_cast %412 : vector<1x16x16xf32> to vector<16x16xf32>
    %414 = arith.addf %411, %413 : vector<16x16xf32>
    %cst_103 = arith.constant dense<0xFF800000> : vector<16xf32>
    %415 = vector.multi_reduction <maximumf>, %414, %cst_103 [1] : vector<16x16xf32> to vector<16xf32>
    %416 = vector.shape_cast %415 : vector<16xf32> to vector<16x1xf32>
    %417 = vector.broadcast %416 : vector<16x1xf32> to vector<16x16xf32>
    %418 = arith.subf %414, %417 : vector<16x16xf32>
    %419 = math.exp %418 : vector<16x16xf32>
    %cst_104 = arith.constant dense<0.000000e+00> : vector<16xf32>
    %420 = vector.multi_reduction <add>, %419, %cst_104 [1] : vector<16x16xf32> to vector<16xf32>
    %421 = vector.shape_cast %420 : vector<16xf32> to vector<16x1xf32>
    %422 = tpu.reciprocal %421 {approx = true} : vector<16x1xf32> -> vector<16x1xf32>
    %423 = vector.broadcast %422 : vector<16x1xf32> to vector<16x16xf32>
    %424 = arith.mulf %419, %423 : vector<16x16xf32>
    %425 = arith.truncf %424 : vector<16x16xf32> to vector<16x16xbf16>
    %cst_105 = arith.constant dense<0.000000e+00> : vector<16x8xf32>
    %426 = tpu.matmul %425, %410, %cst_105 {dimension_numbers = #tpu.dot_dimension_numbers<[1], [0], [0], [1], [0, 0, 1, 1], [], []>} : vector<16x16xbf16>, vector<16x8xbf16>, vector<16x8xf32> -> vector<16x8xf32>
    %427 = vector.extract_strided_slice %269 {offsets = [16, 24], sizes = [16, 8], strides = [1, 1]} : vector<32x32xf32> to vector<16x8xf32>
    %428 = arith.truncf %427 : vector<16x8xf32> to vector<16x8xbf16>
    %429 = vector.extract_strided_slice %270 {offsets = [16, 24], sizes = [16, 8], strides = [1, 1]} : vector<32x32xf32> to vector<16x8xf32>
    %430 = arith.truncf %429 : vector<16x8xf32> to vector<16x8xbf16>
    %431 = vector.extract_strided_slice %271 {offsets = [16, 24], sizes = [16, 8], strides = [1, 1]} : vector<32x32xf32> to vector<16x8xf32>
    %432 = arith.truncf %431 : vector<16x8xf32> to vector<16x8xbf16>
    %cst_106 = arith.constant dense<0.000000e+00> : vector<16x16xf32>
    %433 = tpu.matmul %428, %430, %cst_106 {dimension_numbers = #tpu.dot_dimension_numbers<[1], [1], [0], [0], [0, 0, 1, 0], [], []>} : vector<16x8xbf16>, vector<16x8xbf16>, vector<16x16xf32> -> vector<16x16xf32>
    %434 = vector.extract_strided_slice %2 {offsets = [3, 0, 0], sizes = [1, 16, 16], strides = [1, 1, 1]} : vector<4x16x16xf32> to vector<1x16x16xf32>
    %435 = vector.shape_cast %434 : vector<1x16x16xf32> to vector<16x16xf32>
    %436 = arith.addf %433, %435 : vector<16x16xf32>
    %cst_107 = arith.constant dense<0xFF800000> : vector<16xf32>
    %437 = vector.multi_reduction <maximumf>, %436, %cst_107 [1] : vector<16x16xf32> to vector<16xf32>
    %438 = vector.shape_cast %437 : vector<16xf32> to vector<16x1xf32>
    %439 = vector.broadcast %438 : vector<16x1xf32> to vector<16x16xf32>
    %440 = arith.subf %436, %439 : vector<16x16xf32>
    %441 = math.exp %440 : vector<16x16xf32>
    %cst_108 = arith.constant dense<0.000000e+00> : vector<16xf32>
    %442 = vector.multi_reduction <add>, %441, %cst_108 [1] : vector<16x16xf32> to vector<16xf32>
    %443 = vector.shape_cast %442 : vector<16xf32> to vector<16x1xf32>
    %444 = tpu.reciprocal %443 {approx = true} : vector<16x1xf32> -> vector<16x1xf32>
    %445 = vector.broadcast %444 : vector<16x1xf32> to vector<16x16xf32>
    %446 = arith.mulf %441, %445 : vector<16x16xf32>
    %447 = arith.truncf %446 : vector<16x16xf32> to vector<16x16xbf16>
    %cst_109 = arith.constant dense<0.000000e+00> : vector<16x8xf32>
    %448 = tpu.matmul %447, %432, %cst_109 {dimension_numbers = #tpu.dot_dimension_numbers<[1], [0], [0], [1], [0, 0, 1, 1], [], []>} : vector<16x16xbf16>, vector<16x8xbf16>, vector<16x8xf32> -> vector<16x8xf32>
    %449 = tpu.concatenate %382, %404, %426, %448 in 1 : vector<16x8xf32>, vector<16x8xf32>, vector<16x8xf32>, vector<16x8xf32> -> vector<16x32xf32>
    %450 = tpu.concatenate %360, %449 in 0 : vector<16x32xf32>, vector<16x32xf32> -> vector<32x32xf32>
    %451 = arith.truncf %450 : vector<32x32xf32> to vector<32x32xbf16>
    %c1_110 = arith.constant 1 : index
    %c0_111 = arith.constant 0 : index
    %c0_112 = arith.constant 0 : index
    %452 = vector.load %arg4[%c1_110, %c0_111, %c0_112] : memref<2x32x32xbf16, #tpu.memory_space<vmem>>, vector<1x32x32xbf16>
    %453 = vector.shape_cast %452 : vector<1x32x32xbf16> to vector<32x32xbf16>
    %cst_113 = arith.constant dense<0.000000e+00> : vector<32x32xf32>
    %454 = tpu.matmul %451, %453, %cst_113 {dimension_numbers = #tpu.dot_dimension_numbers<[1], [0], [0], [1], [0, 0, 1, 1], [], []>} : vector<32x32xbf16>, vector<32x32xbf16>, vector<32x32xf32> -> vector<32x32xf32>
    %455 = arith.addf %248, %454 : vector<32x32xf32>
    %c1_114 = arith.constant 1 : index
    %c0_115 = arith.constant 0 : index
    %c0_116 = arith.constant 0 : index
    %456 = vector.load %arg5[%c1_114, %c0_115, %c0_116] : memref<2x1x32xf32, #tpu.memory_space<vmem>>, vector<1x1x32xf32>
    %457 = vector.shape_cast %456 : vector<1x1x32xf32> to vector<1x32xf32>
    %458 = arith.mulf %455, %455 : vector<32x32xf32>
    %cst_117 = arith.constant dense<0.000000e+00> : vector<32xf32>
    %459 = vector.multi_reduction <add>, %458, %cst_117 [1] : vector<32x32xf32> to vector<32xf32>
    %460 = vector.shape_cast %459 : vector<32xf32> to vector<32x1xf32>
    %cst_118 = arith.constant 3.200000e+01 : f32
    %461 = vector.broadcast %cst_118 : f32 to vector<32x1xf32>
    %462 = arith.divf %460, %461 : vector<32x1xf32>
    %cst_119 = arith.constant 9.99999997E-7 : f32
    %463 = vector.broadcast %cst_119 : f32 to vector<32x1xf32>
    %464 = arith.addf %462, %463 : vector<32x1xf32>
    %465 = math.rsqrt %464 : vector<32x1xf32>
    %466 = vector.broadcast %465 : vector<32x1xf32> to vector<32x32xf32>
    %467 = arith.mulf %455, %466 : vector<32x32xf32>
    %468 = vector.broadcast %457 : vector<1x32xf32> to vector<32x32xf32>
    %469 = arith.mulf %468, %467 : vector<32x32xf32>
    %470 = arith.truncf %469 : vector<32x32xf32> to vector<32x32xbf16>
    %c1_120 = arith.constant 1 : index
    %c0_121 = arith.constant 0 : index
    %c0_122 = arith.constant 0 : index
    %471 = vector.load %arg6[%c1_120, %c0_121, %c0_122] : memref<2x32x128xbf16, #tpu.memory_space<vmem>>, vector<1x32x128xbf16>
    %472 = vector.shape_cast %471 : vector<1x32x128xbf16> to vector<32x128xbf16>
    %cst_123 = arith.constant dense<0.000000e+00> : vector<32x128xf32>
    %473 = tpu.matmul %470, %472, %cst_123 {dimension_numbers = #tpu.dot_dimension_numbers<[1], [0], [0], [1], [0, 0, 1, 1], [], []>} : vector<32x32xbf16>, vector<32x128xbf16>, vector<32x128xf32> -> vector<32x128xf32>
    %474 = vector.extract_strided_slice %473 {offsets = [0, 0], sizes = [32, 64], strides = [1, 1]} : vector<32x128xf32> to vector<32x64xf32>
    %475 = arith.mulf %474, %474 : vector<32x64xf32>
    %476 = arith.mulf %474, %475 : vector<32x64xf32>
    %cst_124 = arith.constant 4.471500e-02 : f32
    %477 = vector.broadcast %cst_124 : f32 to vector<32x64xf32>
    %478 = arith.mulf %477, %476 : vector<32x64xf32>
    %479 = arith.addf %474, %478 : vector<32x64xf32>
    %cst_125 = arith.constant 0.797884583 : f32
    %480 = vector.broadcast %cst_125 : f32 to vector<32x64xf32>
    %481 = arith.mulf %480, %479 : vector<32x64xf32>
    %482 = math.tanh %481 : vector<32x64xf32>
    %cst_126 = arith.constant 1.000000e+00 : f32
    %483 = vector.broadcast %cst_126 : f32 to vector<32x64xf32>
    %484 = arith.addf %483, %482 : vector<32x64xf32>
    %cst_127 = arith.constant 5.000000e-01 : f32
    %485 = vector.broadcast %cst_127 : f32 to vector<32x64xf32>
    %486 = arith.mulf %485, %484 : vector<32x64xf32>
    %487 = arith.mulf %474, %486 : vector<32x64xf32>
    %488 = vector.extract_strided_slice %473 {offsets = [0, 64], sizes = [32, 64], strides = [1, 1]} : vector<32x128xf32> to vector<32x64xf32>
    %489 = arith.mulf %487, %488 : vector<32x64xf32>
    %490 = arith.truncf %489 : vector<32x64xf32> to vector<32x64xbf16>
    %c1_128 = arith.constant 1 : index
    %c0_129 = arith.constant 0 : index
    %c0_130 = arith.constant 0 : index
    %491 = vector.load %arg7[%c1_128, %c0_129, %c0_130] : memref<2x64x32xbf16, #tpu.memory_space<vmem>>, vector<1x64x32xbf16>
    %492 = vector.shape_cast %491 : vector<1x64x32xbf16> to vector<64x32xbf16>
    %cst_131 = arith.constant dense<0.000000e+00> : vector<32x32xf32>
    %493 = tpu.matmul %490, %492, %cst_131 {dimension_numbers = #tpu.dot_dimension_numbers<[1], [0], [0], [1], [0, 0, 1, 1], [], []>} : vector<32x64xbf16>, vector<64x32xbf16>, vector<32x32xf32> -> vector<32x32xf32>
    %494 = arith.addf %455, %493 : vector<32x32xf32>
    %c0_132 = arith.constant 0 : index
    %c0_133 = arith.constant 0 : index
    %495 = vector.load %arg8[%c0_132, %c0_133] : memref<1x32xf32, #tpu.memory_space<vmem>>, vector<1x32xf32>
    %496 = arith.mulf %494, %494 : vector<32x32xf32>
    %cst_134 = arith.constant dense<0.000000e+00> : vector<32xf32>
    %497 = vector.multi_reduction <add>, %496, %cst_134 [1] : vector<32x32xf32> to vector<32xf32>
    %498 = vector.shape_cast %497 : vector<32xf32> to vector<32x1xf32>
    %cst_135 = arith.constant 3.200000e+01 : f32
    %499 = vector.broadcast %cst_135 : f32 to vector<32x1xf32>
    %500 = arith.divf %498, %499 : vector<32x1xf32>
    %cst_136 = arith.constant 9.99999997E-7 : f32
    %501 = vector.broadcast %cst_136 : f32 to vector<32x1xf32>
    %502 = arith.addf %500, %501 : vector<32x1xf32>
    %503 = math.rsqrt %502 : vector<32x1xf32>
    %504 = vector.broadcast %503 : vector<32x1xf32> to vector<32x32xf32>
    %505 = arith.mulf %494, %504 : vector<32x32xf32>
    %506 = vector.broadcast %495 : vector<1x32xf32> to vector<32x32xf32>
    %507 = arith.mulf %506, %505 : vector<32x32xf32>
    %c0_137 = arith.constant 0 : index
    %c0_138 = arith.constant 0 : index
    %508 = vector.load %arg9[%c0_137, %c0_138] : memref<32x32xf32, #tpu.memory_space<vmem>>, vector<32x32xf32>
    tpu.vector_store %arg9[%c0_137, %c0_138], %507 {strides = array<i32>} : memref<32x32xf32, #tpu.memory_space<vmem>>, vector<32x32xf32>,
    return
  }
}

</mosaic_0001>

<llo_original>
// kernel: _lambda_.1
$region0: #{_lambda_.1}
  #allocation0 [shape = 'u32[]', space=smem, size = 0x4, offset = 0x4, fixed_abs, tag = 'smem constant byte address 0x4 - core index']
  #allocation1 [shape = 'u32[144,128]{1,0:T(1,128)}', space=vmem, size = 0x12000, scoped, tag = 'internal scratch']
  %s0 = inlined_call_operand.vmem [shape: f32[32,32], index: 0, kind: input, shape index: {}]
  %s1 = inlined_call_operand.vmem [shape: bf16[4,16,16], index: 1, kind: input, shape index: {}]
  %s2 = inlined_call_operand.vmem [shape: f32[2,1,32], index: 2, kind: input, shape index: {}]
  %s3 = inlined_call_operand.vmem [shape: bf16[2,32,96], index: 3, kind: input, shape index: {}]
  %s4 = inlined_call_operand.vmem [shape: bf16[2,32,32], index: 4, kind: input, shape index: {}]
  %s5 = inlined_call_operand.vmem [shape: f32[2,1,32], index: 5, kind: input, shape index: {}]
  %s6 = inlined_call_operand.vmem [shape: bf16[2,32,128], index: 6, kind: input, shape index: {}]
  %s7 = inlined_call_operand.vmem [shape: bf16[2,64,32], index: 7, kind: input, shape index: {}]
  %s8 = inlined_call_operand.vmem [shape: f32[1,32], index: 8, kind: input, shape index: {}]
  %s9 = inlined_call_operand.hbm [shape: f32[32,32], index: 9, kind: output, shape index: {}]
  %s10 = sld [smem:[#allocation0]]
  $region46: #{_lambda_.1} parent=0
    _
  %s12 = ssub.s32 1, %s10
  %s13 = scalar_select 0, %s12, %s10
  $region1: #{_lambda_.1} parent=0
    #allocation2 [shape = 'u8[16384]{0}', space=vmem, size = 0x4000, scoped, tag = 'output window, operand 0, single buffered']
    #allocation3 [shape = 's32[1]{0}', space=sflag, size = 0x4, scoped, tag = 'scoped memory for _lambda_.1']
    %14 = vsyncpa [#allocation3], 0
    // Predicated region
    $region2: #{_lambda_.1} parent=1 // pred_check
      _
    $region3: #{_lambda_.1} parent=1 // pred_check_branch
      %16 = sbr.rel (0) target = $region5
    $region4: #{_lambda_.1} parent=1 // pred_region
      _
    $region5: #{_lambda_.1} parent=1 // pred_fallthru
      _
    // Predicated region
    $region6: #{_lambda_.1} parent=1 // pred_check
      _
    $region7: #{_lambda_.1} parent=1 // pred_check_branch
      %18 = sbr.rel (0) target = $region9
    $region8: #{_lambda_.1} parent=1 // pred_region
      _
    $region9: #{_lambda_.1} parent=1 // pred_fallthru
      _
    // Predicated region
    $region10: #{_lambda_.1} parent=1 // pred_check
      _
    $region11: #{_lambda_.1} parent=1 // pred_check_branch
      %20 = sbr.rel (0) target = $region13
    $region12: #{_lambda_.1} parent=1 // pred_region
      _
    $region13: #{_lambda_.1} parent=1 // pred_fallthru
      _
    // Predicated region
    $region14: #{_lambda_.1} parent=1 // pred_check
      _
    $region15: #{_lambda_.1} parent=1 // pred_check_branch
      %22 = sbr.rel (0) target = $region17
    $region16: #{_lambda_.1} parent=1 // pred_region
      _
    $region17: #{_lambda_.1} parent=1 // pred_fallthru
      _
    // Predicated region
    $region18: #{_lambda_.1} parent=1 // pred_check
      _
    $region19: #{_lambda_.1} parent=1 // pred_check_branch
      %24 = sbr.rel (0) target = $region21
    $region20: #{_lambda_.1} parent=1 // pred_region
      _
    $region21: #{_lambda_.1} parent=1 // pred_fallthru
      _
    // Predicated region
    $region22: #{_lambda_.1} parent=1 // pred_check
      _
    $region23: #{_lambda_.1} parent=1 // pred_check_branch
      %26 = sbr.rel (0) target = $region25
    $region24: #{_lambda_.1} parent=1 // pred_region
      _
    $region25: #{_lambda_.1} parent=1 // pred_fallthru
      _
    // Predicated region
    $region26: #{_lambda_.1} parent=1 // pred_check
      _
    $region27: #{_lambda_.1} parent=1 // pred_check_branch
      %28 = sbr.rel (0) target = $region29
    $region28: #{_lambda_.1} parent=1 // pred_region
      _
    $region29: #{_lambda_.1} parent=1 // pred_fallthru
      _
    // Predicated region
    $region30: #{_lambda_.1} parent=1 // pred_check
      _
    $region31: #{_lambda_.1} parent=1 // pred_check_branch
      %30 = sbr.rel (0) target = $region33
    $region32: #{_lambda_.1} parent=1 // pred_region
      _
    $region33: #{_lambda_.1} parent=1 // pred_fallthru
      _
    // Predicated region
    $region34: #{_lambda_.1} parent=1 // pred_check
      _
    $region35: #{_lambda_.1} parent=1 // pred_check_branch
      %32 = sbr.rel (0) target = $region37
    $region36: #{_lambda_.1} parent=1 // pred_region
      _
    $region37: #{_lambda_.1} parent=1 // pred_fallthru
      _
    %v34 = vld [vmem:[%s0] sm:$0xff]
    %v35 = vld [vmem:[%s0 + $0x8] sm:$0xff]
    %v36 = vld [vmem:[%s0 + $0x10] sm:$0xff]
    %v37 = vld [vmem:[%s0 + $0x18] sm:$0xff]
    %v38 = vld [vmem:[%s1] sm:$0xf]
    %v39 = vld [vmem:[%s1 + $0x4] sm:$0xf]
    %v40 = vld [vmem:[%s1 + $0x8] sm:$0xf]
    %v41 = vld [vmem:[%s1 + $0xc] sm:$0xf]
    %v42 = vld [vmem:[%s1 + $0x10] sm:$0xf]
    %v43 = vld [vmem:[%s1 + $0x14] sm:$0xf]
    %v44 = vld [vmem:[%s1 + $0x18] sm:$0xf]
    %v45 = vld [vmem:[%s1 + $0x1c] sm:$0xf]
    %v46 = vunpack.c.l.bf16 %v38
    %v47 = vunpack.c.l.bf16 %v39
    %v48 = vunpack.c.l.bf16 %v40
    %v49 = vunpack.c.l.bf16 %v41
    %v50 = vunpack.c.l.bf16 %v42
    %v51 = vunpack.c.l.bf16 %v43
    %v52 = vunpack.c.l.bf16 %v44
    %v53 = vunpack.c.l.bf16 %v45
    %v54 = vld [vmem:[%s2] sm:$0x1]
    %v55 = vmul.f32 %v34, %v34
    %v56 = vmul.f32 %v35, %v35
    %v57 = vmul.f32 %v36, %v36
    %v58 = vmul.f32 %v37, %v37
    %vm59 = vcmask 261120
    %v60 = vsel %vm59, %v55, 0.0
    %61 = vadd.xlane.f32.xlu0 %v60
    %v62 = vpop.xlane.xlu0 %61
    %v63 = vsel %vm59, %v56, 0.0
    %64 = vadd.xlane.f32.xlu0 %v63
    %v65 = vpop.xlane.xlu0 %64
    %v66 = vsel %vm59, %v57, 0.0
    %67 = vadd.xlane.f32.xlu0 %v66
    %v68 = vpop.xlane.xlu0 %67
    %v69 = vsel %vm59, %v58, 0.0
    %70 = vadd.xlane.f32.xlu0 %v69
    %v71 = vpop.xlane.xlu0 %70
    %v72 = vrcp.pop 32.0
    %v73 = vmul.f32 %v62, %v72
    %v74 = vmul.f32 %v65, %v72
    %v75 = vmul.f32 %v68, %v72
    %v76 = vmul.f32 %v71, %v72
    %v77 = vadd.f32 %v73, 1e-06
    %v78 = vadd.f32 %v74, 1e-06
    %v79 = vadd.f32 %v75, 1e-06
    %v80 = vadd.f32 %v76, 1e-06
    %v81 = vrsqrt.pop %v77
    %v82 = vrsqrt.pop %v78
    %v83 = vrsqrt.pop %v79
    %v84 = vrsqrt.pop %v80
    %v85 = vmul.f32 %v34, %v81
    %v86 = vmul.f32 %v35, %v82
    %v87 = vmul.f32 %v36, %v83
    %v88 = vmul.f32 %v37, %v84
    %v90 = vlaneseq
    %v91 = vshrl.u32 %v90, 7
    %v92 = vsub.s32 0, %v91
    %v93 = vrot.slane %v54, %v92
    %v95 = vmul.f32 %v93, %v85
    %v96 = vmul.f32 %v93, %v86
    %v97 = vmul.f32 %v93, %v87
    %v98 = vmul.f32 %v93, %v88
    %v99 = vpack.c.bf16 %v96, %v95
    %v100 = vpack.c.bf16 %v98, %v97
    %v101 = vld [vmem:[%s3] sm:$0xf]
    %v102 = vld [vmem:[%s3 + $0x4] sm:$0xf]
    %v103 = vld [vmem:[%s3 + $0x8] sm:$0xf]
    %v104 = vld [vmem:[%s3 + $0xc] sm:$0xf]
    %v109 = vunpack.c.l.b16 %v101
    %v110 = vunpack.c.l.b16 %v102
    %v111 = vunpack.c.l.b16 %v103
    %v112 = vunpack.c.l.b16 %v104
    %v113 = vpack.c.b16 %v110, %v109
    %v114 = vpack.c.b16 %v112, %v111
    %v118 = vsel %vm59, %v99, 0
    %v121 = vsel %vm59, %v100, 0
    %123 = vmatprep.subr.bf16.mxu0 0
    %124 = vmatpush1.bf16.msra.mxu0 %v113
    %125 = vmatprep.subr.bf16.mxu0 0
    %126 = vmatpush1.bf16.msra.mxu0 %v114
    %127 = vmatprep.subr.bf16.mxu0 0
    %128 = vmatpush1.bf16.msra.mxu0 0
    %129 = vmatprep.subr.bf16.mxu0 0
    %130 = vmatpush1.bf16.msra.mxu0 0
    %131 = vmatprep.subr.bf16.mxu0 0
    %132 = vmatpush1.bf16.msra.mxu0 0
    %133 = vmatprep.subr.bf16.mxu0 0
    %134 = vmatpush1.bf16.msra.mxu0 0
    %135 = vmatprep.subr.bf16.mxu0 0
    %136 = vmatpush1.bf16.msra.mxu0 0
    %137 = vmatprep.subr.bf16.mxu0 0
    %138 = vmatpush1.bf16.msra.mxu0 0
    %139 = vmatprep.subr.bf16.mxu0 0
    %140 = vmatpush1.bf16.msra.mxu0 0
    %141 = vmatprep.subr.bf16.mxu0 0
    %142 = vmatpush1.bf16.msra.mxu0 0
    %143 = vmatprep.subr.bf16.mxu0 0
    %144 = vmatpush1.bf16.msra.mxu0 0
    %145 = vmatprep.subr.bf16.mxu0 0
    %146 = vmatpush1.bf16.msra.mxu0 0
    %147 = vmatprep.subr.bf16.mxu0 0
    %148 = vmatpush1.bf16.msra.mxu0 0
    %149 = vmatprep.subr.bf16.mxu0 0
    %150 = vmatpush1.bf16.msra.mxu0 0
    %151 = vmatprep.subr.bf16.mxu0 0
    %152 = vmatpush1.bf16.msra.mxu0 0
    %153 = vmatprep.subr.bf16.mxu0 0
    %154 = vmatpush1.bf16.msra.mxu0 0
    %155 = vmatprep.mubr.bf16.mxu0 0
    %156 = vmatmul.mubr.bf16.gmra.mrb[0].mxu0 %v118
    %v157 = vpop.f32.mrb[0].mxu0
    %v158 = vadd.f32 0.0, %v157
    %v159 = vpop.f32.mrb[0].mxu0
    %v160 = vpop.f32.mrb[0].mxu0
    %v161 = vadd.f32 0.0, %v160
    %v162 = vpop.f32.mrb[0].mxu0
    %163 = vmatprep.mubr.bf16.mxu0 0
    %164 = vmatmul.mubr.bf16.gmra.mrb[0].mxu0 %v121
    %v165 = vpop.f32.mrb[0].mxu0
    %v166 = vadd.f32 0.0, %v165
    %v167 = vpop.f32.mrb[0].mxu0
    %v168 = vpop.f32.mrb[0].mxu0
    %v169 = vadd.f32 0.0, %v168
    %v170 = vpop.f32.mrb[0].mxu0
    %171 = vdwg.mxu0
    %v172 = vmul.f32 %v158, 0.5
    %v173 = vmul.f32 %v161, 0.5
    %v174 = vmul.f32 %v166, 0.5
    %v175 = vmul.f32 %v169, 0.5
    %v176 = vpack.c.bf16 %v173, %v172
    %v177 = vpack.c.bf16 %v161, %v158
    %179 = vrot.lane.b32.xlu0 %v177, 96
    %v180 = vpop.permute.xlu0 %179
    %vm181 = vcmask 64512
    %v183 = vsel %vm181, %v176, 0
    %v186 = vsel %vm181, %v180, 0
    %188 = vmatprep.subr.bf16.mxu0 0
    %189 = vmatpush1.bf16.xpose.msra.mxu0 %v186
    %190 = vmatprep.subr.bf16.mxu0 0
    %191 = vmatpush1.bf16.xpose.msra.mxu0 0
    %192 = vmatprep.subr.bf16.mxu0 0
    %193 = vmatpush1.bf16.xpose.msra.mxu0 0
    %194 = vmatprep.subr.bf16.mxu0 0
    %195 = vmatpush1.bf16.xpose.msra.mxu0 0
    %196 = vmatprep.subr.bf16.mxu0 0
    %197 = vmatpush1.bf16.xpose.msra.mxu0 0
    %198 = vmatprep.subr.bf16.mxu0 0
    %199 = vmatpush1.bf16.xpose.msra.mxu0 0
    %200 = vmatprep.subr.bf16.mxu0 0
    %201 = vmatpush1.bf16.xpose.msra.mxu0 0
    %202 = vmatprep.subr.bf16.mxu0 0
    %203 = vmatpush1.bf16.xpose.msra.mxu0 0
    %204 = vmatprep.subr.bf16.mxu0 0
    %205 = vmatpush1.bf16.xpose.msra.mxu0 0
    %206 = vmatprep.subr.bf16.mxu0 0
    %207 = vmatpush1.bf16.xpose.msra.mxu0 0
    %208 = vmatprep.subr.bf16.mxu0 0
    %209 = vmatpush1.bf16.xpose.msra.mxu0 0
    %210 = vmatprep.subr.bf16.mxu0 0
    %211 = vmatpush1.bf16.xpose.msra.mxu0 0
    %212 = vmatprep.subr.bf16.mxu0 0
    %213 = vmatpush1.bf16.xpose.msra.mxu0 0
    %214 = vmatprep.subr.bf16.mxu0 0
    %215 = vmatpush1.bf16.xpose.msra.mxu0 0
    %216 = vmatprep.subr.bf16.mxu0 0
    %217 = vmatpush1.bf16.xpose.msra.mxu0 0
    %218 = vmatprep.subr.bf16.mxu0 0
    %219 = vmatpush1.bf16.xpose.msra.mxu0 0
    %220 = vmatprep.mubr.bf16.mxu0 0
    %221 = vmatmul.mubr.bf16.gmra.mrb[0].mxu0 %v183
    %v222 = vpop.f32.mrb[0].mxu0
    %v223 = vadd.f32 %v46, %v222
    %v224 = vpop.f32.mrb[0].mxu0
    %v225 = vpop.f32.mrb[0].mxu0
    %v226 = vadd.f32 %v47, %v225
    %v227 = vpop.f32.mrb[0].mxu0
    %228 = vdwg.mxu0
    %vm229 = vcmask 130048
    %v230 = vsel %vm229, %v223, -inf
    %231 = vmax.xlane.f32.xlu0 %v230
    %v232 = vpop.xlane.xlu0 %231
    %v233 = vsel %vm229, %v226, -inf
    %234 = vmax.xlane.f32.xlu0 %v233
    %v235 = vpop.xlane.xlu0 %234
    %v236 = vsub.f32 %v223, %v232
    %v237 = vsub.f32 %v226, %v235
    %v238 = vmul.f32 %v236, 1.442695
    %v239 = vpow.pop %v238
    %v240 = vmul.f32 %v237, 1.442695
    %v241 = vpow.pop %v240
    %v242 = vsel %vm229, %v239, 0.0
    %243 = vadd.xlane.f32.xlu0 %v242
    %v244 = vpop.xlane.xlu0 %243
    %v245 = vsel %vm229, %v241, 0.0
    %246 = vadd.xlane.f32.xlu0 %v245
    %v247 = vpop.xlane.xlu0 %246
    %v248 = vrcp.pop %v244
    %v249 = vrcp.pop %v247
    %v250 = vmul.f32 %v239, %v248
    %v251 = vmul.f32 %v241, %v249
    %v252 = vpack.c.bf16 %v251, %v250
    %253 = vrot.lane.b32.xlu0 %v177, 64
    %v254 = vpop.permute.xlu0 %253
    %v257 = vsel %vm229, %v252, 0
    %259 = vmatprep.subr.bf16.mxu0 0
    %260 = vmatpush1.bf16.msra.mxu0 %v254
    %261 = vmatprep.subr.bf16.mxu0 0
    %262 = vmatpush1.bf16.msra.mxu0 0
    %263 = vmatprep.subr.bf16.mxu0 0
    %264 = vmatpush1.bf16.msra.mxu0 0
    %265 = vmatprep.subr.bf16.mxu0 0
    %266 = vmatpush1.bf16.msra.mxu0 0
    %267 = vmatprep.subr.bf16.mxu0 0
    %268 = vmatpush1.bf16.msra.mxu0 0
    %269 = vmatprep.subr.bf16.mxu0 0
    %270 = vmatpush1.bf16.msra.mxu0 0
    %271 = vmatprep.subr.bf16.mxu0 0
    %272 = vmatpush1.bf16.msra.mxu0 0
    %273 = vmatprep.subr.bf16.mxu0 0
    %274 = vmatpush1.bf16.msra.mxu0 0
    %275 = vmatprep.subr.bf16.mxu0 0
    %276 = vmatpush1.bf16.msra.mxu0 0
    %277 = vmatprep.subr.bf16.mxu0 0
    %278 = vmatpush1.bf16.msra.mxu0 0
    %279 = vmatprep.subr.bf16.mxu0 0
    %280 = vmatpush1.bf16.msra.mxu0 0
    %281 = vmatprep.subr.bf16.mxu0 0
    %282 = vmatpush1.bf16.msra.mxu0 0
    %283 = vmatprep.subr.bf16.mxu0 0
    %284 = vmatpush1.bf16.msra.mxu0 0
    %285 = vmatprep.subr.bf16.mxu0 0
    %286 = vmatpush1.bf16.msra.mxu0 0
    %287 = vmatprep.subr.bf16.mxu0 0
    %288 = vmatpush1.bf16.msra.mxu0 0
    %289 = vmatprep.subr.bf16.mxu0 0
    %290 = vmatpush1.bf16.msra.mxu0 0
    %291 = vmatprep.mubr.bf16.mxu0 0
    %292 = vmatmul.mubr.bf16.gmra.mrb[0].mxu0 %v257
    %v293 = vpop.f32.mrb[0].mxu0
    %v294 = vadd.f32 0.0, %v293
    %v295 = vpop.f32.mrb[0].mxu0
    %v296 = vpop.f32.mrb[0].mxu0
    %v297 = vadd.f32 0.0, %v296
    %v298 = vpop.f32.mrb[0].mxu0
    %299 = vdwg.mxu0
    %301 = vrot.lane.b32.xlu0 %v176, 120
    %v302 = vpop.permute.xlu0 %301
    %303 = vrot.lane.b32.xlu0 %v177, 88
    %v304 = vpop.permute.xlu0 %303
    %v306 = vsel %vm181, %v302, 0
    %v309 = vsel %vm181, %v304, 0
    %311 = vmatprep.subr.bf16.mxu0 0
    %312 = vmatpush1.bf16.xpose.msra.mxu0 %v309
    %313 = vmatprep.subr.bf16.mxu0 0
    %314 = vmatpush1.bf16.xpose.msra.mxu0 0
    %315 = vmatprep.subr.bf16.mxu0 0
    %316 = vmatpush1.bf16.xpose.msra.mxu0 0
    %317 = vmatprep.subr.bf16.mxu0 0
    %318 = vmatpush1.bf16.xpose.msra.mxu0 0
    %319 = vmatprep.subr.bf16.mxu0 0
    %320 = vmatpush1.bf16.xpose.msra.mxu0 0
    %321 = vmatprep.subr.bf16.mxu0 0
    %322 = vmatpush1.bf16.xpose.msra.mxu0 0
    %323 = vmatprep.subr.bf16.mxu0 0
    %324 = vmatpush1.bf16.xpose.msra.mxu0 0
    %325 = vmatprep.subr.bf16.mxu0 0
    %326 = vmatpush1.bf16.xpose.msra.mxu0 0
    %327 = vmatprep.subr.bf16.mxu0 0
    %328 = vmatpush1.bf16.xpose.msra.mxu0 0
    %329 = vmatprep.subr.bf16.mxu0 0
    %330 = vmatpush1.bf16.xpose.msra.mxu0 0
    %331 = vmatprep.subr.bf16.mxu0 0
    %332 = vmatpush1.bf16.xpose.msra.mxu0 0
    %333 = vmatprep.subr.bf16.mxu0 0
    %334 = vmatpush1.bf16.xpose.msra.mxu0 0
    %335 = vmatprep.subr.bf16.mxu0 0
    %336 = vmatpush1.bf16.xpose.msra.mxu0 0
    %337 = vmatprep.subr.bf16.mxu0 0
    %338 = vmatpush1.bf16.xpose.msra.mxu0 0
    %339 = vmatprep.subr.bf16.mxu0 0
    %340 = vmatpush1.bf16.xpose.msra.mxu0 0
    %341 = vmatprep.subr.bf16.mxu0 0
    %342 = vmatpush1.bf16.xpose.msra.mxu0 0
    %343 = vmatprep.mubr.bf16.mxu0 0
    %344 = vmatmul.mubr.bf16.gmra.mrb[0].mxu0 %v306
    %v345 = vpop.f32.mrb[0].mxu0
    %v346 = vadd.f32 %v48, %v345
    %v347 = vpop.f32.mrb[0].mxu0
    %v348 = vpop.f32.mrb[0].mxu0
    %v349 = vadd.f32 %v49, %v348
    %v350 = vpop.f32.mrb[0].mxu0
    %351 = vdwg.mxu0
    %v352 = vsel %vm229, %v346, -inf
    %353 = vmax.xlane.f32.xlu0 %v352
    %v354 = vpop.xlane.xlu0 %353
    %v355 = vsel %vm229, %v349, -inf
    %356 = vmax.xlane.f32.xlu0 %v355
    %v357 = vpop.xlane.xlu0 %356
    %v358 = vsub.f32 %v346, %v354
    %v359 = vsub.f32 %v349, %v357
    %v360 = vmul.f32 %v358, 1.442695
    %v361 = vpow.pop %v360
    %v362 = vmul.f32 %v359, 1.442695
    %v363 = vpow.pop %v362
    %v364 = vsel %vm229, %v361, 0.0
    %365 = vadd.xlane.f32.xlu0 %v364
    %v366 = vpop.xlane.xlu0 %365
    %v367 = vsel %vm229, %v363, 0.0
    %368 = vadd.xlane.f32.xlu0 %v367
    %v369 = vpop.xlane.xlu0 %368
    %v370 = vrcp.pop %v366
    %v371 = vrcp.pop %v369
    %v372 = vmul.f32 %v361, %v370
    %v373 = vmul.f32 %v363, %v371
    %v374 = vpack.c.bf16 %v373, %v372
    %375 = vrot.lane.b32.xlu0 %v177, 56
    %v376 = vpop.permute.xlu0 %375
    %v379 = vsel %vm229, %v374, 0
    %381 = vmatprep.subr.bf16.mxu0 0
    %382 = vmatpush1.bf16.msra.mxu0 %v376
    %383 = vmatprep.subr.bf16.mxu0 0
    %384 = vmatpush1.bf16.msra.mxu0 0
    %385 = vmatprep.subr.bf16.mxu0 0
    %386 = vmatpush1.bf16.msra.mxu0 0
    %387 = vmatprep.subr.bf16.mxu0 0
    %388 = vmatpush1.bf16.msra.mxu0 0
    %389 = vmatprep.subr.bf16.mxu0 0
    %390 = vmatpush1.bf16.msra.mxu0 0
    %391 = vmatprep.subr.bf16.mxu0 0
    %392 = vmatpush1.bf16.msra.mxu0 0
    %393 = vmatprep.subr.bf16.mxu0 0
    %394 = vmatpush1.bf16.msra.mxu0 0
    %395 = vmatprep.subr.bf16.mxu0 0
    %396 = vmatpush1.bf16.msra.mxu0 0
    %397 = vmatprep.subr.bf16.mxu0 0
    %398 = vmatpush1.bf16.msra.mxu0 0
    %399 = vmatprep.subr.bf16.mxu0 0
    %400 = vmatpush1.bf16.msra.mxu0 0
    %401 = vmatprep.subr.bf16.mxu0 0
    %402 = vmatpush1.bf16.msra.mxu0 0
    %403 = vmatprep.subr.bf16.mxu0 0
    %404 = vmatpush1.bf16.msra.mxu0 0
    %405 = vmatprep.subr.bf16.mxu0 0
    %406 = vmatpush1.bf16.msra.mxu0 0
    %407 = vmatprep.subr.bf16.mxu0 0
    %408 = vmatpush1.bf16.msra.mxu0 0
    %409 = vmatprep.subr.bf16.mxu0 0
    %410 = vmatpush1.bf16.msra.mxu0 0
    %411 = vmatprep.subr.bf16.mxu0 0
    %412 = vmatpush1.bf16.msra.mxu0 0
    %413 = vmatprep.mubr.bf16.mxu0 0
    %414 = vmatmul.mubr.bf16.gmra.mrb[0].mxu0 %v379
    %v415 = vpop.f32.mrb[0].mxu0
    %v416 = vadd.f32 0.0, %v415
    %v417 = vpop.f32.mrb[0].mxu0
    %v418 = vpop.f32.mrb[0].mxu0
    %v419 = vadd.f32 0.0, %v418
    %v420 = vpop.f32.mrb[0].mxu0
    %421 = vdwg.mxu0
    %422 = vrot.lane.b32.xlu0 %v176, 112
    %v423 = vpop.permute.xlu0 %422
    %424 = vrot.lane.b32.xlu0 %v177, 80
    %v425 = vpop.permute.xlu0 %424
    %v427 = vsel %vm181, %v423, 0
    %v430 = vsel %vm181, %v425, 0
    %432 = vmatprep.subr.bf16.mxu0 0
    %433 = vmatpush1.bf16.xpose.msra.mxu0 %v430
    %434 = vmatprep.subr.bf16.mxu0 0
    %435 = vmatpush1.bf16.xpose.msra.mxu0 0
    %436 = vmatprep.subr.bf16.mxu0 0
    %437 = vmatpush1.bf16.xpose.msra.mxu0 0
    %438 = vmatprep.subr.bf16.mxu0 0
    %439 = vmatpush1.bf16.xpose.msra.mxu0 0
    %440 = vmatprep.subr.bf16.mxu0 0
    %441 = vmatpush1.bf16.xpose.msra.mxu0 0
    %442 = vmatprep.subr.bf16.mxu0 0
    %443 = vmatpush1.bf16.xpose.msra.mxu0 0
    %444 = vmatprep.subr.bf16.mxu0 0
    %445 = vmatpush1.bf16.xpose.msra.mxu0 0
    %446 = vmatprep.subr.bf16.mxu0 0
    %447 = vmatpush1.bf16.xpose.msra.mxu0 0
    %448 = vmatprep.subr.bf16.mxu0 0
    %449 = vmatpush1.bf16.xpose.msra.mxu0 0
    %450 = vmatprep.subr.bf16.mxu0 0
    %451 = vmatpush1.bf16.xpose.msra.mxu0 0
    %452 = vmatprep.subr.bf16.mxu0 0
    %453 = vmatpush1.bf16.xpose.msra.mxu0 0
    %454 = vmatprep.subr.bf16.mxu0 0
    %455 = vmatpush1.bf16.xpose.msra.mxu0 0
    %456 = vmatprep.subr.bf16.mxu0 0
    %457 = vmatpush1.bf16.xpose.msra.mxu0 0
    %458 = vmatprep.subr.bf16.mxu0 0
    %459 = vmatpush1.bf16.xpose.msra.mxu0 0
    %460 = vmatprep.subr.bf16.mxu0 0
    %461 = vmatpush1.bf16.xpose.msra.mxu0 0
    %462 = vmatprep.subr.bf16.mxu0 0
    %463 = vmatpush1.bf16.xpose.msra.mxu0 0
    %464 = vmatprep.mubr.bf16.mxu0 0
    %465 = vmatmul.mubr.bf16.gmra.mrb[0].mxu0 %v427
    %v466 = vpop.f32.mrb[0].mxu0
    %v467 = vadd.f32 %v50, %v466
    %v468 = vpop.f32.mrb[0].mxu0
    %v469 = vpop.f32.mrb[0].mxu0
    %v470 = vadd.f32 %v51, %v469
    %v471 = vpop.f32.mrb[0].mxu0
    %472 = vdwg.mxu0
    %v473 = vsel %vm229, %v467, -inf
    %474 = vmax.xlane.f32.xlu0 %v473
    %v475 = vpop.xlane.xlu0 %474
    %v476 = vsel %vm229, %v470, -inf
    %477 = vmax.xlane.f32.xlu0 %v476
    %v478 = vpop.xlane.xlu0 %477
    %v479 = vsub.f32 %v467, %v475
    %v480 = vsub.f32 %v470, %v478
    %v481 = vmul.f32 %v479, 1.442695
    %v482 = vpow.pop %v481
    %v483 = vmul.f32 %v480, 1.442695
    %v484 = vpow.pop %v483
    %v485 = vsel %vm229, %v482, 0.0
    %486 = vadd.xlane.f32.xlu0 %v485
    %v487 = vpop.xlane.xlu0 %486
    %v488 = vsel %vm229, %v484, 0.0
    %489 = vadd.xlane.f32.xlu0 %v488
    %v490 = vpop.xlane.xlu0 %489
    %v491 = vrcp.pop %v487
    %v492 = vrcp.pop %v490
    %v493 = vmul.f32 %v482, %v491
    %v494 = vmul.f32 %v484, %v492
    %v495 = vpack.c.bf16 %v494, %v493
    %496 = vrot.lane.b32.xlu0 %v177, 48
    %v497 = vpop.permute.xlu0 %496
    %v500 = vsel %vm229, %v495, 0
    %502 = vmatprep.subr.bf16.mxu0 0
    %503 = vmatpush1.bf16.msra.mxu0 %v497
    %504 = vmatprep.subr.bf16.mxu0 0
    %505 = vmatpush1.bf16.msra.mxu0 0
    %506 = vmatprep.subr.bf16.mxu0 0
    %507 = vmatpush1.bf16.msra.mxu0 0
    %508 = vmatprep.subr.bf16.mxu0 0
    %509 = vmatpush1.bf16.msra.mxu0 0
    %510 = vmatprep.subr.bf16.mxu0 0
    %511 = vmatpush1.bf16.msra.mxu0 0
    %512 = vmatprep.subr.bf16.mxu0 0
    %513 = vmatpush1.bf16.msra.mxu0 0
    %514 = vmatprep.subr.bf16.mxu0 0
    %515 = vmatpush1.bf16.msra.mxu0 0
    %516 = vmatprep.subr.bf16.mxu0 0
    %517 = vmatpush1.bf16.msra.mxu0 0
    %518 = vmatprep.subr.bf16.mxu0 0
    %519 = vmatpush1.bf16.msra.mxu0 0
    %520 = vmatprep.subr.bf16.mxu0 0
    %521 = vmatpush1.bf16.msra.mxu0 0
    %522 = vmatprep.subr.bf16.mxu0 0
    %523 = vmatpush1.bf16.msra.mxu0 0
    %524 = vmatprep.subr.bf16.mxu0 0
    %525 = vmatpush1.bf16.msra.mxu0 0
    %526 = vmatprep.subr.bf16.mxu0 0
    %527 = vmatpush1.bf16.msra.mxu0 0
    %528 = vmatprep.subr.bf16.mxu0 0
    %529 = vmatpush1.bf16.msra.mxu0 0
    %530 = vmatprep.subr.bf16.mxu0 0
    %531 = vmatpush1.bf16.msra.mxu0 0
    %532 = vmatprep.subr.bf16.mxu0 0
    %533 = vmatpush1.bf16.msra.mxu0 0
    %534 = vmatprep.mubr.bf16.mxu0 0
    %535 = vmatmul.mubr.bf16.gmra.mrb[0].mxu0 %v500
    %v536 = vpop.f32.mrb[0].mxu0
    %v537 = vadd.f32 0.0, %v536
    %v538 = vpop.f32.mrb[0].mxu0
    %v539 = vpop.f32.mrb[0].mxu0
    %v540 = vadd.f32 0.0, %v539
    %v541 = vpop.f32.mrb[0].mxu0
    %542 = vdwg.mxu0
    %543 = vrot.lane.b32.xlu0 %v176, 104
    %v544 = vpop.permute.xlu0 %543
    %545 = vrot.lane.b32.xlu0 %v177, 72
    %v546 = vpop.permute.xlu0 %545
    %v548 = vsel %vm181, %v544, 0
    %v551 = vsel %vm181, %v546, 0
    %553 = vmatprep.subr.bf16.mxu0 0
    %554 = vmatpush1.bf16.xpose.msra.mxu0 %v551
    %555 = vmatprep.subr.bf16.mxu0 0
    %556 = vmatpush1.bf16.xpose.msra.mxu0 0
    %557 = vmatprep.subr.bf16.mxu0 0
    %558 = vmatpush1.bf16.xpose.msra.mxu0 0
    %559 = vmatprep.subr.bf16.mxu0 0
    %560 = vmatpush1.bf16.xpose.msra.mxu0 0
    %561 = vmatprep.subr.bf16.mxu0 0
    %562 = vmatpush1.bf16.xpose.msra.mxu0 0
    %563 = vmatprep.subr.bf16.mxu0 0
    %564 = vmatpush1.bf16.xpose.msra.mxu0 0
    %565 = vmatprep.subr.bf16.mxu0 0
    %566 = vmatpush1.bf16.xpose.msra.mxu0 0
    %567 = vmatprep.subr.bf16.mxu0 0
    %568 = vmatpush1.bf16.xpose.msra.mxu0 0
    %569 = vmatprep.subr.bf16.mxu0 0
    %570 = vmatpush1.bf16.xpose.msra.mxu0 0
    %571 = vmatprep.subr.bf16.mxu0 0
    %572 = vmatpush1.bf16.xpose.msra.mxu0 0
    %573 = vmatprep.subr.bf16.mxu0 0
    %574 = vmatpush1.bf16.xpose.msra.mxu0 0
    %575 = vmatprep.subr.bf16.mxu0 0
    %576 = vmatpush1.bf16.xpose.msra.mxu0 0
    %577 = vmatprep.subr.bf16.mxu0 0
    %578 = vmatpush1.bf16.xpose.msra.mxu0 0
    %579 = vmatprep.subr.bf16.mxu0 0
    %580 = vmatpush1.bf16.xpose.msra.mxu0 0
    %581 = vmatprep.subr.bf16.mxu0 0
    %582 = vmatpush1.bf16.xpose.msra.mxu0 0
    %583 = vmatprep.subr.bf16.mxu0 0
    %584 = vmatpush1.bf16.xpose.msra.mxu0 0
    %585 = vmatprep.mubr.bf16.mxu0 0
    %586 = vmatmul.mubr.bf16.gmra.mrb[0].mxu0 %v548
    %v587 = vpop.f32.mrb[0].mxu0
    %v588 = vadd.f32 %v52, %v587
    %v589 = vpop.f32.mrb[0].mxu0
    %v590 = vpop.f32.mrb[0].mxu0
    %v591 = vadd.f32 %v53, %v590
    %v592 = vpop.f32.mrb[0].mxu0
    %593 = vdwg.mxu0
    %v594 = vsel %vm229, %v588, -inf
    %595 = vmax.xlane.f32.xlu0 %v594
    %v596 = vpop.xlane.xlu0 %595
    %v597 = vsel %vm229, %v591, -inf
    %598 = vmax.xlane.f32.xlu0 %v597
    %v599 = vpop.xlane.xlu0 %598
    %v600 = vsub.f32 %v588, %v596
    %v601 = vsub.f32 %v591, %v599
    %v602 = vmul.f32 %v600, 1.442695
    %v603 = vpow.pop %v602
    %v604 = vmul.f32 %v601, 1.442695
    %v605 = vpow.pop %v604
    %v606 = vsel %vm229, %v603, 0.0
    %607 = vadd.xlane.f32.xlu0 %v606
    %v608 = vpop.xlane.xlu0 %607
    %v609 = vsel %vm229, %v605, 0.0
    %610 = vadd.xlane.f32.xlu0 %v609
    %v611 = vpop.xlane.xlu0 %610
    %v612 = vrcp.pop %v608
    %v613 = vrcp.pop %v611
    %v614 = vmul.f32 %v603, %v612
    %v615 = vmul.f32 %v605, %v613
    %v616 = vpack.c.bf16 %v615, %v614
    %617 = vrot.lane.b32.xlu0 %v177, 40
    %v618 = vpop.permute.xlu0 %617
    %v621 = vsel %vm229, %v616, 0
    %623 = vmatprep.subr.bf16.mxu0 0
    %624 = vmatpush1.bf16.msra.mxu0 %v618
    %625 = vmatprep.subr.bf16.mxu0 0
    %626 = vmatpush1.bf16.msra.mxu0 0
    %627 = vmatprep.subr.bf16.mxu0 0
    %628 = vmatpush1.bf16.msra.mxu0 0
    %629 = vmatprep.subr.bf16.mxu0 0
    %630 = vmatpush1.bf16.msra.mxu0 0
    %631 = vmatprep.subr.bf16.mxu0 0
    %632 = vmatpush1.bf16.msra.mxu0 0
    %633 = vmatprep.subr.bf16.mxu0 0
    %634 = vmatpush1.bf16.msra.mxu0 0
    %635 = vmatprep.subr.bf16.mxu0 0
    %636 = vmatpush1.bf16.msra.mxu0 0
    %637 = vmatprep.subr.bf16.mxu0 0
    %638 = vmatpush1.bf16.msra.mxu0 0
    %639 = vmatprep.subr.bf16.mxu0 0
    %640 = vmatpush1.bf16.msra.mxu0 0
    %641 = vmatprep.subr.bf16.mxu0 0
    %642 = vmatpush1.bf16.msra.mxu0 0
    %643 = vmatprep.subr.bf16.mxu0 0
    %644 = vmatpush1.bf16.msra.mxu0 0
    %645 = vmatprep.subr.bf16.mxu0 0
    %646 = vmatpush1.bf16.msra.mxu0 0
    %647 = vmatprep.subr.bf16.mxu0 0
    %648 = vmatpush1.bf16.msra.mxu0 0
    %649 = vmatprep.subr.bf16.mxu0 0
    %650 = vmatpush1.bf16.msra.mxu0 0
    %651 = vmatprep.subr.bf16.mxu0 0
    %652 = vmatpush1.bf16.msra.mxu0 0
    %653 = vmatprep.subr.bf16.mxu0 0
    %654 = vmatpush1.bf16.msra.mxu0 0
    %655 = vmatprep.mubr.bf16.mxu0 0
    %656 = vmatmul.mubr.bf16.gmra.mrb[0].mxu0 %v621
    %v657 = vpop.f32.mrb[0].mxu0
    %v658 = vadd.f32 0.0, %v657
    %v659 = vpop.f32.mrb[0].mxu0
    %v660 = vpop.f32.mrb[0].mxu0
    %v661 = vadd.f32 0.0, %v660
    %v662 = vpop.f32.mrb[0].mxu0
    %663 = vdwg.mxu0
    %666 = vrot.lane.b32.xlu0 %v416, 8
    %v667 = vpop.permute.xlu0 %666
    %668 = vrot.lane.b32.xlu0 %v419, 8
    %v669 = vpop.permute.xlu0 %668
    %674 = vrot.lane.b32.xlu0 %v537, 16
    %v675 = vpop.permute.xlu0 %674
    %676 = vrot.lane.b32.xlu0 %v540, 16
    %v677 = vpop.permute.xlu0 %676
    %682 = vrot.lane.b32.xlu0 %v658, 24
    %v683 = vpop.permute.xlu0 %682
    %684 = vrot.lane.b32.xlu0 %v661, 24
    %v685 = vpop.permute.xlu0 %684
    %v688 = vsel %vm181, %v294, %v667
    %v689 = vsel %vm181, %v297, %v669
    %v690 = vsel %vm229, %v688, %v675
    %v691 = vsel %vm229, %v689, %v677
    %vm692 = vcmask 195584
    %v693 = vsel %vm692, %v690, %v683
    %v694 = vsel %vm692, %v691, %v685
    %v695 = vpack.c.bf16 %v175, %v174
    %v696 = vpack.c.bf16 %v169, %v166
    %698 = vrot.lane.b32.xlu0 %v696, 96
    %v699 = vpop.permute.xlu0 %698
    %v701 = vsel %vm181, %v695, 0
    %v704 = vsel %vm181, %v699, 0
    %706 = vmatprep.subr.bf16.mxu0 0
    %707 = vmatpush1.bf16.xpose.msra.mxu0 %v704
    %708 = vmatprep.subr.bf16.mxu0 0
    %709 = vmatpush1.bf16.xpose.msra.mxu0 0
    %710 = vmatprep.subr.bf16.mxu0 0
    %711 = vmatpush1.bf16.xpose.msra.mxu0 0
    %712 = vmatprep.subr.bf16.mxu0 0
    %713 = vmatpush1.bf16.xpose.msra.mxu0 0
    %714 = vmatprep.subr.bf16.mxu0 0
    %715 = vmatpush1.bf16.xpose.msra.mxu0 0
    %716 = vmatprep.subr.bf16.mxu0 0
    %717 = vmatpush1.bf16.xpose.msra.mxu0 0
    %718 = vmatprep.subr.bf16.mxu0 0
    %719 = vmatpush1.bf16.xpose.msra.mxu0 0
    %720 = vmatprep.subr.bf16.mxu0 0
    %721 = vmatpush1.bf16.xpose.msra.mxu0 0
    %722 = vmatprep.subr.bf16.mxu0 0
    %723 = vmatpush1.bf16.xpose.msra.mxu0 0
    %724 = vmatprep.subr.bf16.mxu0 0
    %725 = vmatpush1.bf16.xpose.msra.mxu0 0
    %726 = vmatprep.subr.bf16.mxu0 0
    %727 = vmatpush1.bf16.xpose.msra.mxu0 0
    %728 = vmatprep.subr.bf16.mxu0 0
    %729 = vmatpush1.bf16.xpose.msra.mxu0 0
    %730 = vmatprep.subr.bf16.mxu0 0
    %731 = vmatpush1.bf16.xpose.msra.mxu0 0
    %732 = vmatprep.subr.bf16.mxu0 0
    %733 = vmatpush1.bf16.xpose.msra.mxu0 0
    %734 = vmatprep.subr.bf16.mxu0 0
    %735 = vmatpush1.bf16.xpose.msra.mxu0 0
    %736 = vmatprep.subr.bf16.mxu0 0
    %737 = vmatpush1.bf16.xpose.msra.mxu0 0
    %738 = vmatprep.mubr.bf16.mxu0 0
    %739 = vmatmul.mubr.bf16.gmra.mrb[0].mxu0 %v701
    %v740 = vpop.f32.mrb[0].mxu0
    %v741 = vadd.f32 %v46, %v740
    %v742 = vpop.f32.mrb[0].mxu0
    %v743 = vpop.f32.mrb[0].mxu0
    %v744 = vadd.f32 %v47, %v743
    %v745 = vpop.f32.mrb[0].mxu0
    %746 = vdwg.mxu0
    %v747 = vsel %vm229, %v741, -inf
    %748 = vmax.xlane.f32.xlu0 %v747
    %v749 = vpop.xlane.xlu0 %748
    %v750 = vsel %vm229, %v744, -inf
    %751 = vmax.xlane.f32.xlu0 %v750
    %v752 = vpop.xlane.xlu0 %751
    %v753 = vsub.f32 %v741, %v749
    %v754 = vsub.f32 %v744, %v752
    %v755 = vmul.f32 %v753, 1.442695
    %v756 = vpow.pop %v755
    %v757 = vmul.f32 %v754, 1.442695
    %v758 = vpow.pop %v757
    %v759 = vsel %vm229, %v756, 0.0
    %760 = vadd.xlane.f32.xlu0 %v759
    %v761 = vpop.xlane.xlu0 %760
    %v762 = vsel %vm229, %v758, 0.0
    %763 = vadd.xlane.f32.xlu0 %v762
    %v764 = vpop.xlane.xlu0 %763
    %v765 = vrcp.pop %v761
    %v766 = vrcp.pop %v764
    %v767 = vmul.f32 %v756, %v765
    %v768 = vmul.f32 %v758, %v766
    %v769 = vpack.c.bf16 %v768, %v767
    %770 = vrot.lane.b32.xlu0 %v696, 64
    %v771 = vpop.permute.xlu0 %770
    %v774 = vsel %vm229, %v769, 0
    %776 = vmatprep.subr.bf16.mxu0 0
    %777 = vmatpush1.bf16.msra.mxu0 %v771
    %778 = vmatprep.subr.bf16.mxu0 0
    %779 = vmatpush1.bf16.msra.mxu0 0
    %780 = vmatprep.subr.bf16.mxu0 0
    %781 = vmatpush1.bf16.msra.mxu0 0
    %782 = vmatprep.subr.bf16.mxu0 0
    %783 = vmatpush1.bf16.msra.mxu0 0
    %784 = vmatprep.subr.bf16.mxu0 0
    %785 = vmatpush1.bf16.msra.mxu0 0
    %786 = vmatprep.subr.bf16.mxu0 0
    %787 = vmatpush1.bf16.msra.mxu0 0
    %788 = vmatprep.subr.bf16.mxu0 0
    %789 = vmatpush1.bf16.msra.mxu0 0
    %790 = vmatprep.subr.bf16.mxu0 0
    %791 = vmatpush1.bf16.msra.mxu0 0
    %792 = vmatprep.subr.bf16.mxu0 0
    %793 = vmatpush1.bf16.msra.mxu0 0
    %794 = vmatprep.subr.bf16.mxu0 0
    %795 = vmatpush1.bf16.msra.mxu0 0
    %796 = vmatprep.subr.bf16.mxu0 0
    %797 = vmatpush1.bf16.msra.mxu0 0
    %798 = vmatprep.subr.bf16.mxu0 0
    %799 = vmatpush1.bf16.msra.mxu0 0
    %800 = vmatprep.subr.bf16.mxu0 0
    %801 = vmatpush1.bf16.msra.mxu0 0
    %802 = vmatprep.subr.bf16.mxu0 0
    %803 = vmatpush1.bf16.msra.mxu0 0
    %804 = vmatprep.subr.bf16.mxu0 0
    %805 = vmatpush1.bf16.msra.mxu0 0
    %806 = vmatprep.subr.bf16.mxu0 0
    %807 = vmatpush1.bf16.msra.mxu0 0
    %808 = vmatprep.mubr.bf16.mxu0 0
    %809 = vmatmul.mubr.bf16.gmra.mrb[0].mxu0 %v774
    %v810 = vpop.f32.mrb[0].mxu0
    %v811 = vadd.f32 0.0, %v810
    %v812 = vpop.f32.mrb[0].mxu0
    %v813 = vpop.f32.mrb[0].mxu0
    %v814 = vadd.f32 0.0, %v813
    %v815 = vpop.f32.mrb[0].mxu0
    %816 = vdwg.mxu0
    %818 = vrot.lane.b32.xlu0 %v695, 120
    %v819 = vpop.permute.xlu0 %818
    %820 = vrot.lane.b32.xlu0 %v696, 88
    %v821 = vpop.permute.xlu0 %820
    %v823 = vsel %vm181, %v819, 0
    %v826 = vsel %vm181, %v821, 0
    %828 = vmatprep.subr.bf16.mxu0 0
    %829 = vmatpush1.bf16.xpose.msra.mxu0 %v826
    %830 = vmatprep.subr.bf16.mxu0 0
    %831 = vmatpush1.bf16.xpose.msra.mxu0 0
    %832 = vmatprep.subr.bf16.mxu0 0
    %833 = vmatpush1.bf16.xpose.msra.mxu0 0
    %834 = vmatprep.subr.bf16.mxu0 0
    %835 = vmatpush1.bf16.xpose.msra.mxu0 0
    %836 = vmatprep.subr.bf16.mxu0 0
    %837 = vmatpush1.bf16.xpose.msra.mxu0 0
    %838 = vmatprep.subr.bf16.mxu0 0
    %839 = vmatpush1.bf16.xpose.msra.mxu0 0
    %840 = vmatprep.subr.bf16.mxu0 0
    %841 = vmatpush1.bf16.xpose.msra.mxu0 0
    %842 = vmatprep.subr.bf16.mxu0 0
    %843 = vmatpush1.bf16.xpose.msra.mxu0 0
    %844 = vmatprep.subr.bf16.mxu0 0
    %845 = vmatpush1.bf16.xpose.msra.mxu0 0
    %846 = vmatprep.subr.bf16.mxu0 0
    %847 = vmatpush1.bf16.xpose.msra.mxu0 0
    %848 = vmatprep.subr.bf16.mxu0 0
    %849 = vmatpush1.bf16.xpose.msra.mxu0 0
    %850 = vmatprep.subr.bf16.mxu0 0
    %851 = vmatpush1.bf16.xpose.msra.mxu0 0
    %852 = vmatprep.subr.bf16.mxu0 0
    %853 = vmatpush1.bf16.xpose.msra.mxu0 0
    %854 = vmatprep.subr.bf16.mxu0 0
    %855 = vmatpush1.bf16.xpose.msra.mxu0 0
    %856 = vmatprep.subr.bf16.mxu0 0
    %857 = vmatpush1.bf16.xpose.msra.mxu0 0
    %858 = vmatprep.subr.bf16.mxu0 0
    %859 = vmatpush1.bf16.xpose.msra.mxu0 0
    %860 = vmatprep.mubr.bf16.mxu0 0
    %861 = vmatmul.mubr.bf16.gmra.mrb[0].mxu0 %v823
    %v862 = vpop.f32.mrb[0].mxu0
    %v863 = vadd.f32 %v48, %v862
    %v864 = vpop.f32.mrb[0].mxu0
    %v865 = vpop.f32.mrb[0].mxu0
    %v866 = vadd.f32 %v49, %v865
    %v867 = vpop.f32.mrb[0].mxu0
    %868 = vdwg.mxu0
    %v869 = vsel %vm229, %v863, -inf
    %870 = vmax.xlane.f32.xlu0 %v869
    %v871 = vpop.xlane.xlu0 %870
    %v872 = vsel %vm229, %v866, -inf
    %873 = vmax.xlane.f32.xlu0 %v872
    %v874 = vpop.xlane.xlu0 %873
    %v875 = vsub.f32 %v863, %v871
    %v876 = vsub.f32 %v866, %v874
    %v877 = vmul.f32 %v875, 1.442695
    %v878 = vpow.pop %v877
    %v879 = vmul.f32 %v876, 1.442695
    %v880 = vpow.pop %v879
    %v881 = vsel %vm229, %v878, 0.0
    %882 = vadd.xlane.f32.xlu0 %v881
    %v883 = vpop.xlane.xlu0 %882
    %v884 = vsel %vm229, %v880, 0.0
    %885 = vadd.xlane.f32.xlu0 %v884
    %v886 = vpop.xlane.xlu0 %885
    %v887 = vrcp.pop %v883
    %v888 = vrcp.pop %v886
    %v889 = vmul.f32 %v878, %v887
    %v890 = vmul.f32 %v880, %v888
    %v891 = vpack.c.bf16 %v890, %v889
    %892 = vrot.lane.b32.xlu0 %v696, 56
    %v893 = vpop.permute.xlu0 %892
    %v896 = vsel %vm229, %v891, 0
    %898 = vmatprep.subr.bf16.mxu0 0
    %899 = vmatpush1.bf16.msra.mxu0 %v893
    %900 = vmatprep.subr.bf16.mxu0 0
    %901 = vmatpush1.bf16.msra.mxu0 0
    %902 = vmatprep.subr.bf16.mxu0 0
    %903 = vmatpush1.bf16.msra.mxu0 0
    %904 = vmatprep.subr.bf16.mxu0 0
    %905 = vmatpush1.bf16.msra.mxu0 0
    %906 = vmatprep.subr.bf16.mxu0 0
    %907 = vmatpush1.bf16.msra.mxu0 0
    %908 = vmatprep.subr.bf16.mxu0 0
    %909 = vmatpush1.bf16.msra.mxu0 0
    %910 = vmatprep.subr.bf16.mxu0 0
    %911 = vmatpush1.bf16.msra.mxu0 0
    %912 = vmatprep.subr.bf16.mxu0 0
    %913 = vmatpush1.bf16.msra.mxu0 0
    %914 = vmatprep.subr.bf16.mxu0 0
    %915 = vmatpush1.bf16.msra.mxu0 0
    %916 = vmatprep.subr.bf16.mxu0 0
    %917 = vmatpush1.bf16.msra.mxu0 0
    %918 = vmatprep.subr.bf16.mxu0 0
    %919 = vmatpush1.bf16.msra.mxu0 0
    %920 = vmatprep.subr.bf16.mxu0 0
    %921 = vmatpush1.bf16.msra.mxu0 0
    %922 = vmatprep.subr.bf16.mxu0 0
    %923 = vmatpush1.bf16.msra.mxu0 0
    %924 = vmatprep.subr.bf16.mxu0 0
    %925 = vmatpush1.bf16.msra.mxu0 0
    %926 = vmatprep.subr.bf16.mxu0 0
    %927 = vmatpush1.bf16.msra.mxu0 0
    %928 = vmatprep.subr.bf16.mxu0 0
    %929 = vmatpush1.bf16.msra.mxu0 0
    %930 = vmatprep.mubr.bf16.mxu0 0
    %931 = vmatmul.mubr.bf16.gmra.mrb[0].mxu0 %v896
    %v932 = vpop.f32.mrb[0].mxu0
    %v933 = vadd.f32 0.0, %v932
    %v934 = vpop.f32.mrb[0].mxu0
    %v935 = vpop.f32.mrb[0].mxu0
    %v936 = vadd.f32 0.0, %v935
    %v937 = vpop.f32.mrb[0].mxu0
    %938 = vdwg.mxu0
    %939 = vrot.lane.b32.xlu0 %v695, 112
    %v940 = vpop.permute.xlu0 %939
    %941 = vrot.lane.b32.xlu0 %v696, 80
    %v942 = vpop.permute.xlu0 %941
    %v944 = vsel %vm181, %v940, 0
    %v947 = vsel %vm181, %v942, 0
    %949 = vmatprep.subr.bf16.mxu0 0
    %950 = vmatpush1.bf16.xpose.msra.mxu0 %v947
    %951 = vmatprep.subr.bf16.mxu0 0
    %952 = vmatpush1.bf16.xpose.msra.mxu0 0
    %953 = vmatprep.subr.bf16.mxu0 0
    %954 = vmatpush1.bf16.xpose.msra.mxu0 0
    %955 = vmatprep.subr.bf16.mxu0 0
    %956 = vmatpush1.bf16.xpose.msra.mxu0 0
    %957 = vmatprep.subr.bf16.mxu0 0
    %958 = vmatpush1.bf16.xpose.msra.mxu0 0
    %959 = vmatprep.subr.bf16.mxu0 0
    %960 = vmatpush1.bf16.xpose.msra.mxu0 0
    %961 = vmatprep.subr.bf16.mxu0 0
    %962 = vmatpush1.bf16.xpose.msra.mxu0 0
    %963 = vmatprep.subr.bf16.mxu0 0
    %964 = vmatpush1.bf16.xpose.msra.mxu0 0
    %965 = vmatprep.subr.bf16.mxu0 0
    %966 = vmatpush1.bf16.xpose.msra.mxu0 0
    %967 = vmatprep.subr.bf16.mxu0 0
    %968 = vmatpush1.bf16.xpose.msra.mxu0 0
    %969 = vmatprep.subr.bf16.mxu0 0
    %970 = vmatpush1.bf16.xpose.msra.mxu0 0
    %971 = vmatprep.subr.bf16.mxu0 0
    %972 = vmatpush1.bf16.xpose.msra.mxu0 0
    %973 = vmatprep.subr.bf16.mxu0 0
    %974 = vmatpush1.bf16.xpose.msra.mxu0 0
    %975 = vmatprep.subr.bf16.mxu0 0
    %976 = vmatpush1.bf16.xpose.msra.mxu0 0
    %977 = vmatprep.subr.bf16.mxu0 0
    %978 = vmatpush1.bf16.xpose.msra.mxu0 0
    %979 = vmatprep.subr.bf16.mxu0 0
    %980 = vmatpush1.bf16.xpose.msra.mxu0 0
    %981 = vmatprep.mubr.bf16.mxu0 0
    %982 = vmatmul.mubr.bf16.gmra.mrb[0].mxu0 %v944
    %v983 = vpop.f32.mrb[0].mxu0
    %v984 = vadd.f32 %v50, %v983
    %v985 = vpop.f32.mrb[0].mxu0
    %v986 = vpop.f32.mrb[0].mxu0
    %v987 = vadd.f32 %v51, %v986
    %v988 = vpop.f32.mrb[0].mxu0
    %989 = vdwg.mxu0
    %v990 = vsel %vm229, %v984, -inf
    %991 = vmax.xlane.f32.xlu0 %v990
    %v992 = vpop.xlane.xlu0 %991
    %v993 = vsel %vm229, %v987, -inf
    %994 = vmax.xlane.f32.xlu0 %v993
    %v995 = vpop.xlane.xlu0 %994
    %v996 = vsub.f32 %v984, %v992
    %v997 = vsub.f32 %v987, %v995
    %v998 = vmul.f32 %v996, 1.442695
    %v999 = vpow.pop %v998
    %v1000 = vmul.f32 %v997, 1.442695
    %v1001 = vpow.pop %v1000
    %v1002 = vsel %vm229, %v999, 0.0
    %1003 = vadd.xlane.f32.xlu0 %v1002
    %v1004 = vpop.xlane.xlu0 %1003
    %v1005 = vsel %vm229, %v1001, 0.0
    %1006 = vadd.xlane.f32.xlu0 %v1005
    %v1007 = vpop.xlane.xlu0 %1006
    %v1008 = vrcp.pop %v1004
    %v1009 = vrcp.pop %v1007
    %v1010 = vmul.f32 %v999, %v1008
    %v1011 = vmul.f32 %v1001, %v1009
    %v1012 = vpack.c.bf16 %v1011, %v1010
    %1013 = vrot.lane.b32.xlu0 %v696, 48
    %v1014 = vpop.permute.xlu0 %1013
    %v1017 = vsel %vm229, %v1012, 0
    %1019 = vmatprep.subr.bf16.mxu0 0
    %1020 = vmatpush1.bf16.msra.mxu0 %v1014
    %1021 = vmatprep.subr.bf16.mxu0 0
    %1022 = vmatpush1.bf16.msra.mxu0 0
    %1023 = vmatprep.subr.bf16.mxu0 0
    %1024 = vmatpush1.bf16.msra.mxu0 0
    %1025 = vmatprep.subr.bf16.mxu0 0
    %1026 = vmatpush1.bf16.msra.mxu0 0
    %1027 = vmatprep.subr.bf16.mxu0 0
    %1028 = vmatpush1.bf16.msra.mxu0 0
    %1029 = vmatprep.subr.bf16.mxu0 0
    %1030 = vmatpush1.bf16.msra.mxu0 0
    %1031 = vmatprep.subr.bf16.mxu0 0
    %1032 = vmatpush1.bf16.msra.mxu0 0
    %1033 = vmatprep.subr.bf16.mxu0 0
    %1034 = vmatpush1.bf16.msra.mxu0 0
    %1035 = vmatprep.subr.bf16.mxu0 0
    %1036 = vmatpush1.bf16.msra.mxu0 0
    %1037 = vmatprep.subr.bf16.mxu0 0
    %1038 = vmatpush1.bf16.msra.mxu0 0
    %1039 = vmatprep.subr.bf16.mxu0 0
    %1040 = vmatpush1.bf16.msra.mxu0 0
    %1041 = vmatprep.subr.bf16.mxu0 0
    %1042 = vmatpush1.bf16.msra.mxu0 0
    %1043 = vmatprep.subr.bf16.mxu0 0
    %1044 = vmatpush1.bf16.msra.mxu0 0
    %1045 = vmatprep.subr.bf16.mxu0 0
    %1046 = vmatpush1.bf16.msra.mxu0 0
    %1047 = vmatprep.subr.bf16.mxu0 0
    %1048 = vmatpush1.bf16.msra.mxu0 0
    %1049 = vmatprep.subr.bf16.mxu0 0
    %1050 = vmatpush1.bf16.msra.mxu0 0
    %1051 = vmatprep.mubr.bf16.mxu0 0
    %1052 = vmatmul.mubr.bf16.gmra.mrb[0].mxu0 %v1017
    %v1053 = vpop.f32.mrb[0].mxu0
    %v1054 = vadd.f32 0.0, %v1053
    %v1055 = vpop.f32.mrb[0].mxu0
    %v1056 = vpop.f32.mrb[0].mxu0
    %v1057 = vadd.f32 0.0, %v1056
    %v1058 = vpop.f32.mrb[0].mxu0
    %1059 = vdwg.mxu0
    %1060 = vrot.lane.b32.xlu0 %v695, 104
    %v1061 = vpop.permute.xlu0 %1060
    %1062 = vrot.lane.b32.xlu0 %v696, 72
    %v1063 = vpop.permute.xlu0 %1062
    %v1065 = vsel %vm181, %v1061, 0
    %v1068 = vsel %vm181, %v1063, 0
    %1070 = vmatprep.subr.bf16.mxu0 0
    %1071 = vmatpush1.bf16.xpose.msra.mxu0 %v1068
    %1072 = vmatprep.subr.bf16.mxu0 0
    %1073 = vmatpush1.bf16.xpose.msra.mxu0 0
    %1074 = vmatprep.subr.bf16.mxu0 0
    %1075 = vmatpush1.bf16.xpose.msra.mxu0 0
    %1076 = vmatprep.subr.bf16.mxu0 0
    %1077 = vmatpush1.bf16.xpose.msra.mxu0 0
    %1078 = vmatprep.subr.bf16.mxu0 0
    %1079 = vmatpush1.bf16.xpose.msra.mxu0 0
    %1080 = vmatprep.subr.bf16.mxu0 0
    %1081 = vmatpush1.bf16.xpose.msra.mxu0 0
    %1082 = vmatprep.subr.bf16.mxu0 0
    %1083 = vmatpush1.bf16.xpose.msra.mxu0 0
    %1084 = vmatprep.subr.bf16.mxu0 0
    %1085 = vmatpush1.bf16.xpose.msra.mxu0 0
    %1086 = vmatprep.subr.bf16.mxu0 0
    %1087 = vmatpush1.bf16.xpose.msra.mxu0 0
    %1088 = vmatprep.subr.bf16.mxu0 0
    %1089 = vmatpush1.bf16.xpose.msra.mxu0 0
    %1090 = vmatprep.subr.bf16.mxu0 0
    %1091 = vmatpush1.bf16.xpose.msra.mxu0 0
    %1092 = vmatprep.subr.bf16.mxu0 0
    %1093 = vmatpush1.bf16.xpose.msra.mxu0 0
    %1094 = vmatprep.subr.bf16.mxu0 0
    %1095 = vmatpush1.bf16.xpose.msra.mxu0 0
    %1096 = vmatprep.subr.bf16.mxu0 0
    %1097 = vmatpush1.bf16.xpose.msra.mxu0 0
    %1098 = vmatprep.subr.bf16.mxu0 0
    %1099 = vmatpush1.bf16.xpose.msra.mxu0 0
    %1100 = vmatprep.subr.bf16.mxu0 0
    %1101 = vmatpush1.bf16.xpose.msra.mxu0 0
    %1102 = vmatprep.mubr.bf16.mxu0 0
    %1103 = vmatmul.mubr.bf16.gmra.mrb[0].mxu0 %v1065
    %v1104 = vpop.f32.mrb[0].mxu0
    %v1105 = vadd.f32 %v52, %v1104
    %v1106 = vpop.f32.mrb[0].mxu0
    %v1107 = vpop.f32.mrb[0].mxu0
    %v1108 = vadd.f32 %v53, %v1107
    %v1109 = vpop.f32.mrb[0].mxu0
    %1110 = vdwg.mxu0
    %v1111 = vsel %vm229, %v1105, -inf
    %1112 = vmax.xlane.f32.xlu0 %v1111
    %v1113 = vpop.xlane.xlu0 %1112
    %v1114 = vsel %vm229, %v1108, -inf
    %1115 = vmax.xlane.f32.xlu0 %v1114
    %v1116 = vpop.xlane.xlu0 %1115
    %v1117 = vsub.f32 %v1105, %v1113
    %v1118 = vsub.f32 %v1108, %v1116
    %v1119 = vmul.f32 %v1117, 1.442695
    %v1120 = vpow.pop %v1119
    %v1121 = vmul.f32 %v1118, 1.442695
    %v1122 = vpow.pop %v1121
    %v1123 = vsel %vm229, %v1120, 0.0
    %1124 = vadd.xlane.f32.xlu0 %v1123
    %v1125 = vpop.xlane.xlu0 %1124
    %v1126 = vsel %vm229, %v1122, 0.0
    %1127 = vadd.xlane.f32.xlu0 %v1126
    %v1128 = vpop.xlane.xlu0 %1127
    %v1129 = vrcp.pop %v1125
    %v1130 = vrcp.pop %v1128
    %v1131 = vmul.f32 %v1120, %v1129
    %v1132 = vmul.f32 %v1122, %v1130
    %v1133 = vpack.c.bf16 %v1132, %v1131
    %1134 = vrot.lane.b32.xlu0 %v696, 40
    %v1135 = vpop.permute.xlu0 %1134
    %v1138 = vsel %vm229, %v1133, 0
    %1140 = vmatprep.subr.bf16.mxu0 0
    %1141 = vmatpush1.bf16.msra.mxu0 %v1135
    %1142 = vmatprep.subr.bf16.mxu0 0
    %1143 = vmatpush1.bf16.msra.mxu0 0
    %1144 = vmatprep.subr.bf16.mxu0 0
    %1145 = vmatpush1.bf16.msra.mxu0 0
    %1146 = vmatprep.subr.bf16.mxu0 0
    %1147 = vmatpush1.bf16.msra.mxu0 0
    %1148 = vmatprep.subr.bf16.mxu0 0
    %1149 = vmatpush1.bf16.msra.mxu0 0
    %1150 = vmatprep.subr.bf16.mxu0 0
    %1151 = vmatpush1.bf16.msra.mxu0 0
    %1152 = vmatprep.subr.bf16.mxu0 0
    %1153 = vmatpush1.bf16.msra.mxu0 0
    %1154 = vmatprep.subr.bf16.mxu0 0
    %1155 = vmatpush1.bf16.msra.mxu0 0
    %1156 = vmatprep.subr.bf16.mxu0 0
    %1157 = vmatpush1.bf16.msra.mxu0 0
    %1158 = vmatprep.subr.bf16.mxu0 0
    %1159 = vmatpush1.bf16.msra.mxu0 0
    %1160 = vmatprep.subr.bf16.mxu0 0
    %1161 = vmatpush1.bf16.msra.mxu0 0
    %1162 = vmatprep.subr.bf16.mxu0 0
    %1163 = vmatpush1.bf16.msra.mxu0 0
    %1164 = vmatprep.subr.bf16.mxu0 0
    %1165 = vmatpush1.bf16.msra.mxu0 0
    %1166 = vmatprep.subr.bf16.mxu0 0
    %1167 = vmatpush1.bf16.msra.mxu0 0
    %1168 = vmatprep.subr.bf16.mxu0 0
    %1169 = vmatpush1.bf16.msra.mxu0 0
    %1170 = vmatprep.subr.bf16.mxu0 0
    %1171 = vmatpush1.bf16.msra.mxu0 0
    %1172 = vmatprep.mubr.bf16.mxu0 0
    %1173 = vmatmul.mubr.bf16.gmra.mrb[0].mxu0 %v1138
    %v1174 = vpop.f32.mrb[0].mxu0
    %v1175 = vadd.f32 0.0, %v1174
    %v1176 = vpop.f32.mrb[0].mxu0
    %v1177 = vpop.f32.mrb[0].mxu0
    %v1178 = vadd.f32 0.0, %v1177
    %v1179 = vpop.f32.mrb[0].mxu0
    %1180 = vdwg.mxu0
    %1183 = vrot.lane.b32.xlu0 %v933, 8
    %v1184 = vpop.permute.xlu0 %1183
    %1185 = vrot.lane.b32.xlu0 %v936, 8
    %v1186 = vpop.permute.xlu0 %1185
    %1191 = vrot.lane.b32.xlu0 %v1054, 16
    %v1192 = vpop.permute.xlu0 %1191
    %1193 = vrot.lane.b32.xlu0 %v1057, 16
    %v1194 = vpop.permute.xlu0 %1193
    %1199 = vrot.lane.b32.xlu0 %v1175, 24
    %v1200 = vpop.permute.xlu0 %1199
    %1201 = vrot.lane.b32.xlu0 %v1178, 24
    %v1202 = vpop.permute.xlu0 %1201
    %v1205 = vsel %vm181, %v811, %v1184
    %v1206 = vsel %vm181, %v814, %v1186
    %v1207 = vsel %vm229, %v1205, %v1192
    %v1208 = vsel %vm229, %v1206, %v1194
    %v1209 = vsel %vm692, %v1207, %v1200
    %v1210 = vsel %vm692, %v1208, %v1202
    %v1211 = vpack.c.bf16 %v694, %v693
    %v1212 = vpack.c.bf16 %v1210, %v1209
    %v1213 = vld [vmem:[%s4] sm:$0xf]
    %v1214 = vld [vmem:[%s4 + $0x4] sm:$0xf]
    %v1215 = vld [vmem:[%s4 + $0x8] sm:$0xf]
    %v1216 = vld [vmem:[%s4 + $0xc] sm:$0xf]
    %v1221 = vunpack.c.l.b16 %v1213
    %v1222 = vunpack.c.l.b16 %v1214
    %v1223 = vunpack.c.l.b16 %v1215
    %v1224 = vunpack.c.l.b16 %v1216
    %v1225 = vpack.c.b16 %v1222, %v1221
    %v1226 = vpack.c.b16 %v1224, %v1223
    %v1230 = vsel %vm59, %v1211, 0
    %v1233 = vsel %vm59, %v1212, 0
    %1235 = vmatprep.subr.bf16.mxu0 0
    %1236 = vmatpush1.bf16.msra.mxu0 %v1225
    %1237 = vmatprep.subr.bf16.mxu0 0
    %1238 = vmatpush1.bf16.msra.mxu0 %v1226
    %1239 = vmatprep.subr.bf16.mxu0 0
    %1240 = vmatpush1.bf16.msra.mxu0 0
    %1241 = vmatprep.subr.bf16.mxu0 0
    %1242 = vmatpush1.bf16.msra.mxu0 0
    %1243 = vmatprep.subr.bf16.mxu0 0
    %1244 = vmatpush1.bf16.msra.mxu0 0
    %1245 = vmatprep.subr.bf16.mxu0 0
    %1246 = vmatpush1.bf16.msra.mxu0 0
    %1247 = vmatprep.subr.bf16.mxu0 0
    %1248 = vmatpush1.bf16.msra.mxu0 0
    %1249 = vmatprep.subr.bf16.mxu0 0
    %1250 = vmatpush1.bf16.msra.mxu0 0
    %1251 = vmatprep.subr.bf16.mxu0 0
    %1252 = vmatpush1.bf16.msra.mxu0 0
    %1253 = vmatprep.subr.bf16.mxu0 0
    %1254 = vmatpush1.bf16.msra.mxu0 0
    %1255 = vmatprep.subr.bf16.mxu0 0
    %1256 = vmatpush1.bf16.msra.mxu0 0
    %1257 = vmatprep.subr.bf16.mxu0 0
    %1258 = vmatpush1.bf16.msra.mxu0 0
    %1259 = vmatprep.subr.bf16.mxu0 0
    %1260 = vmatpush1.bf16.msra.mxu0 0
    %1261 = vmatprep.subr.bf16.mxu0 0
    %1262 = vmatpush1.bf16.msra.mxu0 0
    %1263 = vmatprep.subr.bf16.mxu0 0
    %1264 = vmatpush1.bf16.msra.mxu0 0
    %1265 = vmatprep.subr.bf16.mxu0 0
    %1266 = vmatpush1.bf16.msra.mxu0 0
    %1267 = vmatprep.mubr.bf16.mxu0 0
    %1268 = vmatmul.mubr.bf16.gmra.mrb[0].mxu0 %v1230
    %v1269 = vpop.f32.mrb[0].mxu0
    %v1270 = vadd.f32 0.0, %v1269
    %v1271 = vpop.f32.mrb[0].mxu0
    %v1272 = vpop.f32.mrb[0].mxu0
    %v1273 = vadd.f32 0.0, %v1272
    %v1274 = vpop.f32.mrb[0].mxu0
    %1275 = vmatprep.mubr.bf16.mxu0 0
    %1276 = vmatmul.mubr.bf16.gmra.mrb[0].mxu0 %v1233
    %v1277 = vpop.f32.mrb[0].mxu0
    %v1278 = vadd.f32 0.0, %v1277
    %v1279 = vpop.f32.mrb[0].mxu0
    %v1280 = vpop.f32.mrb[0].mxu0
    %v1281 = vadd.f32 0.0, %v1280
    %v1282 = vpop.f32.mrb[0].mxu0
    %1283 = vdwg.mxu0
    %v1284 = vadd.f32 %v34, %v1270
    %v1285 = vadd.f32 %v35, %v1273
    %v1286 = vadd.f32 %v36, %v1278
    %v1287 = vadd.f32 %v37, %v1281
    %v1288 = vld [vmem:[%s5] sm:$0x1]
    %v1289 = vmul.f32 %v1284, %v1284
    %v1290 = vmul.f32 %v1285, %v1285
    %v1291 = vmul.f32 %v1286, %v1286
    %v1292 = vmul.f32 %v1287, %v1287
    %v1293 = vsel %vm59, %v1289, 0.0
    %1294 = vadd.xlane.f32.xlu0 %v1293
    %v1295 = vpop.xlane.xlu0 %1294
    %v1296 = vsel %vm59, %v1290, 0.0
    %1297 = vadd.xlane.f32.xlu0 %v1296
    %v1298 = vpop.xlane.xlu0 %1297
    %v1299 = vsel %vm59, %v1291, 0.0
    %1300 = vadd.xlane.f32.xlu0 %v1299
    %v1301 = vpop.xlane.xlu0 %1300
    %v1302 = vsel %vm59, %v1292, 0.0
    %1303 = vadd.xlane.f32.xlu0 %v1302
    %v1304 = vpop.xlane.xlu0 %1303
    %v1305 = vmul.f32 %v1295, %v72
    %v1306 = vmul.f32 %v1298, %v72
    %v1307 = vmul.f32 %v1301, %v72
    %v1308 = vmul.f32 %v1304, %v72
    %v1309 = vadd.f32 %v1305, 1e-06
    %v1310 = vadd.f32 %v1306, 1e-06
    %v1311 = vadd.f32 %v1307, 1e-06
    %v1312 = vadd.f32 %v1308, 1e-06
    %v1313 = vrsqrt.pop %v1309
    %v1314 = vrsqrt.pop %v1310
    %v1315 = vrsqrt.pop %v1311
    %v1316 = vrsqrt.pop %v1312
    %v1317 = vmul.f32 %v1284, %v1313
    %v1318 = vmul.f32 %v1285, %v1314
    %v1319 = vmul.f32 %v1286, %v1315
    %v1320 = vmul.f32 %v1287, %v1316
    %v1322 = vlaneseq
    %v1323 = vshrl.u32 %v1322, 7
    %v1324 = vsub.s32 0, %v1323
    %v1325 = vrot.slane %v1288, %v1324
    %v1327 = vmul.f32 %v1325, %v1317
    %v1328 = vmul.f32 %v1325, %v1318
    %v1329 = vmul.f32 %v1325, %v1319
    %v1330 = vmul.f32 %v1325, %v1320
    %v1331 = vpack.c.bf16 %v1328, %v1327
    %v1332 = vpack.c.bf16 %v1330, %v1329
    %v1333 = vld [vmem:[%s6] sm:$0xf]
    %v1334 = vld [vmem:[%s6 + $0x4] sm:$0xf]
    %v1335 = vld [vmem:[%s6 + $0x8] sm:$0xf]
    %v1336 = vld [vmem:[%s6 + $0xc] sm:$0xf]
    %v1341 = vunpack.c.l.b16 %v1333
    %v1342 = vunpack.c.l.b16 %v1334
    %v1343 = vunpack.c.l.b16 %v1335
    %v1344 = vunpack.c.l.b16 %v1336
    %v1345 = vpack.c.b16 %v1342, %v1341
    %v1346 = vpack.c.b16 %v1344, %v1343
    %v1350 = vsel %vm59, %v1331, 0
    %v1353 = vsel %vm59, %v1332, 0
    %1355 = vmatprep.subr.bf16.mxu0 0
    %1356 = vmatpush1.bf16.msra.mxu0 %v1345
    %1357 = vmatprep.subr.bf16.mxu0 0
    %1358 = vmatpush1.bf16.msra.mxu0 %v1346
    %1359 = vmatprep.subr.bf16.mxu0 0
    %1360 = vmatpush1.bf16.msra.mxu0 0
    %1361 = vmatprep.subr.bf16.mxu0 0
    %1362 = vmatpush1.bf16.msra.mxu0 0
    %1363 = vmatprep.subr.bf16.mxu0 0
    %1364 = vmatpush1.bf16.msra.mxu0 0
    %1365 = vmatprep.subr.bf16.mxu0 0
    %1366 = vmatpush1.bf16.msra.mxu0 0
    %1367 = vmatprep.subr.bf16.mxu0 0
    %1368 = vmatpush1.bf16.msra.mxu0 0
    %1369 = vmatprep.subr.bf16.mxu0 0
    %1370 = vmatpush1.bf16.msra.mxu0 0
    %1371 = vmatprep.subr.bf16.mxu0 0
    %1372 = vmatpush1.bf16.msra.mxu0 0
    %1373 = vmatprep.subr.bf16.mxu0 0
    %1374 = vmatpush1.bf16.msra.mxu0 0
    %1375 = vmatprep.subr.bf16.mxu0 0
    %1376 = vmatpush1.bf16.msra.mxu0 0
    %1377 = vmatprep.subr.bf16.mxu0 0
    %1378 = vmatpush1.bf16.msra.mxu0 0
    %1379 = vmatprep.subr.bf16.mxu0 0
    %1380 = vmatpush1.bf16.msra.mxu0 0
    %1381 = vmatprep.subr.bf16.mxu0 0
    %1382 = vmatpush1.bf16.msra.mxu0 0
    %1383 = vmatprep.subr.bf16.mxu0 0
    %1384 = vmatpush1.bf16.msra.mxu0 0
    %1385 = vmatprep.subr.bf16.mxu0 0
    %1386 = vmatpush1.bf16.msra.mxu0 0
    %1387 = vmatprep.mubr.bf16.mxu0 0
    %1388 = vmatmul.mubr.bf16.gmra.mrb[0].mxu0 %v1350
    %v1389 = vpop.f32.mrb[0].mxu0
    %v1390 = vadd.f32 0.0, %v1389
    %v1391 = vpop.f32.mrb[0].mxu0
    %v1392 = vpop.f32.mrb[0].mxu0
    %v1393 = vadd.f32 0.0, %v1392
    %v1394 = vpop.f32.mrb[0].mxu0
    %1395 = vmatprep.mubr.bf16.mxu0 0
    %1396 = vmatmul.mubr.bf16.gmra.mrb[0].mxu0 %v1353
    %v1397 = vpop.f32.mrb[0].mxu0
    %v1398 = vadd.f32 0.0, %v1397
    %v1399 = vpop.f32.mrb[0].mxu0
    %v1400 = vpop.f32.mrb[0].mxu0
    %v1401 = vadd.f32 0.0, %v1400
    %v1402 = vpop.f32.mrb[0].mxu0
    %1403 = vdwg.mxu0
    %v1404 = vmul.f32 %v1390, %v1390
    %v1405 = vmul.f32 %v1393, %v1393
    %v1406 = vmul.f32 %v1398, %v1398
    %v1407 = vmul.f32 %v1401, %v1401
    %v1408 = vmul.f32 %v1390, %v1404
    %v1409 = vmul.f32 %v1393, %v1405
    %v1410 = vmul.f32 %v1398, %v1406
    %v1411 = vmul.f32 %v1401, %v1407
    %v1412 = vmul.f32 %v1408, 0.044715
    %v1413 = vmul.f32 %v1409, 0.044715
    %v1414 = vmul.f32 %v1410, 0.044715
    %v1415 = vmul.f32 %v1411, 0.044715
    %v1416 = vadd.f32 %v1390, %v1412
    %v1417 = vadd.f32 %v1393, %v1413
    %v1418 = vadd.f32 %v1398, %v1414
    %v1419 = vadd.f32 %v1401, %v1415
    %v1420 = vmul.f32 %v1416, 0.7978846
    %v1421 = vmul.f32 %v1417, 0.7978846
    %v1422 = vmul.f32 %v1418, 0.7978846
    %v1423 = vmul.f32 %v1419, 0.7978846
    %v1424 = vtanh.pop %v1420
    %v1425 = vtanh.pop %v1421
    %v1426 = vtanh.pop %v1422
    %v1427 = vtanh.pop %v1423
    %v1428 = vadd.f32 %v1424, 1.0
    %v1429 = vadd.f32 %v1425, 1.0
    %v1430 = vadd.f32 %v1426, 1.0
    %v1431 = vadd.f32 %v1427, 1.0
    %v1432 = vmul.f32 %v1428, 0.5
    %v1433 = vmul.f32 %v1429, 0.5
    %v1434 = vmul.f32 %v1430, 0.5
    %v1435 = vmul.f32 %v1431, 0.5
    %v1436 = vmul.f32 %v1390, %v1432
    %v1437 = vmul.f32 %v1393, %v1433
    %v1438 = vmul.f32 %v1398, %v1434
    %v1439 = vmul.f32 %v1401, %v1435
    %1444 = vrot.lane.b32.xlu0 %v1390, 64
    %v1445 = vpop.permute.xlu0 %1444
    %1446 = vrot.lane.b32.xlu0 %v1393, 64
    %v1447 = vpop.permute.xlu0 %1446
    %1448 = vrot.lane.b32.xlu0 %v1398, 64
    %v1449 = vpop.permute.xlu0 %1448
    %1450 = vrot.lane.b32.xlu0 %v1401, 64
    %v1451 = vpop.permute.xlu0 %1450
    %v1456 = vmul.f32 %v1436, %v1445
    %v1457 = vmul.f32 %v1437, %v1447
    %v1458 = vmul.f32 %v1438, %v1449
    %v1459 = vmul.f32 %v1439, %v1451
    %v1460 = vpack.c.bf16 %v1457, %v1456
    %v1461 = vpack.c.bf16 %v1459, %v1458
    %v1462 = vld [vmem:[%s7] sm:$0xf]
    %v1463 = vld [vmem:[%s7 + $0x4] sm:$0xf]
    %v1464 = vld [vmem:[%s7 + $0x8] sm:$0xf]
    %v1465 = vld [vmem:[%s7 + $0xc] sm:$0xf]
    %v1466 = vld [vmem:[%s7 + $0x10] sm:$0xf]
    %v1467 = vld [vmem:[%s7 + $0x14] sm:$0xf]
    %v1468 = vld [vmem:[%s7 + $0x18] sm:$0xf]
    %v1469 = vld [vmem:[%s7 + $0x1c] sm:$0xf]
    %v1478 = vunpack.c.l.b16 %v1462
    %v1479 = vunpack.c.l.b16 %v1463
    %v1480 = vunpack.c.l.b16 %v1464
    %v1481 = vunpack.c.l.b16 %v1465
    %v1482 = vunpack.c.l.b16 %v1466
    %v1483 = vunpack.c.l.b16 %v1467
    %v1484 = vunpack.c.l.b16 %v1468
    %v1485 = vunpack.c.l.b16 %v1469
    %v1486 = vpack.c.b16 %v1479, %v1478
    %v1487 = vpack.c.b16 %v1481, %v1480
    %v1488 = vpack.c.b16 %v1483, %v1482
    %v1489 = vpack.c.b16 %v1485, %v1484
    %vm1494 = vcmask 523264
    %v1496 = vsel %vm1494, %v1460, 0
    %v1499 = vsel %vm1494, %v1461, 0
    %1501 = vmatprep.subr.bf16.mxu0 0
    %1502 = vmatpush1.bf16.msra.mxu0 %v1486
    %1503 = vmatprep.subr.bf16.mxu0 0
    %1504 = vmatpush1.bf16.msra.mxu0 %v1487
    %1505 = vmatprep.subr.bf16.mxu0 0
    %1506 = vmatpush1.bf16.msra.mxu0 %v1488
    %1507 = vmatprep.subr.bf16.mxu0 0
    %1508 = vmatpush1.bf16.msra.mxu0 %v1489
    %1509 = vmatprep.subr.bf16.mxu0 0
    %1510 = vmatpush1.bf16.msra.mxu0 0
    %1511 = vmatprep.subr.bf16.mxu0 0
    %1512 = vmatpush1.bf16.msra.mxu0 0
    %1513 = vmatprep.subr.bf16.mxu0 0
    %1514 = vmatpush1.bf16.msra.mxu0 0
    %1515 = vmatprep.subr.bf16.mxu0 0
    %1516 = vmatpush1.bf16.msra.mxu0 0
    %1517 = vmatprep.subr.bf16.mxu0 0
    %1518 = vmatpush1.bf16.msra.mxu0 0
    %1519 = vmatprep.subr.bf16.mxu0 0
    %1520 = vmatpush1.bf16.msra.mxu0 0
    %1521 = vmatprep.subr.bf16.mxu0 0
    %1522 = vmatpush1.bf16.msra.mxu0 0
    %1523 = vmatprep.subr.bf16.mxu0 0
    %1524 = vmatpush1.bf16.msra.mxu0 0
    %1525 = vmatprep.subr.bf16.mxu0 0
    %1526 = vmatpush1.bf16.msra.mxu0 0
    %1527 = vmatprep.subr.bf16.mxu0 0
    %1528 = vmatpush1.bf16.msra.mxu0 0
    %1529 = vmatprep.subr.bf16.mxu0 0
    %1530 = vmatpush1.bf16.msra.mxu0 0
    %1531 = vmatprep.subr.bf16.mxu0 0
    %1532 = vmatpush1.bf16.msra.mxu0 0
    %1533 = vmatprep.mubr.bf16.mxu0 0
    %1534 = vmatmul.mubr.bf16.gmra.mrb[0].mxu0 %v1496
    %v1535 = vpop.f32.mrb[0].mxu0
    %v1536 = vadd.f32 0.0, %v1535
    %v1537 = vpop.f32.mrb[0].mxu0
    %v1538 = vpop.f32.mrb[0].mxu0
    %v1539 = vadd.f32 0.0, %v1538
    %v1540 = vpop.f32.mrb[0].mxu0
    %1541 = vmatprep.mubr.bf16.mxu0 0
    %1542 = vmatmul.mubr.bf16.gmra.mrb[0].mxu0 %v1499
    %v1543 = vpop.f32.mrb[0].mxu0
    %v1544 = vadd.f32 0.0, %v1543
    %v1545 = vpop.f32.mrb[0].mxu0
    %v1546 = vpop.f32.mrb[0].mxu0
    %v1547 = vadd.f32 0.0, %v1546
    %v1548 = vpop.f32.mrb[0].mxu0
    %1549 = vdwg.mxu0
    %v1550 = vadd.f32 %v1284, %v1536
    %v1551 = vadd.f32 %v1285, %v1539
    %v1552 = vadd.f32 %v1286, %v1544
    %v1553 = vadd.f32 %v1287, %v1547
    %s1554 = scalar_lea.vmem %s2, 1
    %v1555 = vld [vmem:[%s1554] sm:$0x1]
    %v1556 = vmul.f32 %v1550, %v1550
    %v1557 = vmul.f32 %v1551, %v1551
    %v1558 = vmul.f32 %v1552, %v1552
    %v1559 = vmul.f32 %v1553, %v1553
    %v1560 = vsel %vm59, %v1556, 0.0
    %1561 = vadd.xlane.f32.xlu0 %v1560
    %v1562 = vpop.xlane.xlu0 %1561
    %v1563 = vsel %vm59, %v1557, 0.0
    %1564 = vadd.xlane.f32.xlu0 %v1563
    %v1565 = vpop.xlane.xlu0 %1564
    %v1566 = vsel %vm59, %v1558, 0.0
    %1567 = vadd.xlane.f32.xlu0 %v1566
    %v1568 = vpop.xlane.xlu0 %1567
    %v1569 = vsel %vm59, %v1559, 0.0
    %1570 = vadd.xlane.f32.xlu0 %v1569
    %v1571 = vpop.xlane.xlu0 %1570
    %v1572 = vmul.f32 %v1562, %v72
    %v1573 = vmul.f32 %v1565, %v72
    %v1574 = vmul.f32 %v1568, %v72
    %v1575 = vmul.f32 %v1571, %v72
    %v1576 = vadd.f32 %v1572, 1e-06
    %v1577 = vadd.f32 %v1573, 1e-06
    %v1578 = vadd.f32 %v1574, 1e-06
    %v1579 = vadd.f32 %v1575, 1e-06
    %v1580 = vrsqrt.pop %v1576
    %v1581 = vrsqrt.pop %v1577
    %v1582 = vrsqrt.pop %v1578
    %v1583 = vrsqrt.pop %v1579
    %v1584 = vmul.f32 %v1550, %v1580
    %v1585 = vmul.f32 %v1551, %v1581
    %v1586 = vmul.f32 %v1552, %v1582
    %v1587 = vmul.f32 %v1553, %v1583
    %v1589 = vlaneseq
    %v1590 = vshrl.u32 %v1589, 7
    %v1591 = vsub.s32 0, %v1590
    %v1592 = vrot.slane %v1555, %v1591
    %v1594 = vmul.f32 %v1592, %v1584
    %v1595 = vmul.f32 %v1592, %v1585
    %v1596 = vmul.f32 %v1592, %v1586
    %v1597 = vmul.f32 %v1592, %v1587
    %v1598 = vpack.c.bf16 %v1595, %v1594
    %v1599 = vpack.c.bf16 %v1597, %v1596
    %s1600 = scalar_lea.vmem %s3, 16
    %v1601 = vld [vmem:[%s1600] sm:$0xf]
    %v1602 = vld [vmem:[%s1600 + $0x4] sm:$0xf]
    %v1603 = vld [vmem:[%s1600 + $0x8] sm:$0xf]
    %v1604 = vld [vmem:[%s1600 + $0xc] sm:$0xf]
    %v1609 = vunpack.c.l.b16 %v1601
    %v1610 = vunpack.c.l.b16 %v1602
    %v1611 = vunpack.c.l.b16 %v1603
    %v1612 = vunpack.c.l.b16 %v1604
    %v1613 = vpack.c.b16 %v1610, %v1609
    %v1614 = vpack.c.b16 %v1612, %v1611
    %v1618 = vsel %vm59, %v1598, 0
    %v1621 = vsel %vm59, %v1599, 0
    %1623 = vmatprep.subr.bf16.mxu0 0
    %1624 = vmatpush1.bf16.msra.mxu0 %v1613
    %1625 = vmatprep.subr.bf16.mxu0 0
    %1626 = vmatpush1.bf16.msra.mxu0 %v1614
    %1627 = vmatprep.subr.bf16.mxu0 0
    %1628 = vmatpush1.bf16.msra.mxu0 0
    %1629 = vmatprep.subr.bf16.mxu0 0
    %1630 = vmatpush1.bf16.msra.mxu0 0
    %1631 = vmatprep.subr.bf16.mxu0 0
    %1632 = vmatpush1.bf16.msra.mxu0 0
    %1633 = vmatprep.subr.bf16.mxu0 0
    %1634 = vmatpush1.bf16.msra.mxu0 0
    %1635 = vmatprep.subr.bf16.mxu0 0
    %1636 = vmatpush1.bf16.msra.mxu0 0
    %1637 = vmatprep.subr.bf16.mxu0 0
    %1638 = vmatpush1.bf16.msra.mxu0 0
    %1639 = vmatprep.subr.bf16.mxu0 0
    %1640 = vmatpush1.bf16.msra.mxu0 0
    %1641 = vmatprep.subr.bf16.mxu0 0
    %1642 = vmatpush1.bf16.msra.mxu0 0
    %1643 = vmatprep.subr.bf16.mxu0 0
    %1644 = vmatpush1.bf16.msra.mxu0 0
    %1645 = vmatprep.subr.bf16.mxu0 0
    %1646 = vmatpush1.bf16.msra.mxu0 0
    %1647 = vmatprep.subr.bf16.mxu0 0
    %1648 = vmatpush1.bf16.msra.mxu0 0
    %1649 = vmatprep.subr.bf16.mxu0 0
    %1650 = vmatpush1.bf16.msra.mxu0 0
    %1651 = vmatprep.subr.bf16.mxu0 0
    %1652 = vmatpush1.bf16.msra.mxu0 0
    %1653 = vmatprep.subr.bf16.mxu0 0
    %1654 = vmatpush1.bf16.msra.mxu0 0
    %1655 = vmatprep.mubr.bf16.mxu0 0
    %1656 = vmatmul.mubr.bf16.gmra.mrb[0].mxu0 %v1618
    %v1657 = vpop.f32.mrb[0].mxu0
    %v1658 = vadd.f32 0.0, %v1657
    %v1659 = vpop.f32.mrb[0].mxu0
    %v1660 = vpop.f32.mrb[0].mxu0
    %v1661 = vadd.f32 0.0, %v1660
    %v1662 = vpop.f32.mrb[0].mxu0
    %1663 = vmatprep.mubr.bf16.mxu0 0
    %1664 = vmatmul.mubr.bf16.gmra.mrb[0].mxu0 %v1621
    %v1665 = vpop.f32.mrb[0].mxu0
    %v1666 = vadd.f32 0.0, %v1665
    %v1667 = vpop.f32.mrb[0].mxu0
    %v1668 = vpop.f32.mrb[0].mxu0
    %v1669 = vadd.f32 0.0, %v1668
    %v1670 = vpop.f32.mrb[0].mxu0
    %1671 = vdwg.mxu0
    %v1672 = vmul.f32 %v1658, 0.5
    %v1673 = vmul.f32 %v1661, 0.5
    %v1674 = vmul.f32 %v1666, 0.5
    %v1675 = vmul.f32 %v1669, 0.5
    %v1676 = vpack.c.bf16 %v1673, %v1672
    %v1677 = vpack.c.bf16 %v1661, %v1658
    %1679 = vrot.lane.b32.xlu0 %v1677, 96
    %v1680 = vpop.permute.xlu0 %1679
    %v1682 = vsel %vm181, %v1676, 0
    %v1685 = vsel %vm181, %v1680, 0
    %1687 = vmatprep.subr.bf16.mxu0 0
    %1688 = vmatpush1.bf16.xpose.msra.mxu0 %v1685
    %1689 = vmatprep.subr.bf16.mxu0 0
    %1690 = vmatpush1.bf16.xpose.msra.mxu0 0
    %1691 = vmatprep.subr.bf16.mxu0 0
    %1692 = vmatpush1.bf16.xpose.msra.mxu0 0
    %1693 = vmatprep.subr.bf16.mxu0 0
    %1694 = vmatpush1.bf16.xpose.msra.mxu0 0
    %1695 = vmatprep.subr.bf16.mxu0 0
    %1696 = vmatpush1.bf16.xpose.msra.mxu0 0
    %1697 = vmatprep.subr.bf16.mxu0 0
    %1698 = vmatpush1.bf16.xpose.msra.mxu0 0
    %1699 = vmatprep.subr.bf16.mxu0 0
    %1700 = vmatpush1.bf16.xpose.msra.mxu0 0
    %1701 = vmatprep.subr.bf16.mxu0 0
    %1702 = vmatpush1.bf16.xpose.msra.mxu0 0
    %1703 = vmatprep.subr.bf16.mxu0 0
    %1704 = vmatpush1.bf16.xpose.msra.mxu0 0
    %1705 = vmatprep.subr.bf16.mxu0 0
    %1706 = vmatpush1.bf16.xpose.msra.mxu0 0
    %1707 = vmatprep.subr.bf16.mxu0 0
    %1708 = vmatpush1.bf16.xpose.msra.mxu0 0
    %1709 = vmatprep.subr.bf16.mxu0 0
    %1710 = vmatpush1.bf16.xpose.msra.mxu0 0
    %1711 = vmatprep.subr.bf16.mxu0 0
    %1712 = vmatpush1.bf16.xpose.msra.mxu0 0
    %1713 = vmatprep.subr.bf16.mxu0 0
    %1714 = vmatpush1.bf16.xpose.msra.mxu0 0
    %1715 = vmatprep.subr.bf16.mxu0 0
    %1716 = vmatpush1.bf16.xpose.msra.mxu0 0
    %1717 = vmatprep.subr.bf16.mxu0 0
    %1718 = vmatpush1.bf16.xpose.msra.mxu0 0
    %1719 = vmatprep.mubr.bf16.mxu0 0
    %1720 = vmatmul.mubr.bf16.gmra.mrb[0].mxu0 %v1682
    %v1721 = vpop.f32.mrb[0].mxu0
    %v1722 = vadd.f32 %v46, %v1721
    %v1723 = vpop.f32.mrb[0].mxu0
    %v1724 = vpop.f32.mrb[0].mxu0
    %v1725 = vadd.f32 %v47, %v1724
    %v1726 = vpop.f32.mrb[0].mxu0
    %1727 = vdwg.mxu0
    %v1728 = vsel %vm229, %v1722, -inf
    %1729 = vmax.xlane.f32.xlu0 %v1728
    %v1730 = vpop.xlane.xlu0 %1729
    %v1731 = vsel %vm229, %v1725, -inf
    %1732 = vmax.xlane.f32.xlu0 %v1731
    %v1733 = vpop.xlane.xlu0 %1732
    %v1734 = vsub.f32 %v1722, %v1730
    %v1735 = vsub.f32 %v1725, %v1733
    %v1736 = vmul.f32 %v1734, 1.442695
    %v1737 = vpow.pop %v1736
    %v1738 = vmul.f32 %v1735, 1.442695
    %v1739 = vpow.pop %v1738
    %v1740 = vsel %vm229, %v1737, 0.0
    %1741 = vadd.xlane.f32.xlu0 %v1740
    %v1742 = vpop.xlane.xlu0 %1741
    %v1743 = vsel %vm229, %v1739, 0.0
    %1744 = vadd.xlane.f32.xlu0 %v1743
    %v1745 = vpop.xlane.xlu0 %1744
    %v1746 = vrcp.pop %v1742
    %v1747 = vrcp.pop %v1745
    %v1748 = vmul.f32 %v1737, %v1746
    %v1749 = vmul.f32 %v1739, %v1747
    %v1750 = vpack.c.bf16 %v1749, %v1748
    %1751 = vrot.lane.b32.xlu0 %v1677, 64
    %v1752 = vpop.permute.xlu0 %1751
    %v1755 = vsel %vm229, %v1750, 0
    %1757 = vmatprep.subr.bf16.mxu0 0
    %1758 = vmatpush1.bf16.msra.mxu0 %v1752
    %1759 = vmatprep.subr.bf16.mxu0 0
    %1760 = vmatpush1.bf16.msra.mxu0 0
    %1761 = vmatprep.subr.bf16.mxu0 0
    %1762 = vmatpush1.bf16.msra.mxu0 0
    %1763 = vmatprep.subr.bf16.mxu0 0
    %1764 = vmatpush1.bf16.msra.mxu0 0
    %1765 = vmatprep.subr.bf16.mxu0 0
    %1766 = vmatpush1.bf16.msra.mxu0 0
    %1767 = vmatprep.subr.bf16.mxu0 0
    %1768 = vmatpush1.bf16.msra.mxu0 0
    %1769 = vmatprep.subr.bf16.mxu0 0
    %1770 = vmatpush1.bf16.msra.mxu0 0
    %1771 = vmatprep.subr.bf16.mxu0 0
    %1772 = vmatpush1.bf16.msra.mxu0 0
    %1773 = vmatprep.subr.bf16.mxu0 0
    %1774 = vmatpush1.bf16.msra.mxu0 0
    %1775 = vmatprep.subr.bf16.mxu0 0
    %1776 = vmatpush1.bf16.msra.mxu0 0
    %1777 = vmatprep.subr.bf16.mxu0 0
    %1778 = vmatpush1.bf16.msra.mxu0 0
    %1779 = vmatprep.subr.bf16.mxu0 0
    %1780 = vmatpush1.bf16.msra.mxu0 0
    %1781 = vmatprep.subr.bf16.mxu0 0
    %1782 = vmatpush1.bf16.msra.mxu0 0
    %1783 = vmatprep.subr.bf16.mxu0 0
    %1784 = vmatpush1.bf16.msra.mxu0 0
    %1785 = vmatprep.subr.bf16.mxu0 0
    %1786 = vmatpush1.bf16.msra.mxu0 0
    %1787 = vmatprep.subr.bf16.mxu0 0
    %1788 = vmatpush1.bf16.msra.mxu0 0
    %1789 = vmatprep.mubr.bf16.mxu0 0
    %1790 = vmatmul.mubr.bf16.gmra.mrb[0].mxu0 %v1755
    %v1791 = vpop.f32.mrb[0].mxu0
    %v1792 = vadd.f32 0.0, %v1791
    %v1793 = vpop.f32.mrb[0].mxu0
    %v1794 = vpop.f32.mrb[0].mxu0
    %v1795 = vadd.f32 0.0, %v1794
    %v1796 = vpop.f32.mrb[0].mxu0
    %1797 = vdwg.mxu0
    %1799 = vrot.lane.b32.xlu0 %v1676, 120
    %v1800 = vpop.permute.xlu0 %1799
    %1801 = vrot.lane.b32.xlu0 %v1677, 88
    %v1802 = vpop.permute.xlu0 %1801
    %v1804 = vsel %vm181, %v1800, 0
    %v1807 = vsel %vm181, %v1802, 0
    %1809 = vmatprep.subr.bf16.mxu0 0
    %1810 = vmatpush1.bf16.xpose.msra.mxu0 %v1807
    %1811 = vmatprep.subr.bf16.mxu0 0
    %1812 = vmatpush1.bf16.xpose.msra.mxu0 0
    %1813 = vmatprep.subr.bf16.mxu0 0
    %1814 = vmatpush1.bf16.xpose.msra.mxu0 0
    %1815 = vmatprep.subr.bf16.mxu0 0
    %1816 = vmatpush1.bf16.xpose.msra.mxu0 0
    %1817 = vmatprep.subr.bf16.mxu0 0
    %1818 = vmatpush1.bf16.xpose.msra.mxu0 0
    %1819 = vmatprep.subr.bf16.mxu0 0
    %1820 = vmatpush1.bf16.xpose.msra.mxu0 0
    %1821 = vmatprep.subr.bf16.mxu0 0
    %1822 = vmatpush1.bf16.xpose.msra.mxu0 0
    %1823 = vmatprep.subr.bf16.mxu0 0
    %1824 = vmatpush1.bf16.xpose.msra.mxu0 0
    %1825 = vmatprep.subr.bf16.mxu0 0
    %1826 = vmatpush1.bf16.xpose.msra.mxu0 0
    %1827 = vmatprep.subr.bf16.mxu0 0
    %1828 = vmatpush1.bf16.xpose.msra.mxu0 0
    %1829 = vmatprep.subr.bf16.mxu0 0
    %1830 = vmatpush1.bf16.xpose.msra.mxu0 0
    %1831 = vmatprep.subr.bf16.mxu0 0
    %1832 = vmatpush1.bf16.xpose.msra.mxu0 0
    %1833 = vmatprep.subr.bf16.mxu0 0
    %1834 = vmatpush1.bf16.xpose.msra.mxu0 0
    %1835 = vmatprep.subr.bf16.mxu0 0
    %1836 = vmatpush1.bf16.xpose.msra.mxu0 0
    %1837 = vmatprep.subr.bf16.mxu0 0
    %1838 = vmatpush1.bf16.xpose.msra.mxu0 0
    %1839 = vmatprep.subr.bf16.mxu0 0
    %1840 = vmatpush1.bf16.xpose.msra.mxu0 0
    %1841 = vmatprep.mubr.bf16.mxu0 0
    %1842 = vmatmul.mubr.bf16.gmra.mrb[0].mxu0 %v1804
    %v1843 = vpop.f32.mrb[0].mxu0
    %v1844 = vadd.f32 %v48, %v1843
    %v1845 = vpop.f32.mrb[0].mxu0
    %v1846 = vpop.f32.mrb[0].mxu0
    %v1847 = vadd.f32 %v49, %v1846
    %v1848 = vpop.f32.mrb[0].mxu0
    %1849 = vdwg.mxu0
    %v1850 = vsel %vm229, %v1844, -inf
    %1851 = vmax.xlane.f32.xlu0 %v1850
    %v1852 = vpop.xlane.xlu0 %1851
    %v1853 = vsel %vm229, %v1847, -inf
    %1854 = vmax.xlane.f32.xlu0 %v1853
    %v1855 = vpop.xlane.xlu0 %1854
    %v1856 = vsub.f32 %v1844, %v1852
    %v1857 = vsub.f32 %v1847, %v1855
    %v1858 = vmul.f32 %v1856, 1.442695
    %v1859 = vpow.pop %v1858
    %v1860 = vmul.f32 %v1857, 1.442695
    %v1861 = vpow.pop %v1860
    %v1862 = vsel %vm229, %v1859, 0.0
    %1863 = vadd.xlane.f32.xlu0 %v1862
    %v1864 = vpop.xlane.xlu0 %1863
    %v1865 = vsel %vm229, %v1861, 0.0
    %1866 = vadd.xlane.f32.xlu0 %v1865
    %v1867 = vpop.xlane.xlu0 %1866
    %v1868 = vrcp.pop %v1864
    %v1869 = vrcp.pop %v1867
    %v1870 = vmul.f32 %v1859, %v1868
    %v1871 = vmul.f32 %v1861, %v1869
    %v1872 = vpack.c.bf16 %v1871, %v1870
    %1873 = vrot.lane.b32.xlu0 %v1677, 56
    %v1874 = vpop.permute.xlu0 %1873
    %v1877 = vsel %vm229, %v1872, 0
    %1879 = vmatprep.subr.bf16.mxu0 0
    %1880 = vmatpush1.bf16.msra.mxu0 %v1874
    %1881 = vmatprep.subr.bf16.mxu0 0
    %1882 = vmatpush1.bf16.msra.mxu0 0
    %1883 = vmatprep.subr.bf16.mxu0 0
    %1884 = vmatpush1.bf16.msra.mxu0 0
    %1885 = vmatprep.subr.bf16.mxu0 0
    %1886 = vmatpush1.bf16.msra.mxu0 0
    %1887 = vmatprep.subr.bf16.mxu0 0
    %1888 = vmatpush1.bf16.msra.mxu0 0
    %1889 = vmatprep.subr.bf16.mxu0 0
    %1890 = vmatpush1.bf16.msra.mxu0 0
    %1891 = vmatprep.subr.bf16.mxu0 0
    %1892 = vmatpush1.bf16.msra.mxu0 0
    %1893 = vmatprep.subr.bf16.mxu0 0
    %1894 = vmatpush1.bf16.msra.mxu0 0
    %1895 = vmatprep.subr.bf16.mxu0 0
    %1896 = vmatpush1.bf16.msra.mxu0 0
    %1897 = vmatprep.subr.bf16.mxu0 0
    %1898 = vmatpush1.bf16.msra.mxu0 0
    %1899 = vmatprep.subr.bf16.mxu0 0
    %1900 = vmatpush1.bf16.msra.mxu0 0
    %1901 = vmatprep.subr.bf16.mxu0 0
    %1902 = vmatpush1.bf16.msra.mxu0 0
    %1903 = vmatprep.subr.bf16.mxu0 0
    %1904 = vmatpush1.bf16.msra.mxu0 0
    %1905 = vmatprep.subr.bf16.mxu0 0
    %1906 = vmatpush1.bf16.msra.mxu0 0
    %1907 = vmatprep.subr.bf16.mxu0 0
    %1908 = vmatpush1.bf16.msra.mxu0 0
    %1909 = vmatprep.subr.bf16.mxu0 0
    %1910 = vmatpush1.bf16.msra.mxu0 0
    %1911 = vmatprep.mubr.bf16.mxu0 0
    %1912 = vmatmul.mubr.bf16.gmra.mrb[0].mxu0 %v1877
    %v1913 = vpop.f32.mrb[0].mxu0
    %v1914 = vadd.f32 0.0, %v1913
    %v1915 = vpop.f32.mrb[0].mxu0
    %v1916 = vpop.f32.mrb[0].mxu0
    %v1917 = vadd.f32 0.0, %v1916
    %v1918 = vpop.f32.mrb[0].mxu0
    %1919 = vdwg.mxu0
    %1920 = vrot.lane.b32.xlu0 %v1676, 112
    %v1921 = vpop.permute.xlu0 %1920
    %1922 = vrot.lane.b32.xlu0 %v1677, 80
    %v1923 = vpop.permute.xlu0 %1922
    %v1925 = vsel %vm181, %v1921, 0
    %v1928 = vsel %vm181, %v1923, 0
    %1930 = vmatprep.subr.bf16.mxu0 0
    %1931 = vmatpush1.bf16.xpose.msra.mxu0 %v1928
    %1932 = vmatprep.subr.bf16.mxu0 0
    %1933 = vmatpush1.bf16.xpose.msra.mxu0 0
    %1934 = vmatprep.subr.bf16.mxu0 0
    %1935 = vmatpush1.bf16.xpose.msra.mxu0 0
    %1936 = vmatprep.subr.bf16.mxu0 0
    %1937 = vmatpush1.bf16.xpose.msra.mxu0 0
    %1938 = vmatprep.subr.bf16.mxu0 0
    %1939 = vmatpush1.bf16.xpose.msra.mxu0 0
    %1940 = vmatprep.subr.bf16.mxu0 0
    %1941 = vmatpush1.bf16.xpose.msra.mxu0 0
    %1942 = vmatprep.subr.bf16.mxu0 0
    %1943 = vmatpush1.bf16.xpose.msra.mxu0 0
    %1944 = vmatprep.subr.bf16.mxu0 0
    %1945 = vmatpush1.bf16.xpose.msra.mxu0 0
    %1946 = vmatprep.subr.bf16.mxu0 0
    %1947 = vmatpush1.bf16.xpose.msra.mxu0 0
    %1948 = vmatprep.subr.bf16.mxu0 0
    %1949 = vmatpush1.bf16.xpose.msra.mxu0 0
    %1950 = vmatprep.subr.bf16.mxu0 0
    %1951 = vmatpush1.bf16.xpose.msra.mxu0 0
    %1952 = vmatprep.subr.bf16.mxu0 0
    %1953 = vmatpush1.bf16.xpose.msra.mxu0 0
    %1954 = vmatprep.subr.bf16.mxu0 0
    %1955 = vmatpush1.bf16.xpose.msra.mxu0 0
    %1956 = vmatprep.subr.bf16.mxu0 0
    %1957 = vmatpush1.bf16.xpose.msra.mxu0 0
    %1958 = vmatprep.subr.bf16.mxu0 0
    %1959 = vmatpush1.bf16.xpose.msra.mxu0 0
    %1960 = vmatprep.subr.bf16.mxu0 0
    %1961 = vmatpush1.bf16.xpose.msra.mxu0 0
    %1962 = vmatprep.mubr.bf16.mxu0 0
    %1963 = vmatmul.mubr.bf16.gmra.mrb[0].mxu0 %v1925
    %v1964 = vpop.f32.mrb[0].mxu0
    %v1965 = vadd.f32 %v50, %v1964
    %v1966 = vpop.f32.mrb[0].mxu0
    %v1967 = vpop.f32.mrb[0].mxu0
    %v1968 = vadd.f32 %v51, %v1967
    %v1969 = vpop.f32.mrb[0].mxu0
    %1970 = vdwg.mxu0
    %v1971 = vsel %vm229, %v1965, -inf
    %1972 = vmax.xlane.f32.xlu0 %v1971
    %v1973 = vpop.xlane.xlu0 %1972
    %v1974 = vsel %vm229, %v1968, -inf
    %1975 = vmax.xlane.f32.xlu0 %v1974
    %v1976 = vpop.xlane.xlu0 %1975
    %v1977 = vsub.f32 %v1965, %v1973
    %v1978 = vsub.f32 %v1968, %v1976
    %v1979 = vmul.f32 %v1977, 1.442695
    %v1980 = vpow.pop %v1979
    %v1981 = vmul.f32 %v1978, 1.442695
    %v1982 = vpow.pop %v1981
    %v1983 = vsel %vm229, %v1980, 0.0
    %1984 = vadd.xlane.f32.xlu0 %v1983
    %v1985 = vpop.xlane.xlu0 %1984
    %v1986 = vsel %vm229, %v1982, 0.0
    %1987 = vadd.xlane.f32.xlu0 %v1986
    %v1988 = vpop.xlane.xlu0 %1987
    %v1989 = vrcp.pop %v1985
    %v1990 = vrcp.pop %v1988
    %v1991 = vmul.f32 %v1980, %v1989
    %v1992 = vmul.f32 %v1982, %v1990
    %v1993 = vpack.c.bf16 %v1992, %v1991
    %1994 = vrot.lane.b32.xlu0 %v1677, 48
    %v1995 = vpop.permute.xlu0 %1994
    %v1998 = vsel %vm229, %v1993, 0
    %2000 = vmatprep.subr.bf16.mxu0 0
    %2001 = vmatpush1.bf16.msra.mxu0 %v1995
    %2002 = vmatprep.subr.bf16.mxu0 0
    %2003 = vmatpush1.bf16.msra.mxu0 0
    %2004 = vmatprep.subr.bf16.mxu0 0
    %2005 = vmatpush1.bf16.msra.mxu0 0
    %2006 = vmatprep.subr.bf16.mxu0 0
    %2007 = vmatpush1.bf16.msra.mxu0 0
    %2008 = vmatprep.subr.bf16.mxu0 0
    %2009 = vmatpush1.bf16.msra.mxu0 0
    %2010 = vmatprep.subr.bf16.mxu0 0
    %2011 = vmatpush1.bf16.msra.mxu0 0
    %2012 = vmatprep.subr.bf16.mxu0 0
    %2013 = vmatpush1.bf16.msra.mxu0 0
    %2014 = vmatprep.subr.bf16.mxu0 0
    %2015 = vmatpush1.bf16.msra.mxu0 0
    %2016 = vmatprep.subr.bf16.mxu0 0
    %2017 = vmatpush1.bf16.msra.mxu0 0
    %2018 = vmatprep.subr.bf16.mxu0 0
    %2019 = vmatpush1.bf16.msra.mxu0 0
    %2020 = vmatprep.subr.bf16.mxu0 0
    %2021 = vmatpush1.bf16.msra.mxu0 0
    %2022 = vmatprep.subr.bf16.mxu0 0
    %2023 = vmatpush1.bf16.msra.mxu0 0
    %2024 = vmatprep.subr.bf16.mxu0 0
    %2025 = vmatpush1.bf16.msra.mxu0 0
    %2026 = vmatprep.subr.bf16.mxu0 0
    %2027 = vmatpush1.bf16.msra.mxu0 0
    %2028 = vmatprep.subr.bf16.mxu0 0
    %2029 = vmatpush1.bf16.msra.mxu0 0
    %2030 = vmatprep.subr.bf16.mxu0 0
    %2031 = vmatpush1.bf16.msra.mxu0 0
    %2032 = vmatprep.mubr.bf16.mxu0 0
    %2033 = vmatmul.mubr.bf16.gmra.mrb[0].mxu0 %v1998
    %v2034 = vpop.f32.mrb[0].mxu0
    %v2035 = vadd.f32 0.0, %v2034
    %v2036 = vpop.f32.mrb[0].mxu0
    %v2037 = vpop.f32.mrb[0].mxu0
    %v2038 = vadd.f32 0.0, %v2037
    %v2039 = vpop.f32.mrb[0].mxu0
    %2040 = vdwg.mxu0
    %2041 = vrot.lane.b32.xlu0 %v1676, 104
    %v2042 = vpop.permute.xlu0 %2041
    %2043 = vrot.lane.b32.xlu0 %v1677, 72
    %v2044 = vpop.permute.xlu0 %2043
    %v2046 = vsel %vm181, %v2042, 0
    %v2049 = vsel %vm181, %v2044, 0
    %2051 = vmatprep.subr.bf16.mxu0 0
    %2052 = vmatpush1.bf16.xpose.msra.mxu0 %v2049
    %2053 = vmatprep.subr.bf16.mxu0 0
    %2054 = vmatpush1.bf16.xpose.msra.mxu0 0
    %2055 = vmatprep.subr.bf16.mxu0 0
    %2056 = vmatpush1.bf16.xpose.msra.mxu0 0
    %2057 = vmatprep.subr.bf16.mxu0 0
    %2058 = vmatpush1.bf16.xpose.msra.mxu0 0
    %2059 = vmatprep.subr.bf16.mxu0 0
    %2060 = vmatpush1.bf16.xpose.msra.mxu0 0
    %2061 = vmatprep.subr.bf16.mxu0 0
    %2062 = vmatpush1.bf16.xpose.msra.mxu0 0
    %2063 = vmatprep.subr.bf16.mxu0 0
    %2064 = vmatpush1.bf16.xpose.msra.mxu0 0
    %2065 = vmatprep.subr.bf16.mxu0 0
    %2066 = vmatpush1.bf16.xpose.msra.mxu0 0
    %2067 = vmatprep.subr.bf16.mxu0 0
    %2068 = vmatpush1.bf16.xpose.msra.mxu0 0
    %2069 = vmatprep.subr.bf16.mxu0 0
    %2070 = vmatpush1.bf16.xpose.msra.mxu0 0
    %2071 = vmatprep.subr.bf16.mxu0 0
    %2072 = vmatpush1.bf16.xpose.msra.mxu0 0
    %2073 = vmatprep.subr.bf16.mxu0 0
    %2074 = vmatpush1.bf16.xpose.msra.mxu0 0
    %2075 = vmatprep.subr.bf16.mxu0 0
    %2076 = vmatpush1.bf16.xpose.msra.mxu0 0
    %2077 = vmatprep.subr.bf16.mxu0 0
    %2078 = vmatpush1.bf16.xpose.msra.mxu0 0
    %2079 = vmatprep.subr.bf16.mxu0 0
    %2080 = vmatpush1.bf16.xpose.msra.mxu0 0
    %2081 = vmatprep.subr.bf16.mxu0 0
    %2082 = vmatpush1.bf16.xpose.msra.mxu0 0
    %2083 = vmatprep.mubr.bf16.mxu0 0
    %2084 = vmatmul.mubr.bf16.gmra.mrb[0].mxu0 %v2046
    %v2085 = vpop.f32.mrb[0].mxu0
    %v2086 = vadd.f32 %v52, %v2085
    %v2087 = vpop.f32.mrb[0].mxu0
    %v2088 = vpop.f32.mrb[0].mxu0
    %v2089 = vadd.f32 %v53, %v2088
    %v2090 = vpop.f32.mrb[0].mxu0
    %2091 = vdwg.mxu0
    %v2092 = vsel %vm229, %v2086, -inf
    %2093 = vmax.xlane.f32.xlu0 %v2092
    %v2094 = vpop.xlane.xlu0 %2093
    %v2095 = vsel %vm229, %v2089, -inf
    %2096 = vmax.xlane.f32.xlu0 %v2095
    %v2097 = vpop.xlane.xlu0 %2096
    %v2098 = vsub.f32 %v2086, %v2094
    %v2099 = vsub.f32 %v2089, %v2097
    %v2100 = vmul.f32 %v2098, 1.442695
    %v2101 = vpow.pop %v2100
    %v2102 = vmul.f32 %v2099, 1.442695
    %v2103 = vpow.pop %v2102
    %v2104 = vsel %vm229, %v2101, 0.0
    %2105 = vadd.xlane.f32.xlu0 %v2104
    %v2106 = vpop.xlane.xlu0 %2105
    %v2107 = vsel %vm229, %v2103, 0.0
    %2108 = vadd.xlane.f32.xlu0 %v2107
    %v2109 = vpop.xlane.xlu0 %2108
    %v2110 = vrcp.pop %v2106
    %v2111 = vrcp.pop %v2109
    %v2112 = vmul.f32 %v2101, %v2110
    %v2113 = vmul.f32 %v2103, %v2111
    %v2114 = vpack.c.bf16 %v2113, %v2112
    %2115 = vrot.lane.b32.xlu0 %v1677, 40
    %v2116 = vpop.permute.xlu0 %2115
    %v2119 = vsel %vm229, %v2114, 0
    %2121 = vmatprep.subr.bf16.mxu0 0
    %2122 = vmatpush1.bf16.msra.mxu0 %v2116
    %2123 = vmatprep.subr.bf16.mxu0 0
    %2124 = vmatpush1.bf16.msra.mxu0 0
    %2125 = vmatprep.subr.bf16.mxu0 0
    %2126 = vmatpush1.bf16.msra.mxu0 0
    %2127 = vmatprep.subr.bf16.mxu0 0
    %2128 = vmatpush1.bf16.msra.mxu0 0
    %2129 = vmatprep.subr.bf16.mxu0 0
    %2130 = vmatpush1.bf16.msra.mxu0 0
    %2131 = vmatprep.subr.bf16.mxu0 0
    %2132 = vmatpush1.bf16.msra.mxu0 0
    %2133 = vmatprep.subr.bf16.mxu0 0
    %2134 = vmatpush1.bf16.msra.mxu0 0
    %2135 = vmatprep.subr.bf16.mxu0 0
    %2136 = vmatpush1.bf16.msra.mxu0 0
    %2137 = vmatprep.subr.bf16.mxu0 0
    %2138 = vmatpush1.bf16.msra.mxu0 0
    %2139 = vmatprep.subr.bf16.mxu0 0
    %2140 = vmatpush1.bf16.msra.mxu0 0
    %2141 = vmatprep.subr.bf16.mxu0 0
    %2142 = vmatpush1.bf16.msra.mxu0 0
    %2143 = vmatprep.subr.bf16.mxu0 0
    %2144 = vmatpush1.bf16.msra.mxu0 0
    %2145 = vmatprep.subr.bf16.mxu0 0
    %2146 = vmatpush1.bf16.msra.mxu0 0
    %2147 = vmatprep.subr.bf16.mxu0 0
    %2148 = vmatpush1.bf16.msra.mxu0 0
    %2149 = vmatprep.subr.bf16.mxu0 0
    %2150 = vmatpush1.bf16.msra.mxu0 0
    %2151 = vmatprep.subr.bf16.mxu0 0
    %2152 = vmatpush1.bf16.msra.mxu0 0
    %2153 = vmatprep.mubr.bf16.mxu0 0
    %2154 = vmatmul.mubr.bf16.gmra.mrb[0].mxu0 %v2119
    %v2155 = vpop.f32.mrb[0].mxu0
    %v2156 = vadd.f32 0.0, %v2155
    %v2157 = vpop.f32.mrb[0].mxu0
    %v2158 = vpop.f32.mrb[0].mxu0
    %v2159 = vadd.f32 0.0, %v2158
    %v2160 = vpop.f32.mrb[0].mxu0
    %2161 = vdwg.mxu0
    %2164 = vrot.lane.b32.xlu0 %v1914, 8
    %v2165 = vpop.permute.xlu0 %2164
    %2166 = vrot.lane.b32.xlu0 %v1917, 8
    %v2167 = vpop.permute.xlu0 %2166
    %2172 = vrot.lane.b32.xlu0 %v2035, 16
    %v2173 = vpop.permute.xlu0 %2172
    %2174 = vrot.lane.b32.xlu0 %v2038, 16
    %v2175 = vpop.permute.xlu0 %2174
    %2180 = vrot.lane.b32.xlu0 %v2156, 24
    %v2181 = vpop.permute.xlu0 %2180
    %2182 = vrot.lane.b32.xlu0 %v2159, 24
    %v2183 = vpop.permute.xlu0 %2182
    %v2186 = vsel %vm181, %v1792, %v2165
    %v2187 = vsel %vm181, %v1795, %v2167
    %v2188 = vsel %vm229, %v2186, %v2173
    %v2189 = vsel %vm229, %v2187, %v2175
    %v2190 = vsel %vm692, %v2188, %v2181
    %v2191 = vsel %vm692, %v2189, %v2183
    %v2192 = vpack.c.bf16 %v1675, %v1674
    %v2193 = vpack.c.bf16 %v1669, %v1666
    %2195 = vrot.lane.b32.xlu0 %v2193, 96
    %v2196 = vpop.permute.xlu0 %2195
    %v2198 = vsel %vm181, %v2192, 0
    %v2201 = vsel %vm181, %v2196, 0
    %2203 = vmatprep.subr.bf16.mxu0 0
    %2204 = vmatpush1.bf16.xpose.msra.mxu0 %v2201
    %2205 = vmatprep.subr.bf16.mxu0 0
    %2206 = vmatpush1.bf16.xpose.msra.mxu0 0
    %2207 = vmatprep.subr.bf16.mxu0 0
    %2208 = vmatpush1.bf16.xpose.msra.mxu0 0
    %2209 = vmatprep.subr.bf16.mxu0 0
    %2210 = vmatpush1.bf16.xpose.msra.mxu0 0
    %2211 = vmatprep.subr.bf16.mxu0 0
    %2212 = vmatpush1.bf16.xpose.msra.mxu0 0
    %2213 = vmatprep.subr.bf16.mxu0 0
    %2214 = vmatpush1.bf16.xpose.msra.mxu0 0
    %2215 = vmatprep.subr.bf16.mxu0 0
    %2216 = vmatpush1.bf16.xpose.msra.mxu0 0
    %2217 = vmatprep.subr.bf16.mxu0 0
    %2218 = vmatpush1.bf16.xpose.msra.mxu0 0
    %2219 = vmatprep.subr.bf16.mxu0 0
    %2220 = vmatpush1.bf16.xpose.msra.mxu0 0
    %2221 = vmatprep.subr.bf16.mxu0 0
    %2222 = vmatpush1.bf16.xpose.msra.mxu0 0
    %2223 = vmatprep.subr.bf16.mxu0 0
    %2224 = vmatpush1.bf16.xpose.msra.mxu0 0
    %2225 = vmatprep.subr.bf16.mxu0 0
    %2226 = vmatpush1.bf16.xpose.msra.mxu0 0
    %2227 = vmatprep.subr.bf16.mxu0 0
    %2228 = vmatpush1.bf16.xpose.msra.mxu0 0
    %2229 = vmatprep.subr.bf16.mxu0 0
    %2230 = vmatpush1.bf16.xpose.msra.mxu0 0
    %2231 = vmatprep.subr.bf16.mxu0 0
    %2232 = vmatpush1.bf16.xpose.msra.mxu0 0
    %2233 = vmatprep.subr.bf16.mxu0 0
    %2234 = vmatpush1.bf16.xpose.msra.mxu0 0
    %2235 = vmatprep.mubr.bf16.mxu0 0
    %2236 = vmatmul.mubr.bf16.gmra.mrb[0].mxu0 %v2198
    %v2237 = vpop.f32.mrb[0].mxu0
    %v2238 = vadd.f32 %v46, %v2237
    %v2239 = vpop.f32.mrb[0].mxu0
    %v2240 = vpop.f32.mrb[0].mxu0
    %v2241 = vadd.f32 %v47, %v2240
    %v2242 = vpop.f32.mrb[0].mxu0
    %2243 = vdwg.mxu0
    %v2244 = vsel %vm229, %v2238, -inf
    %2245 = vmax.xlane.f32.xlu0 %v2244
    %v2246 = vpop.xlane.xlu0 %2245
    %v2247 = vsel %vm229, %v2241, -inf
    %2248 = vmax.xlane.f32.xlu0 %v2247
    %v2249 = vpop.xlane.xlu0 %2248
    %v2250 = vsub.f32 %v2238, %v2246
    %v2251 = vsub.f32 %v2241, %v2249
    %v2252 = vmul.f32 %v2250, 1.442695
    %v2253 = vpow.pop %v2252
    %v2254 = vmul.f32 %v2251, 1.442695
    %v2255 = vpow.pop %v2254
    %v2256 = vsel %vm229, %v2253, 0.0
    %2257 = vadd.xlane.f32.xlu0 %v2256
    %v2258 = vpop.xlane.xlu0 %2257
    %v2259 = vsel %vm229, %v2255, 0.0
    %2260 = vadd.xlane.f32.xlu0 %v2259
    %v2261 = vpop.xlane.xlu0 %2260
    %v2262 = vrcp.pop %v2258
    %v2263 = vrcp.pop %v2261
    %v2264 = vmul.f32 %v2253, %v2262
    %v2265 = vmul.f32 %v2255, %v2263
    %v2266 = vpack.c.bf16 %v2265, %v2264
    %2267 = vrot.lane.b32.xlu0 %v2193, 64
    %v2268 = vpop.permute.xlu0 %2267
    %v2271 = vsel %vm229, %v2266, 0
    %2273 = vmatprep.subr.bf16.mxu0 0
    %2274 = vmatpush1.bf16.msra.mxu0 %v2268
    %2275 = vmatprep.subr.bf16.mxu0 0
    %2276 = vmatpush1.bf16.msra.mxu0 0
    %2277 = vmatprep.subr.bf16.mxu0 0
    %2278 = vmatpush1.bf16.msra.mxu0 0
    %2279 = vmatprep.subr.bf16.mxu0 0
    %2280 = vmatpush1.bf16.msra.mxu0 0
    %2281 = vmatprep.subr.bf16.mxu0 0
    %2282 = vmatpush1.bf16.msra.mxu0 0
    %2283 = vmatprep.subr.bf16.mxu0 0
    %2284 = vmatpush1.bf16.msra.mxu0 0
    %2285 = vmatprep.subr.bf16.mxu0 0
    %2286 = vmatpush1.bf16.msra.mxu0 0
    %2287 = vmatprep.subr.bf16.mxu0 0
    %2288 = vmatpush1.bf16.msra.mxu0 0
    %2289 = vmatprep.subr.bf16.mxu0 0
    %2290 = vmatpush1.bf16.msra.mxu0 0
    %2291 = vmatprep.subr.bf16.mxu0 0
    %2292 = vmatpush1.bf16.msra.mxu0 0
    %2293 = vmatprep.subr.bf16.mxu0 0
    %2294 = vmatpush1.bf16.msra.mxu0 0
    %2295 = vmatprep.subr.bf16.mxu0 0
    %2296 = vmatpush1.bf16.msra.mxu0 0
    %2297 = vmatprep.subr.bf16.mxu0 0
    %2298 = vmatpush1.bf16.msra.mxu0 0
    %2299 = vmatprep.subr.bf16.mxu0 0
    %2300 = vmatpush1.bf16.msra.mxu0 0
    %2301 = vmatprep.subr.bf16.mxu0 0
    %2302 = vmatpush1.bf16.msra.mxu0 0
    %2303 = vmatprep.subr.bf16.mxu0 0
    %2304 = vmatpush1.bf16.msra.mxu0 0
    %2305 = vmatprep.mubr.bf16.mxu0 0
    %2306 = vmatmul.mubr.bf16.gmra.mrb[0].mxu0 %v2271
    %v2307 = vpop.f32.mrb[0].mxu0
    %v2308 = vadd.f32 0.0, %v2307
    %v2309 = vpop.f32.mrb[0].mxu0
    %v2310 = vpop.f32.mrb[0].mxu0
    %v2311 = vadd.f32 0.0, %v2310
    %v2312 = vpop.f32.mrb[0].mxu0
    %2313 = vdwg.mxu0
    %2315 = vrot.lane.b32.xlu0 %v2192, 120
    %v2316 = vpop.permute.xlu0 %2315
    %2317 = vrot.lane.b32.xlu0 %v2193, 88
    %v2318 = vpop.permute.xlu0 %2317
    %v2320 = vsel %vm181, %v2316, 0
    %v2323 = vsel %vm181, %v2318, 0
    %2325 = vmatprep.subr.bf16.mxu0 0
    %2326 = vmatpush1.bf16.xpose.msra.mxu0 %v2323
    %2327 = vmatprep.subr.bf16.mxu0 0
    %2328 = vmatpush1.bf16.xpose.msra.mxu0 0
    %2329 = vmatprep.subr.bf16.mxu0 0
    %2330 = vmatpush1.bf16.xpose.msra.mxu0 0
    %2331 = vmatprep.subr.bf16.mxu0 0
    %2332 = vmatpush1.bf16.xpose.msra.mxu0 0
    %2333 = vmatprep.subr.bf16.mxu0 0
    %2334 = vmatpush1.bf16.xpose.msra.mxu0 0
    %2335 = vmatprep.subr.bf16.mxu0 0
    %2336 = vmatpush1.bf16.xpose.msra.mxu0 0
    %2337 = vmatprep.subr.bf16.mxu0 0
    %2338 = vmatpush1.bf16.xpose.msra.mxu0 0
    %2339 = vmatprep.subr.bf16.mxu0 0
    %2340 = vmatpush1.bf16.xpose.msra.mxu0 0
    %2341 = vmatprep.subr.bf16.mxu0 0
    %2342 = vmatpush1.bf16.xpose.msra.mxu0 0
    %2343 = vmatprep.subr.bf16.mxu0 0
    %2344 = vmatpush1.bf16.xpose.msra.mxu0 0
    %2345 = vmatprep.subr.bf16.mxu0 0
    %2346 = vmatpush1.bf16.xpose.msra.mxu0 0
    %2347 = vmatprep.subr.bf16.mxu0 0
    %2348 = vmatpush1.bf16.xpose.msra.mxu0 0
    %2349 = vmatprep.subr.bf16.mxu0 0
    %2350 = vmatpush1.bf16.xpose.msra.mxu0 0
    %2351 = vmatprep.subr.bf16.mxu0 0
    %2352 = vmatpush1.bf16.xpose.msra.mxu0 0
    %2353 = vmatprep.subr.bf16.mxu0 0
    %2354 = vmatpush1.bf16.xpose.msra.mxu0 0
    %2355 = vmatprep.subr.bf16.mxu0 0
    %2356 = vmatpush1.bf16.xpose.msra.mxu0 0
    %2357 = vmatprep.mubr.bf16.mxu0 0
    %2358 = vmatmul.mubr.bf16.gmra.mrb[0].mxu0 %v2320
    %v2359 = vpop.f32.mrb[0].mxu0
    %v2360 = vadd.f32 %v48, %v2359
    %v2361 = vpop.f32.mrb[0].mxu0
    %v2362 = vpop.f32.mrb[0].mxu0
    %v2363 = vadd.f32 %v49, %v2362
    %v2364 = vpop.f32.mrb[0].mxu0
    %2365 = vdwg.mxu0
    %v2366 = vsel %vm229, %v2360, -inf
    %2367 = vmax.xlane.f32.xlu0 %v2366
    %v2368 = vpop.xlane.xlu0 %2367
    %v2369 = vsel %vm229, %v2363, -inf
    %2370 = vmax.xlane.f32.xlu0 %v2369
    %v2371 = vpop.xlane.xlu0 %2370
    %v2372 = vsub.f32 %v2360, %v2368
    %v2373 = vsub.f32 %v2363, %v2371
    %v2374 = vmul.f32 %v2372, 1.442695
    %v2375 = vpow.pop %v2374
    %v2376 = vmul.f32 %v2373, 1.442695
    %v2377 = vpow.pop %v2376
    %v2378 = vsel %vm229, %v2375, 0.0
    %2379 = vadd.xlane.f32.xlu0 %v2378
    %v2380 = vpop.xlane.xlu0 %2379
    %v2381 = vsel %vm229, %v2377, 0.0
    %2382 = vadd.xlane.f32.xlu0 %v2381
    %v2383 = vpop.xlane.xlu0 %2382
    %v2384 = vrcp.pop %v2380
    %v2385 = vrcp.pop %v2383
    %v2386 = vmul.f32 %v2375, %v2384
    %v2387 = vmul.f32 %v2377, %v2385
    %v2388 = vpack.c.bf16 %v2387, %v2386
    %2389 = vrot.lane.b32.xlu0 %v2193, 56
    %v2390 = vpop.permute.xlu0 %2389
    %v2393 = vsel %vm229, %v2388, 0
    %2395 = vmatprep.subr.bf16.mxu0 0
    %2396 = vmatpush1.bf16.msra.mxu0 %v2390
    %2397 = vmatprep.subr.bf16.mxu0 0
    %2398 = vmatpush1.bf16.msra.mxu0 0
    %2399 = vmatprep.subr.bf16.mxu0 0
    %2400 = vmatpush1.bf16.msra.mxu0 0
    %2401 = vmatprep.subr.bf16.mxu0 0
    %2402 = vmatpush1.bf16.msra.mxu0 0
    %2403 = vmatprep.subr.bf16.mxu0 0
    %2404 = vmatpush1.bf16.msra.mxu0 0
    %2405 = vmatprep.subr.bf16.mxu0 0
    %2406 = vmatpush1.bf16.msra.mxu0 0
    %2407 = vmatprep.subr.bf16.mxu0 0
    %2408 = vmatpush1.bf16.msra.mxu0 0
    %2409 = vmatprep.subr.bf16.mxu0 0
    %2410 = vmatpush1.bf16.msra.mxu0 0
    %2411 = vmatprep.subr.bf16.mxu0 0
    %2412 = vmatpush1.bf16.msra.mxu0 0
    %2413 = vmatprep.subr.bf16.mxu0 0
    %2414 = vmatpush1.bf16.msra.mxu0 0
    %2415 = vmatprep.subr.bf16.mxu0 0
    %2416 = vmatpush1.bf16.msra.mxu0 0
    %2417 = vmatprep.subr.bf16.mxu0 0
    %2418 = vmatpush1.bf16.msra.mxu0 0
    %2419 = vmatprep.subr.bf16.mxu0 0
    %2420 = vmatpush1.bf16.msra.mxu0 0
    %2421 = vmatprep.subr.bf16.mxu0 0
    %2422 = vmatpush1.bf16.msra.mxu0 0
    %2423 = vmatprep.subr.bf16.mxu0 0
    %2424 = vmatpush1.bf16.msra.mxu0 0
    %2425 = vmatprep.subr.bf16.mxu0 0
    %2426 = vmatpush1.bf16.msra.mxu0 0
    %2427 = vmatprep.mubr.bf16.mxu0 0
    %2428 = vmatmul.mubr.bf16.gmra.mrb[0].mxu0 %v2393
    %v2429 = vpop.f32.mrb[0].mxu0
    %v2430 = vadd.f32 0.0, %v2429
    %v2431 = vpop.f32.mrb[0].mxu0
    %v2432 = vpop.f32.mrb[0].mxu0
    %v2433 = vadd.f32 0.0, %v2432
    %v2434 = vpop.f32.mrb[0].mxu0
    %2435 = vdwg.mxu0
    %2436 = vrot.lane.b32.xlu0 %v2192, 112
    %v2437 = vpop.permute.xlu0 %2436
    %2438 = vrot.lane.b32.xlu0 %v2193, 80
    %v2439 = vpop.permute.xlu0 %2438
    %v2441 = vsel %vm181, %v2437, 0
    %v2444 = vsel %vm181, %v2439, 0
    %2446 = vmatprep.subr.bf16.mxu0 0
    %2447 = vmatpush1.bf16.xpose.msra.mxu0 %v2444
    %2448 = vmatprep.subr.bf16.mxu0 0
    %2449 = vmatpush1.bf16.xpose.msra.mxu0 0
    %2450 = vmatprep.subr.bf16.mxu0 0
    %2451 = vmatpush1.bf16.xpose.msra.mxu0 0
    %2452 = vmatprep.subr.bf16.mxu0 0
    %2453 = vmatpush1.bf16.xpose.msra.mxu0 0
    %2454 = vmatprep.subr.bf16.mxu0 0
    %2455 = vmatpush1.bf16.xpose.msra.mxu0 0
    %2456 = vmatprep.subr.bf16.mxu0 0
    %2457 = vmatpush1.bf16.xpose.msra.mxu0 0
    %2458 = vmatprep.subr.bf16.mxu0 0
    %2459 = vmatpush1.bf16.xpose.msra.mxu0 0
    %2460 = vmatprep.subr.bf16.mxu0 0
    %2461 = vmatpush1.bf16.xpose.msra.mxu0 0
    %2462 = vmatprep.subr.bf16.mxu0 0
    %2463 = vmatpush1.bf16.xpose.msra.mxu0 0
    %2464 = vmatprep.subr.bf16.mxu0 0
    %2465 = vmatpush1.bf16.xpose.msra.mxu0 0
    %2466 = vmatprep.subr.bf16.mxu0 0
    %2467 = vmatpush1.bf16.xpose.msra.mxu0 0
    %2468 = vmatprep.subr.bf16.mxu0 0
    %2469 = vmatpush1.bf16.xpose.msra.mxu0 0
    %2470 = vmatprep.subr.bf16.mxu0 0
    %2471 = vmatpush1.bf16.xpose.msra.mxu0 0
    %2472 = vmatprep.subr.bf16.mxu0 0
    %2473 = vmatpush1.bf16.xpose.msra.mxu0 0
    %2474 = vmatprep.subr.bf16.mxu0 0
    %2475 = vmatpush1.bf16.xpose.msra.mxu0 0
    %2476 = vmatprep.subr.bf16.mxu0 0
    %2477 = vmatpush1.bf16.xpose.msra.mxu0 0
    %2478 = vmatprep.mubr.bf16.mxu0 0
    %2479 = vmatmul.mubr.bf16.gmra.mrb[0].mxu0 %v2441
    %v2480 = vpop.f32.mrb[0].mxu0
    %v2481 = vadd.f32 %v50, %v2480
    %v2482 = vpop.f32.mrb[0].mxu0
    %v2483 = vpop.f32.mrb[0].mxu0
    %v2484 = vadd.f32 %v51, %v2483
    %v2485 = vpop.f32.mrb[0].mxu0
    %2486 = vdwg.mxu0
    %v2487 = vsel %vm229, %v2481, -inf
    %2488 = vmax.xlane.f32.xlu0 %v2487
    %v2489 = vpop.xlane.xlu0 %2488
    %v2490 = vsel %vm229, %v2484, -inf
    %2491 = vmax.xlane.f32.xlu0 %v2490
    %v2492 = vpop.xlane.xlu0 %2491
    %v2493 = vsub.f32 %v2481, %v2489
    %v2494 = vsub.f32 %v2484, %v2492
    %v2495 = vmul.f32 %v2493, 1.442695
    %v2496 = vpow.pop %v2495
    %v2497 = vmul.f32 %v2494, 1.442695
    %v2498 = vpow.pop %v2497
    %v2499 = vsel %vm229, %v2496, 0.0
    %2500 = vadd.xlane.f32.xlu0 %v2499
    %v2501 = vpop.xlane.xlu0 %2500
    %v2502 = vsel %vm229, %v2498, 0.0
    %2503 = vadd.xlane.f32.xlu0 %v2502
    %v2504 = vpop.xlane.xlu0 %2503
    %v2505 = vrcp.pop %v2501
    %v2506 = vrcp.pop %v2504
    %v2507 = vmul.f32 %v2496, %v2505
    %v2508 = vmul.f32 %v2498, %v2506
    %v2509 = vpack.c.bf16 %v2508, %v2507
    %2510 = vrot.lane.b32.xlu0 %v2193, 48
    %v2511 = vpop.permute.xlu0 %2510
    %v2514 = vsel %vm229, %v2509, 0
    %2516 = vmatprep.subr.bf16.mxu0 0
    %2517 = vmatpush1.bf16.msra.mxu0 %v2511
    %2518 = vmatprep.subr.bf16.mxu0 0
    %2519 = vmatpush1.bf16.msra.mxu0 0
    %2520 = vmatprep.subr.bf16.mxu0 0
    %2521 = vmatpush1.bf16.msra.mxu0 0
    %2522 = vmatprep.subr.bf16.mxu0 0
    %2523 = vmatpush1.bf16.msra.mxu0 0
    %2524 = vmatprep.subr.bf16.mxu0 0
    %2525 = vmatpush1.bf16.msra.mxu0 0
    %2526 = vmatprep.subr.bf16.mxu0 0
    %2527 = vmatpush1.bf16.msra.mxu0 0
    %2528 = vmatprep.subr.bf16.mxu0 0
    %2529 = vmatpush1.bf16.msra.mxu0 0
    %2530 = vmatprep.subr.bf16.mxu0 0
    %2531 = vmatpush1.bf16.msra.mxu0 0
    %2532 = vmatprep.subr.bf16.mxu0 0
    %2533 = vmatpush1.bf16.msra.mxu0 0
    %2534 = vmatprep.subr.bf16.mxu0 0
    %2535 = vmatpush1.bf16.msra.mxu0 0
    %2536 = vmatprep.subr.bf16.mxu0 0
    %2537 = vmatpush1.bf16.msra.mxu0 0
    %2538 = vmatprep.subr.bf16.mxu0 0
    %2539 = vmatpush1.bf16.msra.mxu0 0
    %2540 = vmatprep.subr.bf16.mxu0 0
    %2541 = vmatpush1.bf16.msra.mxu0 0
    %2542 = vmatprep.subr.bf16.mxu0 0
    %2543 = vmatpush1.bf16.msra.mxu0 0
    %2544 = vmatprep.subr.bf16.mxu0 0
    %2545 = vmatpush1.bf16.msra.mxu0 0
    %2546 = vmatprep.subr.bf16.mxu0 0
    %2547 = vmatpush1.bf16.msra.mxu0 0
    %2548 = vmatprep.mubr.bf16.mxu0 0
    %2549 = vmatmul.mubr.bf16.gmra.mrb[0].mxu0 %v2514
    %v2550 = vpop.f32.mrb[0].mxu0
    %v2551 = vadd.f32 0.0, %v2550
    %v2552 = vpop.f32.mrb[0].mxu0
    %v2553 = vpop.f32.mrb[0].mxu0
    %v2554 = vadd.f32 0.0, %v2553
    %v2555 = vpop.f32.mrb[0].mxu0
    %2556 = vdwg.mxu0
    %2557 = vrot.lane.b32.xlu0 %v2192, 104
    %v2558 = vpop.permute.xlu0 %2557
    %2559 = vrot.lane.b32.xlu0 %v2193, 72
    %v2560 = vpop.permute.xlu0 %2559
    %v2562 = vsel %vm181, %v2558, 0
    %v2565 = vsel %vm181, %v2560, 0
    %2567 = vmatprep.subr.bf16.mxu0 0
    %2568 = vmatpush1.bf16.xpose.msra.mxu0 %v2565
    %2569 = vmatprep.subr.bf16.mxu0 0
    %2570 = vmatpush1.bf16.xpose.msra.mxu0 0
    %2571 = vmatprep.subr.bf16.mxu0 0
    %2572 = vmatpush1.bf16.xpose.msra.mxu0 0
    %2573 = vmatprep.subr.bf16.mxu0 0
    %2574 = vmatpush1.bf16.xpose.msra.mxu0 0
    %2575 = vmatprep.subr.bf16.mxu0 0
    %2576 = vmatpush1.bf16.xpose.msra.mxu0 0
    %2577 = vmatprep.subr.bf16.mxu0 0
    %2578 = vmatpush1.bf16.xpose.msra.mxu0 0
    %2579 = vmatprep.subr.bf16.mxu0 0
    %2580 = vmatpush1.bf16.xpose.msra.mxu0 0
    %2581 = vmatprep.subr.bf16.mxu0 0
    %2582 = vmatpush1.bf16.xpose.msra.mxu0 0
    %2583 = vmatprep.subr.bf16.mxu0 0
    %2584 = vmatpush1.bf16.xpose.msra.mxu0 0
    %2585 = vmatprep.subr.bf16.mxu0 0
    %2586 = vmatpush1.bf16.xpose.msra.mxu0 0
    %2587 = vmatprep.subr.bf16.mxu0 0
    %2588 = vmatpush1.bf16.xpose.msra.mxu0 0
    %2589 = vmatprep.subr.bf16.mxu0 0
    %2590 = vmatpush1.bf16.xpose.msra.mxu0 0
    %2591 = vmatprep.subr.bf16.mxu0 0
    %2592 = vmatpush1.bf16.xpose.msra.mxu0 0
    %2593 = vmatprep.subr.bf16.mxu0 0
    %2594 = vmatpush1.bf16.xpose.msra.mxu0 0
    %2595 = vmatprep.subr.bf16.mxu0 0
    %2596 = vmatpush1.bf16.xpose.msra.mxu0 0
    %2597 = vmatprep.subr.bf16.mxu0 0
    %2598 = vmatpush1.bf16.xpose.msra.mxu0 0
    %2599 = vmatprep.mubr.bf16.mxu0 0
    %2600 = vmatmul.mubr.bf16.gmra.mrb[0].mxu0 %v2562
    %v2601 = vpop.f32.mrb[0].mxu0
    %v2602 = vadd.f32 %v52, %v2601
    %v2603 = vpop.f32.mrb[0].mxu0
    %v2604 = vpop.f32.mrb[0].mxu0
    %v2605 = vadd.f32 %v53, %v2604
    %v2606 = vpop.f32.mrb[0].mxu0
    %2607 = vdwg.mxu0
    %v2608 = vsel %vm229, %v2602, -inf
    %2609 = vmax.xlane.f32.xlu0 %v2608
    %v2610 = vpop.xlane.xlu0 %2609
    %v2611 = vsel %vm229, %v2605, -inf
    %2612 = vmax.xlane.f32.xlu0 %v2611
    %v2613 = vpop.xlane.xlu0 %2612
    %v2614 = vsub.f32 %v2602, %v2610
    %v2615 = vsub.f32 %v2605, %v2613
    %v2616 = vmul.f32 %v2614, 1.442695
    %v2617 = vpow.pop %v2616
    %v2618 = vmul.f32 %v2615, 1.442695
    %v2619 = vpow.pop %v2618
    %v2620 = vsel %vm229, %v2617, 0.0
    %2621 = vadd.xlane.f32.xlu0 %v2620
    %v2622 = vpop.xlane.xlu0 %2621
    %v2623 = vsel %vm229, %v2619, 0.0
    %2624 = vadd.xlane.f32.xlu0 %v2623
    %v2625 = vpop.xlane.xlu0 %2624
    %v2626 = vrcp.pop %v2622
    %v2627 = vrcp.pop %v2625
    %v2628 = vmul.f32 %v2617, %v2626
    %v2629 = vmul.f32 %v2619, %v2627
    %v2630 = vpack.c.bf16 %v2629, %v2628
    %2631 = vrot.lane.b32.xlu0 %v2193, 40
    %v2632 = vpop.permute.xlu0 %2631
    %v2635 = vsel %vm229, %v2630, 0
    %2637 = vmatprep.subr.bf16.mxu0 0
    %2638 = vmatpush1.bf16.msra.mxu0 %v2632
    %2639 = vmatprep.subr.bf16.mxu0 0
    %2640 = vmatpush1.bf16.msra.mxu0 0
    %2641 = vmatprep.subr.bf16.mxu0 0
    %2642 = vmatpush1.bf16.msra.mxu0 0
    %2643 = vmatprep.subr.bf16.mxu0 0
    %2644 = vmatpush1.bf16.msra.mxu0 0
    %2645 = vmatprep.subr.bf16.mxu0 0
    %2646 = vmatpush1.bf16.msra.mxu0 0
    %2647 = vmatprep.subr.bf16.mxu0 0
    %2648 = vmatpush1.bf16.msra.mxu0 0
    %2649 = vmatprep.subr.bf16.mxu0 0
    %2650 = vmatpush1.bf16.msra.mxu0 0
    %2651 = vmatprep.subr.bf16.mxu0 0
    %2652 = vmatpush1.bf16.msra.mxu0 0
    %2653 = vmatprep.subr.bf16.mxu0 0
    %2654 = vmatpush1.bf16.msra.mxu0 0
    %2655 = vmatprep.subr.bf16.mxu0 0
    %2656 = vmatpush1.bf16.msra.mxu0 0
    %2657 = vmatprep.subr.bf16.mxu0 0
    %2658 = vmatpush1.bf16.msra.mxu0 0
    %2659 = vmatprep.subr.bf16.mxu0 0
    %2660 = vmatpush1.bf16.msra.mxu0 0
    %2661 = vmatprep.subr.bf16.mxu0 0
    %2662 = vmatpush1.bf16.msra.mxu0 0
    %2663 = vmatprep.subr.bf16.mxu0 0
    %2664 = vmatpush1.bf16.msra.mxu0 0
    %2665 = vmatprep.subr.bf16.mxu0 0
    %2666 = vmatpush1.bf16.msra.mxu0 0
    %2667 = vmatprep.subr.bf16.mxu0 0
    %2668 = vmatpush1.bf16.msra.mxu0 0
    %2669 = vmatprep.mubr.bf16.mxu0 0
    %2670 = vmatmul.mubr.bf16.gmra.mrb[0].mxu0 %v2635
    %v2671 = vpop.f32.mrb[0].mxu0
    %v2672 = vadd.f32 0.0, %v2671
    %v2673 = vpop.f32.mrb[0].mxu0
    %v2674 = vpop.f32.mrb[0].mxu0
    %v2675 = vadd.f32 0.0, %v2674
    %v2676 = vpop.f32.mrb[0].mxu0
    %2677 = vdwg.mxu0
    %2680 = vrot.lane.b32.xlu0 %v2430, 8
    %v2681 = vpop.permute.xlu0 %2680
    %2682 = vrot.lane.b32.xlu0 %v2433, 8
    %v2683 = vpop.permute.xlu0 %2682
    %2688 = vrot.lane.b32.xlu0 %v2551, 16
    %v2689 = vpop.permute.xlu0 %2688
    %2690 = vrot.lane.b32.xlu0 %v2554, 16
    %v2691 = vpop.permute.xlu0 %2690
    %2696 = vrot.lane.b32.xlu0 %v2672, 24
    %v2697 = vpop.permute.xlu0 %2696
    %2698 = vrot.lane.b32.xlu0 %v2675, 24
    %v2699 = vpop.permute.xlu0 %2698
    %v2702 = vsel %vm181, %v2308, %v2681
    %v2703 = vsel %vm181, %v2311, %v2683
    %v2704 = vsel %vm229, %v2702, %v2689
    %v2705 = vsel %vm229, %v2703, %v2691
    %v2706 = vsel %vm692, %v2704, %v2697
    %v2707 = vsel %vm692, %v2705, %v2699
    %v2708 = vpack.c.bf16 %v2191, %v2190
    %v2709 = vpack.c.bf16 %v2707, %v2706
    %s2710 = scalar_lea.vmem %s4, 16
    %v2711 = vld [vmem:[%s2710] sm:$0xf]
    %v2712 = vld [vmem:[%s2710 + $0x4] sm:$0xf]
    %v2713 = vld [vmem:[%s2710 + $0x8] sm:$0xf]
    %v2714 = vld [vmem:[%s2710 + $0xc] sm:$0xf]
    %v2719 = vunpack.c.l.b16 %v2711
    %v2720 = vunpack.c.l.b16 %v2712
    %v2721 = vunpack.c.l.b16 %v2713
    %v2722 = vunpack.c.l.b16 %v2714
    %v2723 = vpack.c.b16 %v2720, %v2719
    %v2724 = vpack.c.b16 %v2722, %v2721
    %v2728 = vsel %vm59, %v2708, 0
    %v2731 = vsel %vm59, %v2709, 0
    %2733 = vmatprep.subr.bf16.mxu0 0
    %2734 = vmatpush1.bf16.msra.mxu0 %v2723
    %2735 = vmatprep.subr.bf16.mxu0 0
    %2736 = vmatpush1.bf16.msra.mxu0 %v2724
    %2737 = vmatprep.subr.bf16.mxu0 0
    %2738 = vmatpush1.bf16.msra.mxu0 0
    %2739 = vmatprep.subr.bf16.mxu0 0
    %2740 = vmatpush1.bf16.msra.mxu0 0
    %2741 = vmatprep.subr.bf16.mxu0 0
    %2742 = vmatpush1.bf16.msra.mxu0 0
    %2743 = vmatprep.subr.bf16.mxu0 0
    %2744 = vmatpush1.bf16.msra.mxu0 0
    %2745 = vmatprep.subr.bf16.mxu0 0
    %2746 = vmatpush1.bf16.msra.mxu0 0
    %2747 = vmatprep.subr.bf16.mxu0 0
    %2748 = vmatpush1.bf16.msra.mxu0 0
    %2749 = vmatprep.subr.bf16.mxu0 0
    %2750 = vmatpush1.bf16.msra.mxu0 0
    %2751 = vmatprep.subr.bf16.mxu0 0
    %2752 = vmatpush1.bf16.msra.mxu0 0
    %2753 = vmatprep.subr.bf16.mxu0 0
    %2754 = vmatpush1.bf16.msra.mxu0 0
    %2755 = vmatprep.subr.bf16.mxu0 0
    %2756 = vmatpush1.bf16.msra.mxu0 0
    %2757 = vmatprep.subr.bf16.mxu0 0
    %2758 = vmatpush1.bf16.msra.mxu0 0
    %2759 = vmatprep.subr.bf16.mxu0 0
    %2760 = vmatpush1.bf16.msra.mxu0 0
    %2761 = vmatprep.subr.bf16.mxu0 0
    %2762 = vmatpush1.bf16.msra.mxu0 0
    %2763 = vmatprep.subr.bf16.mxu0 0
    %2764 = vmatpush1.bf16.msra.mxu0 0
    %2765 = vmatprep.mubr.bf16.mxu0 0
    %2766 = vmatmul.mubr.bf16.gmra.mrb[0].mxu0 %v2728
    %v2767 = vpop.f32.mrb[0].mxu0
    %v2768 = vadd.f32 0.0, %v2767
    %v2769 = vpop.f32.mrb[0].mxu0
    %v2770 = vpop.f32.mrb[0].mxu0
    %v2771 = vadd.f32 0.0, %v2770
    %v2772 = vpop.f32.mrb[0].mxu0
    %2773 = vmatprep.mubr.bf16.mxu0 0
    %2774 = vmatmul.mubr.bf16.gmra.mrb[0].mxu0 %v2731
    %v2775 = vpop.f32.mrb[0].mxu0
    %v2776 = vadd.f32 0.0, %v2775
    %v2777 = vpop.f32.mrb[0].mxu0
    %v2778 = vpop.f32.mrb[0].mxu0
    %v2779 = vadd.f32 0.0, %v2778
    %v2780 = vpop.f32.mrb[0].mxu0
    %2781 = vdwg.mxu0
    %v2782 = vadd.f32 %v1550, %v2768
    %v2783 = vadd.f32 %v1551, %v2771
    %v2784 = vadd.f32 %v1552, %v2776
    %v2785 = vadd.f32 %v1553, %v2779
    %s2786 = scalar_lea.vmem %s5, 1
    %v2787 = vld [vmem:[%s2786] sm:$0x1]
    %v2788 = vmul.f32 %v2782, %v2782
    %v2789 = vmul.f32 %v2783, %v2783
    %v2790 = vmul.f32 %v2784, %v2784
    %v2791 = vmul.f32 %v2785, %v2785
    %v2792 = vsel %vm59, %v2788, 0.0
    %2793 = vadd.xlane.f32.xlu0 %v2792
    %v2794 = vpop.xlane.xlu0 %2793
    %v2795 = vsel %vm59, %v2789, 0.0
    %2796 = vadd.xlane.f32.xlu0 %v2795
    %v2797 = vpop.xlane.xlu0 %2796
    %v2798 = vsel %vm59, %v2790, 0.0
    %2799 = vadd.xlane.f32.xlu0 %v2798
    %v2800 = vpop.xlane.xlu0 %2799
    %v2801 = vsel %vm59, %v2791, 0.0
    %2802 = vadd.xlane.f32.xlu0 %v2801
    %v2803 = vpop.xlane.xlu0 %2802
    %v2804 = vmul.f32 %v2794, %v72
    %v2805 = vmul.f32 %v2797, %v72
    %v2806 = vmul.f32 %v2800, %v72
    %v2807 = vmul.f32 %v2803, %v72
    %v2808 = vadd.f32 %v2804, 1e-06
    %v2809 = vadd.f32 %v2805, 1e-06
    %v2810 = vadd.f32 %v2806, 1e-06
    %v2811 = vadd.f32 %v2807, 1e-06
    %v2812 = vrsqrt.pop %v2808
    %v2813 = vrsqrt.pop %v2809
    %v2814 = vrsqrt.pop %v2810
    %v2815 = vrsqrt.pop %v2811
    %v2816 = vmul.f32 %v2782, %v2812
    %v2817 = vmul.f32 %v2783, %v2813
    %v2818 = vmul.f32 %v2784, %v2814
    %v2819 = vmul.f32 %v2785, %v2815
    %v2821 = vlaneseq
    %v2822 = vshrl.u32 %v2821, 7
    %v2823 = vsub.s32 0, %v2822
    %v2824 = vrot.slane %v2787, %v2823
    %v2826 = vmul.f32 %v2824, %v2816
    %v2827 = vmul.f32 %v2824, %v2817
    %v2828 = vmul.f32 %v2824, %v2818
    %v2829 = vmul.f32 %v2824, %v2819
    %v2830 = vpack.c.bf16 %v2827, %v2826
    %v2831 = vpack.c.bf16 %v2829, %v2828
    %s2832 = scalar_lea.vmem %s6, 16
    %v2833 = vld [vmem:[%s2832] sm:$0xf]
    %v2834 = vld [vmem:[%s2832 + $0x4] sm:$0xf]
    %v2835 = vld [vmem:[%s2832 + $0x8] sm:$0xf]
    %v2836 = vld [vmem:[%s2832 + $0xc] sm:$0xf]
    %v2841 = vunpack.c.l.b16 %v2833
    %v2842 = vunpack.c.l.b16 %v2834
    %v2843 = vunpack.c.l.b16 %v2835
    %v2844 = vunpack.c.l.b16 %v2836
    %v2845 = vpack.c.b16 %v2842, %v2841
    %v2846 = vpack.c.b16 %v2844, %v2843
    %v2850 = vsel %vm59, %v2830, 0
    %v2853 = vsel %vm59, %v2831, 0
    %2855 = vmatprep.subr.bf16.mxu0 0
    %2856 = vmatpush1.bf16.msra.mxu0 %v2845
    %2857 = vmatprep.subr.bf16.mxu0 0
    %2858 = vmatpush1.bf16.msra.mxu0 %v2846
    %2859 = vmatprep.subr.bf16.mxu0 0
    %2860 = vmatpush1.bf16.msra.mxu0 0
    %2861 = vmatprep.subr.bf16.mxu0 0
    %2862 = vmatpush1.bf16.msra.mxu0 0
    %2863 = vmatprep.subr.bf16.mxu0 0
    %2864 = vmatpush1.bf16.msra.mxu0 0
    %2865 = vmatprep.subr.bf16.mxu0 0
    %2866 = vmatpush1.bf16.msra.mxu0 0
    %2867 = vmatprep.subr.bf16.mxu0 0
    %2868 = vmatpush1.bf16.msra.mxu0 0
    %2869 = vmatprep.subr.bf16.mxu0 0
    %2870 = vmatpush1.bf16.msra.mxu0 0
    %2871 = vmatprep.subr.bf16.mxu0 0
    %2872 = vmatpush1.bf16.msra.mxu0 0
    %2873 = vmatprep.subr.bf16.mxu0 0
    %2874 = vmatpush1.bf16.msra.mxu0 0
    %2875 = vmatprep.subr.bf16.mxu0 0
    %2876 = vmatpush1.bf16.msra.mxu0 0
    %2877 = vmatprep.subr.bf16.mxu0 0
    %2878 = vmatpush1.bf16.msra.mxu0 0
    %2879 = vmatprep.subr.bf16.mxu0 0
    %2880 = vmatpush1.bf16.msra.mxu0 0
    %2881 = vmatprep.subr.bf16.mxu0 0
    %2882 = vmatpush1.bf16.msra.mxu0 0
    %2883 = vmatprep.subr.bf16.mxu0 0
    %2884 = vmatpush1.bf16.msra.mxu0 0
    %2885 = vmatprep.subr.bf16.mxu0 0
    %2886 = vmatpush1.bf16.msra.mxu0 0
    %2887 = vmatprep.mubr.bf16.mxu0 0
    %2888 = vmatmul.mubr.bf16.gmra.mrb[0].mxu0 %v2850
    %v2889 = vpop.f32.mrb[0].mxu0
    %v2890 = vadd.f32 0.0, %v2889
    %v2891 = vpop.f32.mrb[0].mxu0
    %v2892 = vpop.f32.mrb[0].mxu0
    %v2893 = vadd.f32 0.0, %v2892
    %v2894 = vpop.f32.mrb[0].mxu0
    %2895 = vmatprep.mubr.bf16.mxu0 0
    %2896 = vmatmul.mubr.bf16.gmra.mrb[0].mxu0 %v2853
    %v2897 = vpop.f32.mrb[0].mxu0
    %v2898 = vadd.f32 0.0, %v2897
    %v2899 = vpop.f32.mrb[0].mxu0
    %v2900 = vpop.f32.mrb[0].mxu0
    %v2901 = vadd.f32 0.0, %v2900
    %v2902 = vpop.f32.mrb[0].mxu0
    %2903 = vdwg.mxu0
    %v2904 = vmul.f32 %v2890, %v2890
    %v2905 = vmul.f32 %v2893, %v2893
    %v2906 = vmul.f32 %v2898, %v2898
    %v2907 = vmul.f32 %v2901, %v2901
    %v2908 = vmul.f32 %v2890, %v2904
    %v2909 = vmul.f32 %v2893, %v2905
    %v2910 = vmul.f32 %v2898, %v2906
    %v2911 = vmul.f32 %v2901, %v2907
    %v2912 = vmul.f32 %v2908, 0.044715
    %v2913 = vmul.f32 %v2909, 0.044715
    %v2914 = vmul.f32 %v2910, 0.044715
    %v2915 = vmul.f32 %v2911, 0.044715
    %v2916 = vadd.f32 %v2890, %v2912
    %v2917 = vadd.f32 %v2893, %v2913
    %v2918 = vadd.f32 %v2898, %v2914
    %v2919 = vadd.f32 %v2901, %v2915
    %v2920 = vmul.f32 %v2916, 0.7978846
    %v2921 = vmul.f32 %v2917, 0.7978846
    %v2922 = vmul.f32 %v2918, 0.7978846
    %v2923 = vmul.f32 %v2919, 0.7978846
    %v2924 = vtanh.pop %v2920
    %v2925 = vtanh.pop %v2921
    %v2926 = vtanh.pop %v2922
    %v2927 = vtanh.pop %v2923
    %v2928 = vadd.f32 %v2924, 1.0
    %v2929 = vadd.f32 %v2925, 1.0
    %v2930 = vadd.f32 %v2926, 1.0
    %v2931 = vadd.f32 %v2927, 1.0
    %v2932 = vmul.f32 %v2928, 0.5
    %v2933 = vmul.f32 %v2929, 0.5
    %v2934 = vmul.f32 %v2930, 0.5
    %v2935 = vmul.f32 %v2931, 0.5
    %v2936 = vmul.f32 %v2890, %v2932
    %v2937 = vmul.f32 %v2893, %v2933
    %v2938 = vmul.f32 %v2898, %v2934
    %v2939 = vmul.f32 %v2901, %v2935
    %2944 = vrot.lane.b32.xlu0 %v2890, 64
    %v2945 = vpop.permute.xlu0 %2944
    %2946 = vrot.lane.b32.xlu0 %v2893, 64
    %v2947 = vpop.permute.xlu0 %2946
    %2948 = vrot.lane.b32.xlu0 %v2898, 64
    %v2949 = vpop.permute.xlu0 %2948
    %2950 = vrot.lane.b32.xlu0 %v2901, 64
    %v2951 = vpop.permute.xlu0 %2950
    %v2956 = vmul.f32 %v2936, %v2945
    %v2957 = vmul.f32 %v2937, %v2947
    %v2958 = vmul.f32 %v2938, %v2949
    %v2959 = vmul.f32 %v2939, %v2951
    %v2960 = vpack.c.bf16 %v2957, %v2956
    %v2961 = vpack.c.bf16 %v2959, %v2958
    %s2962 = scalar_lea.vmem %s7, 32
    %v2963 = vld [vmem:[%s2962] sm:$0xf]
    %v2964 = vld [vmem:[%s2962 + $0x4] sm:$0xf]
    %v2965 = vld [vmem:[%s2962 + $0x8] sm:$0xf]
    %v2966 = vld [vmem:[%s2962 + $0xc] sm:$0xf]
    %v2967 = vld [vmem:[%s2962 + $0x10] sm:$0xf]
    %v2968 = vld [vmem:[%s2962 + $0x14] sm:$0xf]
    %v2969 = vld [vmem:[%s2962 + $0x18] sm:$0xf]
    %v2970 = vld [vmem:[%s2962 + $0x1c] sm:$0xf]
    %v2979 = vunpack.c.l.b16 %v2963
    %v2980 = vunpack.c.l.b16 %v2964
    %v2981 = vunpack.c.l.b16 %v2965
    %v2982 = vunpack.c.l.b16 %v2966
    %v2983 = vunpack.c.l.b16 %v2967
    %v2984 = vunpack.c.l.b16 %v2968
    %v2985 = vunpack.c.l.b16 %v2969
    %v2986 = vunpack.c.l.b16 %v2970
    %v2987 = vpack.c.b16 %v2980, %v2979
    %v2988 = vpack.c.b16 %v2982, %v2981
    %v2989 = vpack.c.b16 %v2984, %v2983
    %v2990 = vpack.c.b16 %v2986, %v2985
    %v2996 = vsel %vm1494, %v2960, 0
    %v2999 = vsel %vm1494, %v2961, 0
    %3001 = vmatprep.subr.bf16.mxu0 0
    %3002 = vmatpush1.bf16.msra.mxu0 %v2987
    %3003 = vmatprep.subr.bf16.mxu0 0
    %3004 = vmatpush1.bf16.msra.mxu0 %v2988
    %3005 = vmatprep.subr.bf16.mxu0 0
    %3006 = vmatpush1.bf16.msra.mxu0 %v2989
    %3007 = vmatprep.subr.bf16.mxu0 0
    %3008 = vmatpush1.bf16.msra.mxu0 %v2990
    %3009 = vmatprep.subr.bf16.mxu0 0
    %3010 = vmatpush1.bf16.msra.mxu0 0
    %3011 = vmatprep.subr.bf16.mxu0 0
    %3012 = vmatpush1.bf16.msra.mxu0 0
    %3013 = vmatprep.subr.bf16.mxu0 0
    %3014 = vmatpush1.bf16.msra.mxu0 0
    %3015 = vmatprep.subr.bf16.mxu0 0
    %3016 = vmatpush1.bf16.msra.mxu0 0
    %3017 = vmatprep.subr.bf16.mxu0 0
    %3018 = vmatpush1.bf16.msra.mxu0 0
    %3019 = vmatprep.subr.bf16.mxu0 0
    %3020 = vmatpush1.bf16.msra.mxu0 0
    %3021 = vmatprep.subr.bf16.mxu0 0
    %3022 = vmatpush1.bf16.msra.mxu0 0
    %3023 = vmatprep.subr.bf16.mxu0 0
    %3024 = vmatpush1.bf16.msra.mxu0 0
    %3025 = vmatprep.subr.bf16.mxu0 0
    %3026 = vmatpush1.bf16.msra.mxu0 0
    %3027 = vmatprep.subr.bf16.mxu0 0
    %3028 = vmatpush1.bf16.msra.mxu0 0
    %3029 = vmatprep.subr.bf16.mxu0 0
    %3030 = vmatpush1.bf16.msra.mxu0 0
    %3031 = vmatprep.subr.bf16.mxu0 0
    %3032 = vmatpush1.bf16.msra.mxu0 0
    %3033 = vmatprep.mubr.bf16.mxu0 0
    %3034 = vmatmul.mubr.bf16.gmra.mrb[0].mxu0 %v2996
    %v3035 = vpop.f32.mrb[0].mxu0
    %v3036 = vadd.f32 0.0, %v3035
    %v3037 = vpop.f32.mrb[0].mxu0
    %v3038 = vpop.f32.mrb[0].mxu0
    %v3039 = vadd.f32 0.0, %v3038
    %v3040 = vpop.f32.mrb[0].mxu0
    %3041 = vmatprep.mubr.bf16.mxu0 0
    %3042 = vmatmul.mubr.bf16.gmra.mrb[0].mxu0 %v2999
    %v3043 = vpop.f32.mrb[0].mxu0
    %v3044 = vadd.f32 0.0, %v3043
    %v3045 = vpop.f32.mrb[0].mxu0
    %v3046 = vpop.f32.mrb[0].mxu0
    %v3047 = vadd.f32 0.0, %v3046
    %v3048 = vpop.f32.mrb[0].mxu0
    %3049 = vdwg.mxu0
    %v3050 = vadd.f32 %v2782, %v3036
    %v3051 = vadd.f32 %v2783, %v3039
    %v3052 = vadd.f32 %v2784, %v3044
    %v3053 = vadd.f32 %v2785, %v3047
    %v3054 = vld [vmem:[%s8] sm:$0x1]
    %v3055 = vmul.f32 %v3050, %v3050
    %v3056 = vmul.f32 %v3051, %v3051
    %v3057 = vmul.f32 %v3052, %v3052
    %v3058 = vmul.f32 %v3053, %v3053
    %v3059 = vsel %vm59, %v3055, 0.0
    %3060 = vadd.xlane.f32.xlu0 %v3059
    %v3061 = vpop.xlane.xlu0 %3060
    %v3062 = vsel %vm59, %v3056, 0.0
    %3063 = vadd.xlane.f32.xlu0 %v3062
    %v3064 = vpop.xlane.xlu0 %3063
    %v3065 = vsel %vm59, %v3057, 0.0
    %3066 = vadd.xlane.f32.xlu0 %v3065
    %v3067 = vpop.xlane.xlu0 %3066
    %v3068 = vsel %vm59, %v3058, 0.0
    %3069 = vadd.xlane.f32.xlu0 %v3068
    %v3070 = vpop.xlane.xlu0 %3069
    %v3071 = vmul.f32 %v3061, %v72
    %v3072 = vmul.f32 %v3064, %v72
    %v3073 = vmul.f32 %v3067, %v72
    %v3074 = vmul.f32 %v3070, %v72
    %v3075 = vadd.f32 %v3071, 1e-06
    %v3076 = vadd.f32 %v3072, 1e-06
    %v3077 = vadd.f32 %v3073, 1e-06
    %v3078 = vadd.f32 %v3074, 1e-06
    %v3079 = vrsqrt.pop %v3075
    %v3080 = vrsqrt.pop %v3076
    %v3081 = vrsqrt.pop %v3077
    %v3082 = vrsqrt.pop %v3078
    %v3083 = vmul.f32 %v3050, %v3079
    %v3084 = vmul.f32 %v3051, %v3080
    %v3085 = vmul.f32 %v3052, %v3081
    %v3086 = vmul.f32 %v3053, %v3082
    %v3088 = vlaneseq
    %v3089 = vshrl.u32 %v3088, 7
    %v3090 = vsub.s32 0, %v3089
    %v3091 = vrot.slane %v3054, %v3090
    %v3093 = vmul.f32 %v3091, %v3083
    %v3094 = vmul.f32 %v3091, %v3084
    %v3095 = vmul.f32 %v3091, %v3085
    %v3096 = vmul.f32 %v3091, %v3086
    %3097 = vst.msk [vmem:[#allocation2] sm:$0xff] %vm59, %v3093
    %3098 = vst.msk [vmem:[#allocation2 + $0x8] sm:$0xff] %vm59, %v3094
    %3099 = vst.msk [vmem:[#allocation2 + $0x10] sm:$0xff] %vm59, %v3095
    %3100 = vst.msk [vmem:[#allocation2 + $0x18] sm:$0xff] %vm59, %v3096
    // Predicated region
    $region38: #{_lambda_.1} parent=1 // pred_check
      _
    $region39: #{_lambda_.1} parent=1 // pred_check_branch
      %3102 = sbr.rel (0) target = $region41
    $region40: #{_lambda_.1} parent=1 // pred_region
      %s3104 = ssub.s32 512, 512
      %3105 = vsyncadd [#allocation3], %s3104
      %s3106 = sshll.u32 [#allocation2], 4
      %s3107 = int_to_ptr.vmem [resolvable:$true] %s3106
      %3112 = dma.vmem_to_hbm [thread:$0]  %s3107, 512, %s9, [#allocation3], 128, 128, 8
    $region41: #{_lambda_.1} parent=1 // pred_fallthru
      _
    // Predicated region
    $region42: #{_lambda_.1} parent=1 // pred_check
      _
    $region43: #{_lambda_.1} parent=1 // pred_check_branch
      %3114 = sbr.rel (0) target = $region45
    $region44: #{_lambda_.1} parent=1 // pred_region
      %3115 = dma.done [#allocation3], 512
    $region45: #{_lambda_.1} parent=1 // pred_fallthru
      _
    %3116 = vsyncpa [#allocation3], 1

</llo_original>
